<compile_context>
chip_gen: v7x
topology: tpu7x:2x2x1
jax: 0.10.0
libtpu: 0.0.40
codegen_flags: <defaults>
</compile_context>

<pallas_src>
import math
import functools

import jax
import jax.numpy as jnp
from jax.experimental import pallas as pl
from jax.experimental.pallas import tpu as pltpu


# dtype of MXU matmul operands (weights + inter-matmul activations).
# Set to jnp.float32 to disable the bf16 path (exact-parity debugging).
MXU_DTYPE = jnp.bfloat16


# ----------------------------- in-kernel helpers -----------------------------

def _layernorm(h, g, b, eps=1e-5):
    # f32 statistics throughout; rsqrt goes to the EUP.
    mu = jnp.mean(h, axis=-1, keepdims=True)
    c = h - mu
    var = jnp.mean(c * c, axis=-1, keepdims=True)
    return c * jax.lax.rsqrt(var + eps) * g + b


def _softmax_lastdim(s):
    # f32 statistics; normalization via the (otherwise idle) EUP reciprocal.
    m = jnp.max(s, axis=-1, keepdims=True)
    e = jnp.exp(s - m)
    denom = jnp.sum(e, axis=-1, keepdims=True)
    return e * pl.reciprocal(denom, approx=True)


def _dense(x, w, b):
    # x: (N, Din), w: (Din, Dout) MXU_DTYPE, b: (1, Dout) f32 -> (N, Dout) f32.
    y = jnp.dot(x.astype(w.dtype), w, preferred_element_type=jnp.float32)
    return y + b


def _split_heads(y, B, Lx, H, kd):
    # (B*Lx, H*kd) -> (H*B, Lx, kd): heads move to the leading (batch-of-
    # matmul) axis via static lane slices; the lane dim stays minormost so no
    # lane-crossing relayout is needed.  (At real sizes kd is a multiple of
    # 128, so each slice is lane-aligned.)
    y3 = y.reshape(B, Lx, H * kd)
    return jnp.concatenate(
        [y3[..., h * kd:(h + 1) * kd] for h in range(H)], axis=0)


def _combine_heads(ctx, B, H, kd):
    # (H*B, Lq, kd) -> (B*Lq, H*kd): inverse of _split_heads (lane concat).
    Lq = ctx.shape[1]
    return jnp.concatenate(
        [ctx[h * B:(h + 1) * B].reshape(B * Lq, kd) for h in range(H)],
        axis=-1)


def _mha(q2, k2, v2, addmask, w_o, b_o, B, H, kd):
    # q2: (B*Lq, H*kd) bf16, k2/v2: (B*Lk, H*kd) bf16 (1/sqrt(kd) folded into
    # the Q weights host-side), addmask: (B, Lq, Lk) additive f32.
    Lq = q2.shape[0] // B
    Lk = k2.shape[0] // B
    dt = q2.dtype

    qh = _split_heads(q2, B, Lq, H, kd)              # (H*B, Lq, kd)
    kh = _split_heads(k2, B, Lk, H, kd)              # (H*B, Lk, kd)
    vh = _split_heads(v2, B, Lk, H, kd)              # (H*B, Lk, kd)

    # Scores for every (head, batch) pair in one batched matmul, contracting
    # the last dims directly (no transpose of K).
    s = jnp.einsum("nqd,nkd->nqk", qh, kh,
                   preferred_element_type=jnp.float32)   # (H*B, Lq, Lk) f32
    s = s.reshape(H, B, Lq, Lk) + addmask[None]          # one additive mask
    p = _softmax_lastdim(s).reshape(H * B, Lq, Lk)

    ctx = jnp.einsum("nqk,nkd->nqd", p.astype(dt), vh,
                     preferred_element_type=jnp.float32) # (H*B, Lq, kd) f32

    # combine_heads + W_o == one (B*Lq, H*kd) @ (D, D) matmul: full contraction
    # depth D, lane-dense D-wide output, no per-head output intermediates.
    ctx2 = _combine_heads(ctx.astype(dt), B, H, kd)      # (B*Lq, D) bf16
    return _dense(ctx2, w_o, b_o)                        # (B*Lq, D) f32


# --------------------------------- the kernel --------------------------------

def decoder_kernel(num_heads, key_dim,
                   x_ref, enc_ref, tmask_ref, smask_ref,
                   sa_wqkv, sa_bqkv, sa_wo, sa_bo,
                   ca_wq, ca_bq, ca_wkv, ca_bkv, ca_wo, ca_bo,
                   ff_w1, ff_b1, ff_w2, ff_b2,
                   n1_g, n1_b, n2_g, n2_b, n3_g, n3_b,
                   out_ref):
    B, L, D = x_ref.shape            # B == 1 per grid step (batch on the grid)
    S = enc_ref.shape[1]
    H, kd = num_heads, key_dim
    mdt = sa_wqkv.dtype              # MXU operand dtype (bf16)

    x = x_ref[...].reshape(B * L, D)          # f32 residual stream
    enc = enc_ref[...].reshape(B * S, D)
    tmask = tmask_ref[...]                    # (B, L, L) additive f32
    smask = smask_ref[...]                    # (B, L, S) additive f32

    # ---- self-attention: one lane-packed QKV matmul + residual + norm1
    qkv = _dense(x, sa_wqkv[...], sa_bqkv[...]).astype(mdt)   # (B*L, 3D) bf16
    sa = _mha(qkv[:, :D], qkv[:, D:2 * D], qkv[:, 2 * D:],
              tmask, sa_wo[...], sa_bo[...], B, H, kd)
    x = _layernorm(x + sa, n1_g[...], n1_b[...])

    # ---- cross-attention: packed K/V matmul on encoder output + norm2
    q = _dense(x, ca_wq[...], ca_bq[...]).astype(mdt)         # (B*L, D)  bf16
    kv = _dense(enc, ca_wkv[...], ca_bkv[...]).astype(mdt)    # (B*S, 2D) bf16
    ca = _mha(q, kv[:, :D], kv[:, D:],
              smask, ca_wo[...], ca_bo[...], B, H, kd)
    x = _layernorm(x + ca, n2_g[...], n2_b[...])

    # ---- position-wise feed-forward (bf16 hidden) + residual + norm3
    h = jnp.maximum(_dense(x, ff_w1[...], ff_b1[...]).astype(mdt), 0)
    ff = _dense(h, ff_w2[...], ff_b2[...])
    x = _layernorm(x + ff, n3_g[...], n3_b[...])

    # TODO(synk): nn.Dropout is identity here (eval-mode forward semantics).
    out_ref[...] = x.reshape(B, L, D)


# --------------------------- host-side weight packing ------------------------

def pack_decoder_params(p, num_heads):
    """Fuse / re-layout the torch-style per-matrix parameters for the kernel.

    The torch head layout (head h = output columns h*kd:(h+1)*kd) is already
    lane-packed, so Q/K/V are simply concatenated along the output lanes and
    the 1/sqrt(kd) score scale is folded into the Q weights/biases."""
    D = p["sa_wq"].shape[0]
    kd = D // num_heads
    scale = 1.0 / math.sqrt(kd)
    wdt = MXU_DTYPE

    sa_wqkv = jnp.concatenate(
        [p["sa_wq"] * scale, p["sa_wk"], p["sa_wv"]], axis=1).astype(wdt)
    sa_bqkv = jnp.concatenate(
        [p["sa_bq"] * scale, p["sa_bk"], p["sa_bv"]], axis=1)        # f32
    ca_wq = (p["ca_wq"] * scale).astype(wdt)
    ca_bq = p["ca_bq"] * scale
    ca_wkv = jnp.concatenate([p["ca_wk"], p["ca_wv"]], axis=1).astype(wdt)
    ca_bkv = jnp.concatenate([p["ca_bk"], p["ca_bv"]], axis=1)

    return [sa_wqkv, sa_bqkv, p["sa_wo"].astype(wdt), p["sa_bo"],
            ca_wq, ca_bq, ca_wkv, ca_bkv, p["ca_wo"].astype(wdt), p["ca_bo"],
            p["ff_w1"].astype(wdt), p["ff_b1"],
            p["ff_w2"].astype(wdt), p["ff_b2"],
            p["n1_g"], p["n1_b"], p["n2_g"], p["n2_b"], p["n3_g"], p["n3_b"]]


def _additive_mask(mask01):
    # torch's masked_fill(mask == 0, -1e9) as an additive 0 / -1e9 mask.
    return jnp.where(mask01 == 0, jnp.float32(-1e9), jnp.float32(0.0))


def _batch_block_spec(shape):
    # One batch element per grid step; full trailing dims.
    nd = len(shape)

    def imap(b):
        return (b,) + (0,) * (nd - 1)

    return pl.BlockSpec((1,) + tuple(shape[1:]), imap)


def _resident_spec(arr):
    # Full-array block with a constant index: stays VMEM-resident across the
    # (parallel) batch grid.
    nd = arr.ndim

    def imap(b):
        return (0,) * nd

    return pl.BlockSpec(arr.shape, imap)


def decoder_forward(x, enc, tgt_mask, src_mask, packed_params, num_heads):
    B, L, D = x.shape
    kd = D // num_heads
    add_tmask = _additive_mask(tgt_mask)
    add_smask = _additive_mask(src_mask)

    kernel = functools.partial(decoder_kernel, num_heads, kd)

    in_specs = [_batch_block_spec(x.shape), _batch_block_spec(enc.shape),
                _batch_block_spec(add_tmask.shape),
                _batch_block_spec(add_smask.shape)]
    in_specs += [_resident_spec(w) for w in packed_params]

    # Batch on the grid, marked "parallel": on v7x each TensorCore takes a
    # batch element; on v5e/v6e it is a cheap sequential loop.  All weights
    # (~40 KiB bf16) and per-step activations fit comfortably under the
    # explicit 32 MiB scoped-VMEM limit on every generation.
    return pl.pallas_call(
        kernel,
        out_shape=jax.ShapeDtypeStruct((B, L, D), jnp.float32),
        grid=(B,),
        in_specs=in_specs,
        out_specs=_batch_block_spec((B, L, D)),
        compiler_params=pltpu.CompilerParams(
            dimension_semantics=("parallel",),
            vmem_limit_bytes=32 * 1024 * 1024),
    )(x, enc, add_tmask, add_smask, *packed_params)


# ------------------------------ JAX references --------------------------------

def decoder_reference_f32(x, enc, tmask, smask, p, num_heads):
    """Faithful fp32 port of the PyTorch Decoder (per-head slices, masked_fill
    masking, explicit 1/sqrt(kd) scaling, division softmax)."""
    D = x.shape[-1]
    kd = D // num_heads

    def layernorm(h, g, b, eps=1e-5):
        mu = jnp.mean(h, axis=-1, keepdims=True)
        var = jnp.mean((h - mu) ** 2, axis=-1, keepdims=True)
        return (h - mu) * jax.lax.rsqrt(var + eps) * g + b

    def mha(q_in, kv_in, mask, wq, bq, wk, bk, wv, bv, wo, bo):
        q = q_in @ wq + bq
        k = kv_in @ wk + bk
        v = kv_in @ wv + bv
        outs = []
        for h in range(num_heads):
            sl = slice(h * kd, (h + 1) * kd)
            s = (q[:, sl] @ k[:, sl].T) / math.sqrt(kd)
            s = jnp.where(mask == 0, -1e9, s)
            pr = jax.nn.softmax(s, axis=-1)
            outs.append(pr @ v[:, sl])
        return jnp.concatenate(outs, axis=-1) @ wo + bo

    def one(xb, eb, tm, sm):
        h = layernorm(xb + mha(xb, xb, tm,
                               p["sa_wq"], p["sa_bq"], p["sa_wk"], p["sa_bk"],
                               p["sa_wv"], p["sa_bv"], p["sa_wo"], p["sa_bo"]),
                      p["n1_g"], p["n1_b"])
        h = layernorm(h + mha(h, eb, sm,
                              p["ca_wq"], p["ca_bq"], p["ca_wk"], p["ca_bk"],
                              p["ca_wv"], p["ca_bv"], p["ca_wo"], p["ca_bo"]),
                      p["n2_g"], p["n2_b"])
        ff = jnp.maximum(h @ p["ff_w1"] + p["ff_b1"], 0.0) @ p["ff_w2"] + p["ff_b2"]
        return layernorm(h + ff, p["n3_g"], p["n3_b"])

    return jax.vmap(one)(x, enc, tmask, smask)


def decoder_reference_packed(x, enc, tgt_mask, src_mask, ops, num_heads):
    """Plain-JAX evaluation of the *same* packed/bf16 formulation the kernel
    uses (exact-division softmax): tight check of the Pallas lowering."""
    (sa_wqkv, sa_bqkv, sa_wo, sa_bo,
     ca_wq, ca_bq, ca_wkv, ca_bkv, ca_wo, ca_bo,
     ff_w1, ff_b1, ff_w2, ff_b2,
     n1_g, n1_b, n2_g, n2_b, n3_g, n3_b) = ops
    H = num_heads
    D = sa_wo.shape[0]
    kd = D // H
    add_t = _additive_mask(tgt_mask)
    add_s = _additive_mask(src_mask)

    def dense(a, w, b):
        return jnp.dot(a.astype(w.dtype), w,
                       preferred_element_type=jnp.float32) + b

    def layernorm(h, g, b, eps=1e-5):
        mu = jnp.mean(h, axis=-1, keepdims=True)
        c = h - mu
        var = jnp.mean(c * c, axis=-1, keepdims=True)
        return c * jax.lax.rsqrt(var + eps) * g + b

    def mha(q2, k2, v2, amask, w_o, b_o):
        dt = q2.dtype
        outs = []
        for h in range(H):
            sl = slice(h * kd, (h + 1) * kd)
            s = jnp.dot(q2[:, sl], k2[:, sl].T,
                        preferred_element_type=jnp.float32) + amask
            pr = jax.nn.softmax(s, axis=-1)
            outs.append(jnp.dot(pr.astype(dt), v2[:, sl],
                                preferred_element_type=jnp.float32))
        ctx = jnp.concatenate(outs, axis=-1).astype(dt)
        return dense(ctx, w_o, b_o)

    def one(xb, eb, tm, sm):
        qkv = dense(xb, sa_wqkv, sa_bqkv).astype(sa_wqkv.dtype)
        h = layernorm(xb + mha(qkv[:, :D], qkv[:, D:2 * D], qkv[:, 2 * D:],
                               tm, sa_wo, sa_bo), n1_g, n1_b)
        q = dense(h, ca_wq, ca_bq).astype(ca_wq.dtype)
        kv = dense(eb, ca_wkv, ca_bkv).astype(ca_wkv.dtype)
        h = layernorm(h + mha(q, kv[:, :D], kv[:, D:], sm, ca_wo, ca_bo),
                      n2_g, n2_b)
        hh = jnp.maximum(dense(h, ff_w1, ff_b1).astype(ff_w1.dtype), 0)
        ff = dense(hh, ff_w2, ff_b2)
        return layernorm(h + ff, n3_g, n3_b)

    return jax.vmap(one)(x, enc, add_t, add_s)


# ----------------------------------- main -------------------------------------

if __name__ == "__main__":
    B, L, S = 2, 8, 8          # batch, target seq, source seq
    D, H, F = 32, 4, 64        # modelDim, numHeads, hiddenDim

    key = jax.random.PRNGKey(0)
    ks = jax.random.split(key, 40)
    ki = iter(ks)

    def init_linear(din, dout):
        w = jax.random.normal(next(ki), (din, dout), jnp.float32) / math.sqrt(din)
        b = jax.random.normal(next(ki), (1, dout), jnp.float32) * 0.01
        return w, b

    params = {}
    for pre in ("sa", "ca"):
        for name in ("q", "k", "v", "o"):
            w, b = init_linear(D, D)
            params[f"{pre}_w{name}"] = w
            params[f"{pre}_b{name}"] = b
    params["ff_w1"], params["ff_b1"] = init_linear(D, F)
    params["ff_w2"], params["ff_b2"] = init_linear(F, D)
    for n in ("n1", "n2", "n3"):
        params[f"{n}_g"] = 1.0 + 0.1 * jax.random.normal(next(ki), (1, D), jnp.float32)
        params[f"{n}_b"] = 0.1 * jax.random.normal(next(ki), (1, D), jnp.float32)

    x = jax.random.normal(next(ki), (B, L, D), jnp.float32)
    enc = jax.random.normal(next(ki), (B, S, D), jnp.float32)
    # Causal target mask, all-ones source mask (0/1 values, as produced by
    # Transformer.generate_mask for non-padded inputs).
    tgt_mask = jnp.broadcast_to(jnp.tril(jnp.ones((L, L), jnp.float32)), (B, L, L))
    src_mask = jnp.ones((B, L, S), jnp.float32)

    packed = pack_decoder_params(params, H)

    out = decoder_forward(x, enc, tgt_mask, src_mask, packed, H)
    out = jax.block_until_ready(out)
    assert out.shape == (B, L, D)

    # (1) Tight check: kernel matches its own packed/bf16 math spec (tolerance
    #     covers the approximate EUP reciprocal + accumulation-order diffs).
    ref_packed = decoder_reference_packed(x, enc, tgt_mask, src_mask, packed, H)
    assert jnp.allclose(out, ref_packed, atol=2e-2, rtol=2e-2), \
        "kernel deviates from its packed/bf16 reference"

    # (2) Semantics check vs. the exact fp32 PyTorch-Decoder formulation.
    #     Wiring/packing errors show up as O(1) discrepancies; expected drift
    #     is only bf16 weight/operand rounding.
    ref_f32 = decoder_reference_f32(x, enc, tgt_mask, src_mask, params, H)
    assert jnp.allclose(out, ref_f32, atol=1e-1, rtol=1e-1), \
        "kernel deviates from the fp32 reference beyond bf16 tolerance"

    print("KERNEL_OK")
</pallas_src>

<mosaic_0001>
module attributes {stable_mosaic.version = 11 : i64} {
  func.func @decoder_kernel(%arg0: i32, %arg1: memref<1x8x32xf32, #tpu.memory_space<vmem>>, %arg2: memref<1x8x32xf32, #tpu.memory_space<vmem>>, %arg3: memref<1x8x8xf32, #tpu.memory_space<vmem>>, %arg4: memref<1x8x8xf32, #tpu.memory_space<vmem>>, %arg5: memref<32x96xbf16, #tpu.memory_space<vmem>>, %arg6: memref<1x96xf32, #tpu.memory_space<vmem>>, %arg7: memref<32x32xbf16, #tpu.memory_space<vmem>>, %arg8: memref<1x32xf32, #tpu.memory_space<vmem>>, %arg9: memref<32x32xbf16, #tpu.memory_space<vmem>>, %arg10: memref<1x32xf32, #tpu.memory_space<vmem>>, %arg11: memref<32x64xbf16, #tpu.memory_space<vmem>>, %arg12: memref<1x64xf32, #tpu.memory_space<vmem>>, %arg13: memref<32x32xbf16, #tpu.memory_space<vmem>>, %arg14: memref<1x32xf32, #tpu.memory_space<vmem>>, %arg15: memref<32x64xbf16, #tpu.memory_space<vmem>>, %arg16: memref<1x64xf32, #tpu.memory_space<vmem>>, %arg17: memref<64x32xbf16, #tpu.memory_space<vmem>>, %arg18: memref<1x32xf32, #tpu.memory_space<vmem>>, %arg19: memref<1x32xf32, #tpu.memory_space<vmem>>, %arg20: memref<1x32xf32, #tpu.memory_space<vmem>>, %arg21: memref<1x32xf32, #tpu.memory_space<vmem>>, %arg22: memref<1x32xf32, #tpu.memory_space<vmem>>, %arg23: memref<1x32xf32, #tpu.memory_space<vmem>>, %arg24: memref<1x32xf32, #tpu.memory_space<vmem>>, %arg25: memref<1x8x32xf32, #tpu.memory_space<vmem>>) attributes {dimension_semantics = [#tpu.dimension_semantics<parallel>], iteration_bounds = array<i64: 2>, scalar_prefetch = 0 : i64, scratch_operands = 0 : i64, tpu.core_type = #tpu.core_type<tc>, window_params = [{transform_indices = @transform_0, window_bounds = array<i64: 1, 8, 32>}, {transform_indices = @transform_1, window_bounds = array<i64: 1, 8, 32>}, {transform_indices = @transform_2, window_bounds = array<i64: 1, 8, 8>}, {transform_indices = @transform_3, window_bounds = array<i64: 1, 8, 8>}, {pipeline_mode = #tpu.pipeline_mode<synchronous>, transform_indices = @transform_4, window_bounds = array<i64: 32, 96>}, {pipeline_mode = #tpu.pipeline_mode<synchronous>, transform_indices = @transform_5, window_bounds = array<i64: 1, 96>}, {pipeline_mode = #tpu.pipeline_mode<synchronous>, transform_indices = @transform_6, window_bounds = array<i64: 32, 32>}, {pipeline_mode = #tpu.pipeline_mode<synchronous>, transform_indices = @transform_7, window_bounds = array<i64: 1, 32>}, {pipeline_mode = #tpu.pipeline_mode<synchronous>, transform_indices = @transform_8, window_bounds = array<i64: 32, 32>}, {pipeline_mode = #tpu.pipeline_mode<synchronous>, transform_indices = @transform_9, window_bounds = array<i64: 1, 32>}, {pipeline_mode = #tpu.pipeline_mode<synchronous>, transform_indices = @transform_10, window_bounds = array<i64: 32, 64>}, {pipeline_mode = #tpu.pipeline_mode<synchronous>, transform_indices = @transform_11, window_bounds = array<i64: 1, 64>}, {pipeline_mode = #tpu.pipeline_mode<synchronous>, transform_indices = @transform_12, window_bounds = array<i64: 32, 32>}, {pipeline_mode = #tpu.pipeline_mode<synchronous>, transform_indices = @transform_13, window_bounds = array<i64: 1, 32>}, {pipeline_mode = #tpu.pipeline_mode<synchronous>, transform_indices = @transform_14, window_bounds = array<i64: 32, 64>}, {pipeline_mode = #tpu.pipeline_mode<synchronous>, transform_indices = @transform_15, window_bounds = array<i64: 1, 64>}, {pipeline_mode = #tpu.pipeline_mode<synchronous>, transform_indices = @transform_16, window_bounds = array<i64: 64, 32>}, {pipeline_mode = #tpu.pipeline_mode<synchronous>, transform_indices = @transform_17, window_bounds = array<i64: 1, 32>}, {pipeline_mode = #tpu.pipeline_mode<synchronous>, transform_indices = @transform_18, window_bounds = array<i64: 1, 32>}, {pipeline_mode = #tpu.pipeline_mode<synchronous>, transform_indices = @transform_19, window_bounds = array<i64: 1, 32>}, {pipeline_mode = #tpu.pipeline_mode<synchronous>, transform_indices = @transform_20, window_bounds = array<i64: 1, 32>}, {pipeline_mode = #tpu.pipeline_mode<synchronous>, transform_indices = @transform_21, window_bounds = array<i64: 1, 32>}, {pipeline_mode = #tpu.pipeline_mode<synchronous>, transform_indices = @transform_22, window_bounds = array<i64: 1, 32>}, {pipeline_mode = #tpu.pipeline_mode<synchronous>, transform_indices = @transform_23, window_bounds = array<i64: 1, 32>}, {transform_indices = @transform_24, window_bounds = array<i64: 1, 8, 32>}]} {
    %c0 = arith.constant 0 : index
    %c0_0 = arith.constant 0 : index
    %c0_1 = arith.constant 0 : index
    %0 = vector.load %arg1[%c0, %c0_0, %c0_1] : memref<1x8x32xf32, #tpu.memory_space<vmem>>, vector<1x8x32xf32>
    %1 = vector.shape_cast %0 : vector<1x8x32xf32> to vector<8x32xf32>
    %c0_2 = arith.constant 0 : index
    %c0_3 = arith.constant 0 : index
    %c0_4 = arith.constant 0 : index
    %2 = vector.load %arg2[%c0_2, %c0_3, %c0_4] : memref<1x8x32xf32, #tpu.memory_space<vmem>>, vector<1x8x32xf32>
    %3 = vector.shape_cast %2 : vector<1x8x32xf32> to vector<8x32xf32>
    %c0_5 = arith.constant 0 : index
    %c0_6 = arith.constant 0 : index
    %c0_7 = arith.constant 0 : index
    %4 = vector.load %arg3[%c0_5, %c0_6, %c0_7] : memref<1x8x8xf32, #tpu.memory_space<vmem>>, vector<1x8x8xf32>
    %c0_8 = arith.constant 0 : index
    %c0_9 = arith.constant 0 : index
    %c0_10 = arith.constant 0 : index
    %5 = vector.load %arg4[%c0_8, %c0_9, %c0_10] : memref<1x8x8xf32, #tpu.memory_space<vmem>>, vector<1x8x8xf32>
    %c0_11 = arith.constant 0 : index
    %c0_12 = arith.constant 0 : index
    %6 = vector.load %arg5[%c0_11, %c0_12] : memref<32x96xbf16, #tpu.memory_space<vmem>>, vector<32x96xbf16>
    %c0_13 = arith.constant 0 : index
    %c0_14 = arith.constant 0 : index
    %7 = vector.load %arg6[%c0_13, %c0_14] : memref<1x96xf32, #tpu.memory_space<vmem>>, vector<1x96xf32>
    %8 = arith.truncf %1 : vector<8x32xf32> to vector<8x32xbf16>
    %cst = arith.constant dense<0.000000e+00> : vector<8x96xf32>
    %9 = tpu.matmul %8, %6, %cst {dimension_numbers = #tpu.dot_dimension_numbers<[1], [0], [0], [1], [0, 0, 1, 1], [], []>} : vector<8x32xbf16>, vector<32x96xbf16>, vector<8x96xf32> -> vector<8x96xf32>
    %10 = vector.broadcast %7 : vector<1x96xf32> to vector<8x96xf32>
    %11 = arith.addf %9, %10 : vector<8x96xf32>
    %12 = arith.truncf %11 : vector<8x96xf32> to vector<8x96xbf16>
    %13 = vector.extract_strided_slice %12 {offsets = [0, 0], sizes = [8, 32], strides = [1, 1]} : vector<8x96xbf16> to vector<8x32xbf16>
    %14 = vector.extract_strided_slice %12 {offsets = [0, 32], sizes = [8, 32], strides = [1, 1]} : vector<8x96xbf16> to vector<8x32xbf16>
    %15 = vector.extract_strided_slice %12 {offsets = [0, 64], sizes = [8, 32], strides = [1, 1]} : vector<8x96xbf16> to vector<8x32xbf16>
    %c0_15 = arith.constant 0 : index
    %c0_16 = arith.constant 0 : index
    %16 = vector.load %arg7[%c0_15, %c0_16] : memref<32x32xbf16, #tpu.memory_space<vmem>>, vector<32x32xbf16>
    %c0_17 = arith.constant 0 : index
    %c0_18 = arith.constant 0 : index
    %17 = vector.load %arg8[%c0_17, %c0_18] : memref<1x32xf32, #tpu.memory_space<vmem>>, vector<1x32xf32>
    %18 = vector.shape_cast %13 : vector<8x32xbf16> to vector<1x8x32xbf16>
    %19 = vector.extract_strided_slice %18 {offsets = [0, 0, 0], sizes = [1, 8, 8], strides = [1, 1, 1]} : vector<1x8x32xbf16> to vector<1x8x8xbf16>
    %20 = vector.extract_strided_slice %18 {offsets = [0, 0, 8], sizes = [1, 8, 8], strides = [1, 1, 1]} : vector<1x8x32xbf16> to vector<1x8x8xbf16>
    %21 = vector.extract_strided_slice %18 {offsets = [0, 0, 16], sizes = [1, 8, 8], strides = [1, 1, 1]} : vector<1x8x32xbf16> to vector<1x8x8xbf16>
    %22 = vector.extract_strided_slice %18 {offsets = [0, 0, 24], sizes = [1, 8, 8], strides = [1, 1, 1]} : vector<1x8x32xbf16> to vector<1x8x8xbf16>
    %23 = tpu.concatenate %19, %20, %21, %22 in 0 : vector<1x8x8xbf16>, vector<1x8x8xbf16>, vector<1x8x8xbf16>, vector<1x8x8xbf16> -> vector<4x8x8xbf16>
    %24 = vector.shape_cast %14 : vector<8x32xbf16> to vector<1x8x32xbf16>
    %25 = vector.extract_strided_slice %24 {offsets = [0, 0, 0], sizes = [1, 8, 8], strides = [1, 1, 1]} : vector<1x8x32xbf16> to vector<1x8x8xbf16>
    %26 = vector.extract_strided_slice %24 {offsets = [0, 0, 8], sizes = [1, 8, 8], strides = [1, 1, 1]} : vector<1x8x32xbf16> to vector<1x8x8xbf16>
    %27 = vector.extract_strided_slice %24 {offsets = [0, 0, 16], sizes = [1, 8, 8], strides = [1, 1, 1]} : vector<1x8x32xbf16> to vector<1x8x8xbf16>
    %28 = vector.extract_strided_slice %24 {offsets = [0, 0, 24], sizes = [1, 8, 8], strides = [1, 1, 1]} : vector<1x8x32xbf16> to vector<1x8x8xbf16>
    %29 = tpu.concatenate %25, %26, %27, %28 in 0 : vector<1x8x8xbf16>, vector<1x8x8xbf16>, vector<1x8x8xbf16>, vector<1x8x8xbf16> -> vector<4x8x8xbf16>
    %30 = vector.shape_cast %15 : vector<8x32xbf16> to vector<1x8x32xbf16>
    %31 = vector.extract_strided_slice %30 {offsets = [0, 0, 0], sizes = [1, 8, 8], strides = [1, 1, 1]} : vector<1x8x32xbf16> to vector<1x8x8xbf16>
    %32 = vector.extract_strided_slice %30 {offsets = [0, 0, 8], sizes = [1, 8, 8], strides = [1, 1, 1]} : vector<1x8x32xbf16> to vector<1x8x8xbf16>
    %33 = vector.extract_strided_slice %30 {offsets = [0, 0, 16], sizes = [1, 8, 8], strides = [1, 1, 1]} : vector<1x8x32xbf16> to vector<1x8x8xbf16>
    %34 = vector.extract_strided_slice %30 {offsets = [0, 0, 24], sizes = [1, 8, 8], strides = [1, 1, 1]} : vector<1x8x32xbf16> to vector<1x8x8xbf16>
    %35 = tpu.concatenate %31, %32, %33, %34 in 0 : vector<1x8x8xbf16>, vector<1x8x8xbf16>, vector<1x8x8xbf16>, vector<1x8x8xbf16> -> vector<4x8x8xbf16>
    "tpu.trace_start"() <{level = 10 : i32, message = "nqd,nkd->nqk"}> : () -> ()
    %cst_19 = arith.constant dense<0.000000e+00> : vector<4x8x8xf32>
    %36 = tpu.matmul %23, %29, %cst_19 {dimension_numbers = #tpu.dot_dimension_numbers<[2], [2], [1], [1], [0, 0, 0, 1, 1, 1], [0], [0]>} : vector<4x8x8xbf16>, vector<4x8x8xbf16>, vector<4x8x8xf32> -> vector<4x8x8xf32>
    "tpu.trace_stop"() : () -> ()
    %37 = vector.shape_cast %36 : vector<4x8x8xf32> to vector<4x1x8x8xf32>
    %38 = vector.shape_cast %4 : vector<1x8x8xf32> to vector<1x1x8x8xf32>
    %39 = vector.broadcast %38 : vector<1x1x8x8xf32> to vector<4x1x8x8xf32>
    %40 = arith.addf %37, %39 : vector<4x1x8x8xf32>
    %cst_20 = arith.constant dense<0xFF800000> : vector<4x1x8xf32>
    %41 = vector.multi_reduction <maximumf>, %40, %cst_20 [3] : vector<4x1x8x8xf32> to vector<4x1x8xf32>
    %42 = vector.shape_cast %41 : vector<4x1x8xf32> to vector<4x1x8x1xf32>
    %43 = vector.broadcast %42 : vector<4x1x8x1xf32> to vector<4x1x8x8xf32>
    %44 = arith.subf %40, %43 : vector<4x1x8x8xf32>
    %45 = math.exp %44 : vector<4x1x8x8xf32>
    %cst_21 = arith.constant dense<0.000000e+00> : vector<4x1x8xf32>
    %46 = vector.multi_reduction <add>, %45, %cst_21 [3] : vector<4x1x8x8xf32> to vector<4x1x8xf32>
    %47 = vector.shape_cast %46 : vector<4x1x8xf32> to vector<4x1x8x1xf32>
    %48 = tpu.reciprocal %47 {approx = true} : vector<4x1x8x1xf32> -> vector<4x1x8x1xf32>
    %49 = vector.broadcast %48 : vector<4x1x8x1xf32> to vector<4x1x8x8xf32>
    %50 = arith.mulf %45, %49 : vector<4x1x8x8xf32>
    %51 = vector.shape_cast %50 : vector<4x1x8x8xf32> to vector<4x8x8xf32>
    %52 = arith.truncf %51 : vector<4x8x8xf32> to vector<4x8x8xbf16>
    "tpu.trace_start"() <{level = 10 : i32, message = "nqk,nkd->nqd"}> : () -> ()
    %cst_22 = arith.constant dense<0.000000e+00> : vector<4x8x8xf32>
    %53 = tpu.matmul %52, %35, %cst_22 {dimension_numbers = #tpu.dot_dimension_numbers<[2], [1], [1], [2], [0, 0, 0, 1, 1, 2], [0], [0]>} : vector<4x8x8xbf16>, vector<4x8x8xbf16>, vector<4x8x8xf32> -> vector<4x8x8xf32>
    "tpu.trace_stop"() : () -> ()
    %54 = arith.truncf %53 : vector<4x8x8xf32> to vector<4x8x8xbf16>
    %55 = vector.extract_strided_slice %54 {offsets = [0, 0, 0], sizes = [1, 8, 8], strides = [1, 1, 1]} : vector<4x8x8xbf16> to vector<1x8x8xbf16>
    %56 = vector.shape_cast %55 : vector<1x8x8xbf16> to vector<8x8xbf16>
    %57 = vector.extract_strided_slice %54 {offsets = [1, 0, 0], sizes = [1, 8, 8], strides = [1, 1, 1]} : vector<4x8x8xbf16> to vector<1x8x8xbf16>
    %58 = vector.shape_cast %57 : vector<1x8x8xbf16> to vector<8x8xbf16>
    %59 = vector.extract_strided_slice %54 {offsets = [2, 0, 0], sizes = [1, 8, 8], strides = [1, 1, 1]} : vector<4x8x8xbf16> to vector<1x8x8xbf16>
    %60 = vector.shape_cast %59 : vector<1x8x8xbf16> to vector<8x8xbf16>
    %61 = vector.extract_strided_slice %54 {offsets = [3, 0, 0], sizes = [1, 8, 8], strides = [1, 1, 1]} : vector<4x8x8xbf16> to vector<1x8x8xbf16>
    %62 = vector.shape_cast %61 : vector<1x8x8xbf16> to vector<8x8xbf16>
    %63 = tpu.concatenate %56, %58, %60, %62 in 1 : vector<8x8xbf16>, vector<8x8xbf16>, vector<8x8xbf16>, vector<8x8xbf16> -> vector<8x32xbf16>
    %cst_23 = arith.constant dense<0.000000e+00> : vector<8x32xf32>
    %64 = tpu.matmul %63, %16, %cst_23 {dimension_numbers = #tpu.dot_dimension_numbers<[1], [0], [0], [1], [0, 0, 1, 1], [], []>} : vector<8x32xbf16>, vector<32x32xbf16>, vector<8x32xf32> -> vector<8x32xf32>
    %65 = vector.broadcast %17 : vector<1x32xf32> to vector<8x32xf32>
    %66 = arith.addf %64, %65 : vector<8x32xf32>
    %67 = arith.addf %1, %66 : vector<8x32xf32>
    %c0_24 = arith.constant 0 : index
    %c0_25 = arith.constant 0 : index
    %68 = vector.load %arg19[%c0_24, %c0_25] : memref<1x32xf32, #tpu.memory_space<vmem>>, vector<1x32xf32>
    %c0_26 = arith.constant 0 : index
    %c0_27 = arith.constant 0 : index
    %69 = vector.load %arg20[%c0_26, %c0_27] : memref<1x32xf32, #tpu.memory_space<vmem>>, vector<1x32xf32>
    %cst_28 = arith.constant dense<0.000000e+00> : vector<8xf32>
    %70 = vector.multi_reduction <add>, %67, %cst_28 [1] : vector<8x32xf32> to vector<8xf32>
    %71 = vector.shape_cast %70 : vector<8xf32> to vector<8x1xf32>
    %cst_29 = arith.constant 3.200000e+01 : f32
    %72 = vector.broadcast %cst_29 : f32 to vector<8x1xf32>
    %73 = arith.divf %71, %72 : vector<8x1xf32>
    %74 = vector.broadcast %73 : vector<8x1xf32> to vector<8x32xf32>
    %75 = arith.subf %67, %74 : vector<8x32xf32>
    %76 = arith.mulf %75, %75 : vector<8x32xf32>
    %cst_30 = arith.constant dense<0.000000e+00> : vector<8xf32>
    %77 = vector.multi_reduction <add>, %76, %cst_30 [1] : vector<8x32xf32> to vector<8xf32>
    %78 = vector.shape_cast %77 : vector<8xf32> to vector<8x1xf32>
    %cst_31 = arith.constant 3.200000e+01 : f32
    %79 = vector.broadcast %cst_31 : f32 to vector<8x1xf32>
    %80 = arith.divf %78, %79 : vector<8x1xf32>
    %cst_32 = arith.constant 9.99999974E-6 : f32
    %81 = vector.broadcast %cst_32 : f32 to vector<8x1xf32>
    %82 = arith.addf %80, %81 : vector<8x1xf32>
    %83 = math.rsqrt %82 : vector<8x1xf32>
    %84 = vector.broadcast %83 : vector<8x1xf32> to vector<8x32xf32>
    %85 = arith.mulf %75, %84 : vector<8x32xf32>
    %86 = vector.broadcast %68 : vector<1x32xf32> to vector<8x32xf32>
    %87 = arith.mulf %85, %86 : vector<8x32xf32>
    %88 = vector.broadcast %69 : vector<1x32xf32> to vector<8x32xf32>
    %89 = arith.addf %87, %88 : vector<8x32xf32>
    %c0_33 = arith.constant 0 : index
    %c0_34 = arith.constant 0 : index
    %90 = vector.load %arg9[%c0_33, %c0_34] : memref<32x32xbf16, #tpu.memory_space<vmem>>, vector<32x32xbf16>
    %c0_35 = arith.constant 0 : index
    %c0_36 = arith.constant 0 : index
    %91 = vector.load %arg10[%c0_35, %c0_36] : memref<1x32xf32, #tpu.memory_space<vmem>>, vector<1x32xf32>
    %92 = arith.truncf %89 : vector<8x32xf32> to vector<8x32xbf16>
    %cst_37 = arith.constant dense<0.000000e+00> : vector<8x32xf32>
    %93 = tpu.matmul %92, %90, %cst_37 {dimension_numbers = #tpu.dot_dimension_numbers<[1], [0], [0], [1], [0, 0, 1, 1], [], []>} : vector<8x32xbf16>, vector<32x32xbf16>, vector<8x32xf32> -> vector<8x32xf32>
    %94 = vector.broadcast %91 : vector<1x32xf32> to vector<8x32xf32>
    %95 = arith.addf %93, %94 : vector<8x32xf32>
    %96 = arith.truncf %95 : vector<8x32xf32> to vector<8x32xbf16>
    %c0_38 = arith.constant 0 : index
    %c0_39 = arith.constant 0 : index
    %97 = vector.load %arg11[%c0_38, %c0_39] : memref<32x64xbf16, #tpu.memory_space<vmem>>, vector<32x64xbf16>
    %c0_40 = arith.constant 0 : index
    %c0_41 = arith.constant 0 : index
    %98 = vector.load %arg12[%c0_40, %c0_41] : memref<1x64xf32, #tpu.memory_space<vmem>>, vector<1x64xf32>
    %99 = arith.truncf %3 : vector<8x32xf32> to vector<8x32xbf16>
    %cst_42 = arith.constant dense<0.000000e+00> : vector<8x64xf32>
    %100 = tpu.matmul %99, %97, %cst_42 {dimension_numbers = #tpu.dot_dimension_numbers<[1], [0], [0], [1], [0, 0, 1, 1], [], []>} : vector<8x32xbf16>, vector<32x64xbf16>, vector<8x64xf32> -> vector<8x64xf32>
    %101 = vector.broadcast %98 : vector<1x64xf32> to vector<8x64xf32>
    %102 = arith.addf %100, %101 : vector<8x64xf32>
    %103 = arith.truncf %102 : vector<8x64xf32> to vector<8x64xbf16>
    %104 = vector.extract_strided_slice %103 {offsets = [0, 0], sizes = [8, 32], strides = [1, 1]} : vector<8x64xbf16> to vector<8x32xbf16>
    %105 = vector.extract_strided_slice %103 {offsets = [0, 32], sizes = [8, 32], strides = [1, 1]} : vector<8x64xbf16> to vector<8x32xbf16>
    %c0_43 = arith.constant 0 : index
    %c0_44 = arith.constant 0 : index
    %106 = vector.load %arg13[%c0_43, %c0_44] : memref<32x32xbf16, #tpu.memory_space<vmem>>, vector<32x32xbf16>
    %c0_45 = arith.constant 0 : index
    %c0_46 = arith.constant 0 : index
    %107 = vector.load %arg14[%c0_45, %c0_46] : memref<1x32xf32, #tpu.memory_space<vmem>>, vector<1x32xf32>
    %108 = vector.shape_cast %96 : vector<8x32xbf16> to vector<1x8x32xbf16>
    %109 = vector.extract_strided_slice %108 {offsets = [0, 0, 0], sizes = [1, 8, 8], strides = [1, 1, 1]} : vector<1x8x32xbf16> to vector<1x8x8xbf16>
    %110 = vector.extract_strided_slice %108 {offsets = [0, 0, 8], sizes = [1, 8, 8], strides = [1, 1, 1]} : vector<1x8x32xbf16> to vector<1x8x8xbf16>
    %111 = vector.extract_strided_slice %108 {offsets = [0, 0, 16], sizes = [1, 8, 8], strides = [1, 1, 1]} : vector<1x8x32xbf16> to vector<1x8x8xbf16>
    %112 = vector.extract_strided_slice %108 {offsets = [0, 0, 24], sizes = [1, 8, 8], strides = [1, 1, 1]} : vector<1x8x32xbf16> to vector<1x8x8xbf16>
    %113 = tpu.concatenate %109, %110, %111, %112 in 0 : vector<1x8x8xbf16>, vector<1x8x8xbf16>, vector<1x8x8xbf16>, vector<1x8x8xbf16> -> vector<4x8x8xbf16>
    %114 = vector.shape_cast %104 : vector<8x32xbf16> to vector<1x8x32xbf16>
    %115 = vector.extract_strided_slice %114 {offsets = [0, 0, 0], sizes = [1, 8, 8], strides = [1, 1, 1]} : vector<1x8x32xbf16> to vector<1x8x8xbf16>
    %116 = vector.extract_strided_slice %114 {offsets = [0, 0, 8], sizes = [1, 8, 8], strides = [1, 1, 1]} : vector<1x8x32xbf16> to vector<1x8x8xbf16>
    %117 = vector.extract_strided_slice %114 {offsets = [0, 0, 16], sizes = [1, 8, 8], strides = [1, 1, 1]} : vector<1x8x32xbf16> to vector<1x8x8xbf16>
    %118 = vector.extract_strided_slice %114 {offsets = [0, 0, 24], sizes = [1, 8, 8], strides = [1, 1, 1]} : vector<1x8x32xbf16> to vector<1x8x8xbf16>
    %119 = tpu.concatenate %115, %116, %117, %118 in 0 : vector<1x8x8xbf16>, vector<1x8x8xbf16>, vector<1x8x8xbf16>, vector<1x8x8xbf16> -> vector<4x8x8xbf16>
    %120 = vector.shape_cast %105 : vector<8x32xbf16> to vector<1x8x32xbf16>
    %121 = vector.extract_strided_slice %120 {offsets = [0, 0, 0], sizes = [1, 8, 8], strides = [1, 1, 1]} : vector<1x8x32xbf16> to vector<1x8x8xbf16>
    %122 = vector.extract_strided_slice %120 {offsets = [0, 0, 8], sizes = [1, 8, 8], strides = [1, 1, 1]} : vector<1x8x32xbf16> to vector<1x8x8xbf16>
    %123 = vector.extract_strided_slice %120 {offsets = [0, 0, 16], sizes = [1, 8, 8], strides = [1, 1, 1]} : vector<1x8x32xbf16> to vector<1x8x8xbf16>
    %124 = vector.extract_strided_slice %120 {offsets = [0, 0, 24], sizes = [1, 8, 8], strides = [1, 1, 1]} : vector<1x8x32xbf16> to vector<1x8x8xbf16>
    %125 = tpu.concatenate %121, %122, %123, %124 in 0 : vector<1x8x8xbf16>, vector<1x8x8xbf16>, vector<1x8x8xbf16>, vector<1x8x8xbf16> -> vector<4x8x8xbf16>
    "tpu.trace_start"() <{level = 10 : i32, message = "nqd,nkd->nqk"}> : () -> ()
    %cst_47 = arith.constant dense<0.000000e+00> : vector<4x8x8xf32>
    %126 = tpu.matmul %113, %119, %cst_47 {dimension_numbers = #tpu.dot_dimension_numbers<[2], [2], [1], [1], [0, 0, 0, 1, 1, 1], [0], [0]>} : vector<4x8x8xbf16>, vector<4x8x8xbf16>, vector<4x8x8xf32> -> vector<4x8x8xf32>
    "tpu.trace_stop"() : () -> ()
    %127 = vector.shape_cast %126 : vector<4x8x8xf32> to vector<4x1x8x8xf32>
    %128 = vector.shape_cast %5 : vector<1x8x8xf32> to vector<1x1x8x8xf32>
    %129 = vector.broadcast %128 : vector<1x1x8x8xf32> to vector<4x1x8x8xf32>
    %130 = arith.addf %127, %129 : vector<4x1x8x8xf32>
    %cst_48 = arith.constant dense<0xFF800000> : vector<4x1x8xf32>
    %131 = vector.multi_reduction <maximumf>, %130, %cst_48 [3] : vector<4x1x8x8xf32> to vector<4x1x8xf32>
    %132 = vector.shape_cast %131 : vector<4x1x8xf32> to vector<4x1x8x1xf32>
    %133 = vector.broadcast %132 : vector<4x1x8x1xf32> to vector<4x1x8x8xf32>
    %134 = arith.subf %130, %133 : vector<4x1x8x8xf32>
    %135 = math.exp %134 : vector<4x1x8x8xf32>
    %cst_49 = arith.constant dense<0.000000e+00> : vector<4x1x8xf32>
    %136 = vector.multi_reduction <add>, %135, %cst_49 [3] : vector<4x1x8x8xf32> to vector<4x1x8xf32>
    %137 = vector.shape_cast %136 : vector<4x1x8xf32> to vector<4x1x8x1xf32>
    %138 = tpu.reciprocal %137 {approx = true} : vector<4x1x8x1xf32> -> vector<4x1x8x1xf32>
    %139 = vector.broadcast %138 : vector<4x1x8x1xf32> to vector<4x1x8x8xf32>
    %140 = arith.mulf %135, %139 : vector<4x1x8x8xf32>
    %141 = vector.shape_cast %140 : vector<4x1x8x8xf32> to vector<4x8x8xf32>
    %142 = arith.truncf %141 : vector<4x8x8xf32> to vector<4x8x8xbf16>
    "tpu.trace_start"() <{level = 10 : i32, message = "nqk,nkd->nqd"}> : () -> ()
    %cst_50 = arith.constant dense<0.000000e+00> : vector<4x8x8xf32>
    %143 = tpu.matmul %142, %125, %cst_50 {dimension_numbers = #tpu.dot_dimension_numbers<[2], [1], [1], [2], [0, 0, 0, 1, 1, 2], [0], [0]>} : vector<4x8x8xbf16>, vector<4x8x8xbf16>, vector<4x8x8xf32> -> vector<4x8x8xf32>
    "tpu.trace_stop"() : () -> ()
    %144 = arith.truncf %143 : vector<4x8x8xf32> to vector<4x8x8xbf16>
    %145 = vector.extract_strided_slice %144 {offsets = [0, 0, 0], sizes = [1, 8, 8], strides = [1, 1, 1]} : vector<4x8x8xbf16> to vector<1x8x8xbf16>
    %146 = vector.shape_cast %145 : vector<1x8x8xbf16> to vector<8x8xbf16>
    %147 = vector.extract_strided_slice %144 {offsets = [1, 0, 0], sizes = [1, 8, 8], strides = [1, 1, 1]} : vector<4x8x8xbf16> to vector<1x8x8xbf16>
    %148 = vector.shape_cast %147 : vector<1x8x8xbf16> to vector<8x8xbf16>
    %149 = vector.extract_strided_slice %144 {offsets = [2, 0, 0], sizes = [1, 8, 8], strides = [1, 1, 1]} : vector<4x8x8xbf16> to vector<1x8x8xbf16>
    %150 = vector.shape_cast %149 : vector<1x8x8xbf16> to vector<8x8xbf16>
    %151 = vector.extract_strided_slice %144 {offsets = [3, 0, 0], sizes = [1, 8, 8], strides = [1, 1, 1]} : vector<4x8x8xbf16> to vector<1x8x8xbf16>
    %152 = vector.shape_cast %151 : vector<1x8x8xbf16> to vector<8x8xbf16>
    %153 = tpu.concatenate %146, %148, %150, %152 in 1 : vector<8x8xbf16>, vector<8x8xbf16>, vector<8x8xbf16>, vector<8x8xbf16> -> vector<8x32xbf16>
    %cst_51 = arith.constant dense<0.000000e+00> : vector<8x32xf32>
    %154 = tpu.matmul %153, %106, %cst_51 {dimension_numbers = #tpu.dot_dimension_numbers<[1], [0], [0], [1], [0, 0, 1, 1], [], []>} : vector<8x32xbf16>, vector<32x32xbf16>, vector<8x32xf32> -> vector<8x32xf32>
    %155 = vector.broadcast %107 : vector<1x32xf32> to vector<8x32xf32>
    %156 = arith.addf %154, %155 : vector<8x32xf32>
    %157 = arith.addf %89, %156 : vector<8x32xf32>
    %c0_52 = arith.constant 0 : index
    %c0_53 = arith.constant 0 : index
    %158 = vector.load %arg21[%c0_52, %c0_53] : memref<1x32xf32, #tpu.memory_space<vmem>>, vector<1x32xf32>
    %c0_54 = arith.constant 0 : index
    %c0_55 = arith.constant 0 : index
    %159 = vector.load %arg22[%c0_54, %c0_55] : memref<1x32xf32, #tpu.memory_space<vmem>>, vector<1x32xf32>
    %cst_56 = arith.constant dense<0.000000e+00> : vector<8xf32>
    %160 = vector.multi_reduction <add>, %157, %cst_56 [1] : vector<8x32xf32> to vector<8xf32>
    %161 = vector.shape_cast %160 : vector<8xf32> to vector<8x1xf32>
    %cst_57 = arith.constant 3.200000e+01 : f32
    %162 = vector.broadcast %cst_57 : f32 to vector<8x1xf32>
    %163 = arith.divf %161, %162 : vector<8x1xf32>
    %164 = vector.broadcast %163 : vector<8x1xf32> to vector<8x32xf32>
    %165 = arith.subf %157, %164 : vector<8x32xf32>
    %166 = arith.mulf %165, %165 : vector<8x32xf32>
    %cst_58 = arith.constant dense<0.000000e+00> : vector<8xf32>
    %167 = vector.multi_reduction <add>, %166, %cst_58 [1] : vector<8x32xf32> to vector<8xf32>
    %168 = vector.shape_cast %167 : vector<8xf32> to vector<8x1xf32>
    %cst_59 = arith.constant 3.200000e+01 : f32
    %169 = vector.broadcast %cst_59 : f32 to vector<8x1xf32>
    %170 = arith.divf %168, %169 : vector<8x1xf32>
    %cst_60 = arith.constant 9.99999974E-6 : f32
    %171 = vector.broadcast %cst_60 : f32 to vector<8x1xf32>
    %172 = arith.addf %170, %171 : vector<8x1xf32>
    %173 = math.rsqrt %172 : vector<8x1xf32>
    %174 = vector.broadcast %173 : vector<8x1xf32> to vector<8x32xf32>
    %175 = arith.mulf %165, %174 : vector<8x32xf32>
    %176 = vector.broadcast %158 : vector<1x32xf32> to vector<8x32xf32>
    %177 = arith.mulf %175, %176 : vector<8x32xf32>
    %178 = vector.broadcast %159 : vector<1x32xf32> to vector<8x32xf32>
    %179 = arith.addf %177, %178 : vector<8x32xf32>
    %c0_61 = arith.constant 0 : index
    %c0_62 = arith.constant 0 : index
    %180 = vector.load %arg15[%c0_61, %c0_62] : memref<32x64xbf16, #tpu.memory_space<vmem>>, vector<32x64xbf16>
    %c0_63 = arith.constant 0 : index
    %c0_64 = arith.constant 0 : index
    %181 = vector.load %arg16[%c0_63, %c0_64] : memref<1x64xf32, #tpu.memory_space<vmem>>, vector<1x64xf32>
    %182 = arith.truncf %179 : vector<8x32xf32> to vector<8x32xbf16>
    %cst_65 = arith.constant dense<0.000000e+00> : vector<8x64xf32>
    %183 = tpu.matmul %182, %180, %cst_65 {dimension_numbers = #tpu.dot_dimension_numbers<[1], [0], [0], [1], [0, 0, 1, 1], [], []>} : vector<8x32xbf16>, vector<32x64xbf16>, vector<8x64xf32> -> vector<8x64xf32>
    %184 = vector.broadcast %181 : vector<1x64xf32> to vector<8x64xf32>
    %185 = arith.addf %183, %184 : vector<8x64xf32>
    %186 = arith.truncf %185 : vector<8x64xf32> to vector<8x64xbf16>
    %cst_66 = arith.constant 0.000000e+00 : bf16
    %187 = vector.broadcast %cst_66 : bf16 to vector<8x64xbf16>
    %188 = arith.maximumf %186, %187 : vector<8x64xbf16>
    %c0_67 = arith.constant 0 : index
    %c0_68 = arith.constant 0 : index
    %189 = vector.load %arg17[%c0_67, %c0_68] : memref<64x32xbf16, #tpu.memory_space<vmem>>, vector<64x32xbf16>
    %c0_69 = arith.constant 0 : index
    %c0_70 = arith.constant 0 : index
    %190 = vector.load %arg18[%c0_69, %c0_70] : memref<1x32xf32, #tpu.memory_space<vmem>>, vector<1x32xf32>
    %cst_71 = arith.constant dense<0.000000e+00> : vector<8x32xf32>
    %191 = tpu.matmul %188, %189, %cst_71 {dimension_numbers = #tpu.dot_dimension_numbers<[1], [0], [0], [1], [0, 0, 1, 1], [], []>} : vector<8x64xbf16>, vector<64x32xbf16>, vector<8x32xf32> -> vector<8x32xf32>
    %192 = vector.broadcast %190 : vector<1x32xf32> to vector<8x32xf32>
    %193 = arith.addf %191, %192 : vector<8x32xf32>
    %194 = arith.addf %179, %193 : vector<8x32xf32>
    %c0_72 = arith.constant 0 : index
    %c0_73 = arith.constant 0 : index
    %195 = vector.load %arg23[%c0_72, %c0_73] : memref<1x32xf32, #tpu.memory_space<vmem>>, vector<1x32xf32>
    %c0_74 = arith.constant 0 : index
    %c0_75 = arith.constant 0 : index
    %196 = vector.load %arg24[%c0_74, %c0_75] : memref<1x32xf32, #tpu.memory_space<vmem>>, vector<1x32xf32>
    %cst_76 = arith.constant dense<0.000000e+00> : vector<8xf32>
    %197 = vector.multi_reduction <add>, %194, %cst_76 [1] : vector<8x32xf32> to vector<8xf32>
    %198 = vector.shape_cast %197 : vector<8xf32> to vector<8x1xf32>
    %cst_77 = arith.constant 3.200000e+01 : f32
    %199 = vector.broadcast %cst_77 : f32 to vector<8x1xf32>
    %200 = arith.divf %198, %199 : vector<8x1xf32>
    %201 = vector.broadcast %200 : vector<8x1xf32> to vector<8x32xf32>
    %202 = arith.subf %194, %201 : vector<8x32xf32>
    %203 = arith.mulf %202, %202 : vector<8x32xf32>
    %cst_78 = arith.constant dense<0.000000e+00> : vector<8xf32>
    %204 = vector.multi_reduction <add>, %203, %cst_78 [1] : vector<8x32xf32> to vector<8xf32>
    %205 = vector.shape_cast %204 : vector<8xf32> to vector<8x1xf32>
    %cst_79 = arith.constant 3.200000e+01 : f32
    %206 = vector.broadcast %cst_79 : f32 to vector<8x1xf32>
    %207 = arith.divf %205, %206 : vector<8x1xf32>
    %cst_80 = arith.constant 9.99999974E-6 : f32
    %208 = vector.broadcast %cst_80 : f32 to vector<8x1xf32>
    %209 = arith.addf %207, %208 : vector<8x1xf32>
    %210 = math.rsqrt %209 : vector<8x1xf32>
    %211 = vector.broadcast %210 : vector<8x1xf32> to vector<8x32xf32>
    %212 = arith.mulf %202, %211 : vector<8x32xf32>
    %213 = vector.broadcast %195 : vector<1x32xf32> to vector<8x32xf32>
    %214 = arith.mulf %212, %213 : vector<8x32xf32>
    %215 = vector.broadcast %196 : vector<1x32xf32> to vector<8x32xf32>
    %216 = arith.addf %214, %215 : vector<8x32xf32>
    %217 = vector.shape_cast %216 : vector<8x32xf32> to vector<1x8x32xf32>
    %c0_81 = arith.constant 0 : index
    %c0_82 = arith.constant 0 : index
    %c0_83 = arith.constant 0 : index
    %218 = vector.load %arg25[%c0_81, %c0_82, %c0_83] : memref<1x8x32xf32, #tpu.memory_space<vmem>>, vector<1x8x32xf32>
    tpu.vector_store %arg25[%c0_81, %c0_82, %c0_83], %217 {strides = array<i32>} : memref<1x8x32xf32, #tpu.memory_space<vmem>>, vector<1x8x32xf32>,
    return
  }
  func.func @transform_0(%arg0: i32) -> (i32, i32, i32) {
    %c0_i32 = arith.constant 0 : i32
    %c0_i32_0 = arith.constant 0 : i32
    %c0_i32_1 = arith.constant 0 : i32
    return %arg0, %c0_i32, %c0_i32_0 : i32, i32, i32
  }
  func.func @transform_1(%arg0: i32) -> (i32, i32, i32) {
    %c0_i32 = arith.constant 0 : i32
    %c0_i32_0 = arith.constant 0 : i32
    %c0_i32_1 = arith.constant 0 : i32
    return %arg0, %c0_i32, %c0_i32_0 : i32, i32, i32
  }
  func.func @transform_2(%arg0: i32) -> (i32, i32, i32) {
    %c0_i32 = arith.constant 0 : i32
    %c0_i32_0 = arith.constant 0 : i32
    %c0_i32_1 = arith.constant 0 : i32
    return %arg0, %c0_i32, %c0_i32_0 : i32, i32, i32
  }
  func.func @transform_3(%arg0: i32) -> (i32, i32, i32) {
    %c0_i32 = arith.constant 0 : i32
    %c0_i32_0 = arith.constant 0 : i32
    %c0_i32_1 = arith.constant 0 : i32
    return %arg0, %c0_i32, %c0_i32_0 : i32, i32, i32
  }
  func.func @transform_4(%arg0: i32) -> (i32, i32) {
    %c0_i32 = arith.constant 0 : i32
    %c0_i32_0 = arith.constant 0 : i32
    %c0_i32_1 = arith.constant 0 : i32
    return %c0_i32, %c0_i32_0 : i32, i32
  }
  func.func @transform_5(%arg0: i32) -> (i32, i32) {
    %c0_i32 = arith.constant 0 : i32
    %c0_i32_0 = arith.constant 0 : i32
    %c0_i32_1 = arith.constant 0 : i32
    return %c0_i32, %c0_i32_0 : i32, i32
  }
  func.func @transform_6(%arg0: i32) -> (i32, i32) {
    %c0_i32 = arith.constant 0 : i32
    %c0_i32_0 = arith.constant 0 : i32
    %c0_i32_1 = arith.constant 0 : i32
    return %c0_i32, %c0_i32_0 : i32, i32
  }
  func.func @transform_7(%arg0: i32) -> (i32, i32) {
    %c0_i32 = arith.constant 0 : i32
    %c0_i32_0 = arith.constant 0 : i32
    %c0_i32_1 = arith.constant 0 : i32
    return %c0_i32, %c0_i32_0 : i32, i32
  }
  func.func @transform_8(%arg0: i32) -> (i32, i32) {
    %c0_i32 = arith.constant 0 : i32
    %c0_i32_0 = arith.constant 0 : i32
    %c0_i32_1 = arith.constant 0 : i32
    return %c0_i32, %c0_i32_0 : i32, i32
  }
  func.func @transform_9(%arg0: i32) -> (i32, i32) {
    %c0_i32 = arith.constant 0 : i32
    %c0_i32_0 = arith.constant 0 : i32
    %c0_i32_1 = arith.constant 0 : i32
    return %c0_i32, %c0_i32_0 : i32, i32
  }
  func.func @transform_10(%arg0: i32) -> (i32, i32) {
    %c0_i32 = arith.constant 0 : i32
    %c0_i32_0 = arith.constant 0 : i32
    %c0_i32_1 = arith.constant 0 : i32
    return %c0_i32, %c0_i32_0 : i32, i32
  }
  func.func @transform_11(%arg0: i32) -> (i32, i32) {
    %c0_i32 = arith.constant 0 : i32
    %c0_i32_0 = arith.constant 0 : i32
    %c0_i32_1 = arith.constant 0 : i32
    return %c0_i32, %c0_i32_0 : i32, i32
  }
  func.func @transform_12(%arg0: i32) -> (i32, i32) {
    %c0_i32 = arith.constant 0 : i32
    %c0_i32_0 = arith.constant 0 : i32
    %c0_i32_1 = arith.constant 0 : i32
    return %c0_i32, %c0_i32_0 : i32, i32
  }
  func.func @transform_13(%arg0: i32) -> (i32, i32) {
    %c0_i32 = arith.constant 0 : i32
    %c0_i32_0 = arith.constant 0 : i32
    %c0_i32_1 = arith.constant 0 : i32
    return %c0_i32, %c0_i32_0 : i32, i32
  }
  func.func @transform_14(%arg0: i32) -> (i32, i32) {
    %c0_i32 = arith.constant 0 : i32
    %c0_i32_0 = arith.constant 0 : i32
    %c0_i32_1 = arith.constant 0 : i32
    return %c0_i32, %c0_i32_0 : i32, i32
  }
  func.func @transform_15(%arg0: i32) -> (i32, i32) {
    %c0_i32 = arith.constant 0 : i32
    %c0_i32_0 = arith.constant 0 : i32
    %c0_i32_1 = arith.constant 0 : i32
    return %c0_i32, %c0_i32_0 : i32, i32
  }
  func.func @transform_16(%arg0: i32) -> (i32, i32) {
    %c0_i32 = arith.constant 0 : i32
    %c0_i32_0 = arith.constant 0 : i32
    %c0_i32_1 = arith.constant 0 : i32
    return %c0_i32, %c0_i32_0 : i32, i32
  }
  func.func @transform_17(%arg0: i32) -> (i32, i32) {
    %c0_i32 = arith.constant 0 : i32
    %c0_i32_0 = arith.constant 0 : i32
    %c0_i32_1 = arith.constant 0 : i32
    return %c0_i32, %c0_i32_0 : i32, i32
  }
  func.func @transform_18(%arg0: i32) -> (i32, i32) {
    %c0_i32 = arith.constant 0 : i32
    %c0_i32_0 = arith.constant 0 : i32
    %c0_i32_1 = arith.constant 0 : i32
    return %c0_i32, %c0_i32_0 : i32, i32
  }
  func.func @transform_19(%arg0: i32) -> (i32, i32) {
    %c0_i32 = arith.constant 0 : i32
    %c0_i32_0 = arith.constant 0 : i32
    %c0_i32_1 = arith.constant 0 : i32
    return %c0_i32, %c0_i32_0 : i32, i32
  }
  func.func @transform_20(%arg0: i32) -> (i32, i32) {
    %c0_i32 = arith.constant 0 : i32
    %c0_i32_0 = arith.constant 0 : i32
    %c0_i32_1 = arith.constant 0 : i32
    return %c0_i32, %c0_i32_0 : i32, i32
  }
  func.func @transform_21(%arg0: i32) -> (i32, i32) {
    %c0_i32 = arith.constant 0 : i32
    %c0_i32_0 = arith.constant 0 : i32
    %c0_i32_1 = arith.constant 0 : i32
    return %c0_i32, %c0_i32_0 : i32, i32
  }
  func.func @transform_22(%arg0: i32) -> (i32, i32) {
    %c0_i32 = arith.constant 0 : i32
    %c0_i32_0 = arith.constant 0 : i32
    %c0_i32_1 = arith.constant 0 : i32
    return %c0_i32, %c0_i32_0 : i32, i32
  }
  func.func @transform_23(%arg0: i32) -> (i32, i32) {
    %c0_i32 = arith.constant 0 : i32
    %c0_i32_0 = arith.constant 0 : i32
    %c0_i32_1 = arith.constant 0 : i32
    return %c0_i32, %c0_i32_0 : i32, i32
  }
  func.func @transform_24(%arg0: i32) -> (i32, i32, i32) {
    %c0_i32 = arith.constant 0 : i32
    %c0_i32_0 = arith.constant 0 : i32
    %c0_i32_1 = arith.constant 0 : i32
    return %arg0, %c0_i32, %c0_i32_0 : i32, i32, i32
  }
}

</mosaic_0001>

<llo_original>
// kernel: tpu_custom_call.1
$region0: #{tpu_custom_call.1}
  #allocation0 [shape = 'u32[]', space=smem, size = 0x4, offset = 0x4, fixed_abs, tag = 'smem constant byte address 0x4 - core index']
  #allocation1 [shape = 'u32[144,128]{1,0:T(1,128)}', space=vmem, size = 0x12000, scoped, tag = 'internal scratch']
  %s0 = inlined_call_operand.vmem [shape: f32[2,8,32], index: 0, kind: input, shape index: {}]
  %s1 = inlined_call_operand.vmem [shape: f32[2,8,32], index: 1, kind: input, shape index: {}]
  %s2 = inlined_call_operand.vmem [shape: f32[2,8,8], index: 2, kind: input, shape index: {}]
  %s3 = inlined_call_operand.hbm [shape: f32[2,8,8], index: 3, kind: input, shape index: {}]
  %s4 = inlined_call_operand.hbm [shape: bf16[32,96], index: 4, kind: input, shape index: {}]
  %s5 = inlined_call_operand.vmem [shape: f32[1,96], index: 5, kind: input, shape index: {}]
  %s6 = inlined_call_operand.hbm [shape: bf16[32,32], index: 6, kind: input, shape index: {}]
  %s7 = inlined_call_operand.hbm [shape: f32[1,32], index: 7, kind: input, shape index: {}]
  %s8 = inlined_call_operand.hbm [shape: bf16[32,32], index: 8, kind: input, shape index: {}]
  %s9 = inlined_call_operand.hbm [shape: f32[1,32], index: 9, kind: input, shape index: {}]
  %s10 = inlined_call_operand.vmem [shape: bf16[32,64], index: 10, kind: input, shape index: {}]
  %s11 = inlined_call_operand.hbm [shape: f32[1,64], index: 11, kind: input, shape index: {}]
  %s12 = inlined_call_operand.hbm [shape: bf16[32,32], index: 12, kind: input, shape index: {}]
  %s13 = inlined_call_operand.hbm [shape: f32[1,32], index: 13, kind: input, shape index: {}]
  %s14 = inlined_call_operand.vmem [shape: bf16[32,64], index: 14, kind: input, shape index: {}]
  %s15 = inlined_call_operand.vmem [shape: f32[1,64], index: 15, kind: input, shape index: {}]
  %s16 = inlined_call_operand.vmem [shape: bf16[64,32], index: 16, kind: input, shape index: {}]
  %s17 = inlined_call_operand.vmem [shape: f32[1,32], index: 17, kind: input, shape index: {}]
  %s18 = inlined_call_operand.vmem [shape: f32[1,32], index: 18, kind: input, shape index: {}]
  %s19 = inlined_call_operand.vmem [shape: f32[1,32], index: 19, kind: input, shape index: {}]
  %s20 = inlined_call_operand.vmem [shape: f32[1,32], index: 20, kind: input, shape index: {}]
  %s21 = inlined_call_operand.vmem [shape: f32[1,32], index: 21, kind: input, shape index: {}]
  %s22 = inlined_call_operand.vmem [shape: f32[1,32], index: 22, kind: input, shape index: {}]
  %s23 = inlined_call_operand.vmem [shape: f32[1,32], index: 23, kind: input, shape index: {}]
  %s24 = inlined_call_operand.hbm [shape: f32[2,8,32], index: 24, kind: output, shape index: {}]
  %s25 = sld [smem:[#allocation0]]
  $region165: #{tpu_custom_call.1} parent=0
    _
  %s27 = ssub.s32 1, %s25
  %s28 = scalar_select 0, %s27, %s25
  $region1: #{tpu_custom_call.1} parent=0
    #allocation2 [shape = 'u8[8192]{0}', space=vmem, size = 0x2000, scoped, tag = 'input window, operand 3']
    #allocation3 [shape = 's32[2]{0}', space=sflag, size = 0x8, scoped, tag = 'scoped memory for tpu_custom_call.1']
    #allocation4 [shape = 's32[2]{0}', space=sflag, size = 0x8, scoped, tag = 'scoped memory for tpu_custom_call.1']
    #allocation5 [shape = 'u8[8192]{0}', space=vmem, size = 0x2000, scoped, tag = 'input window, operand 4, single buffered']
    #allocation6 [shape = 's32[1]{0}', space=sflag, size = 0x4, scoped, tag = 'scoped memory for tpu_custom_call.1']
    #allocation7 [shape = 'u8[8192]{0}', space=vmem, size = 0x2000, scoped, tag = 'input window, operand 6, single buffered']
    #allocation8 [shape = 'u8[512]{0}', space=vmem, size = 0x400, scoped, tag = 'input window, operand 7, single buffered']
    #allocation9 [shape = 's32[1]{0}', space=sflag, size = 0x4, scoped, tag = 'scoped memory for tpu_custom_call.1']
    #allocation10 [shape = 'u8[8192]{0}', space=vmem, size = 0x2000, scoped, tag = 'input window, operand 8, single buffered']
    #allocation11 [shape = 'u8[512]{0}', space=vmem, size = 0x400, scoped, tag = 'input window, operand 9, single buffered']
    #allocation12 [shape = 's32[1]{0}', space=sflag, size = 0x4, scoped, tag = 'scoped memory for tpu_custom_call.1']
    #allocation13 [shape = 'u8[512]{0}', space=vmem, size = 0x400, scoped, tag = 'input window, operand 11, single buffered']
    #allocation14 [shape = 'u8[8192]{0}', space=vmem, size = 0x2000, scoped, tag = 'input window, operand 12, single buffered']
    #allocation15 [shape = 's32[1]{0}', space=sflag, size = 0x4, scoped, tag = 'scoped memory for tpu_custom_call.1']
    #allocation16 [shape = 'u8[512]{0}', space=vmem, size = 0x400, scoped, tag = 'input window, operand 13, single buffered']
    #allocation17 [shape = 'u8[8192]{0}', space=vmem, size = 0x2000, scoped, tag = 'output window, operand 0']
    %29 = vsyncpa [#allocation3], 0
    %s30 = scalar_lea.sflag [#allocation3], 1
    %31 = vsyncpa %s30, 0
    %32 = vsyncpa [#allocation6], 0
    %33 = vsyncpa [#allocation9], 0
    %34 = vsyncpa [#allocation12], 0
    %35 = vsyncpa [#allocation15], 0
    %36 = vsyncpa [#allocation4], 0
    %s37 = scalar_lea.sflag [#allocation4], 1
    %38 = vsyncpa %s37, 0
    loop: start=0, step=1, limit=4
    $region2: #{tpu_custom_call.1} parent=1 // loop_pre_header
      _
    $region3: #{tpu_custom_call.1} parent=1 // loop_header
      %s40 = sphi 0, %s44
      %p41 = scmp.ge.s32.totalorder %s40, 4
      %s50 = sphi 0, %s52
      %s53 = sphi 0, %s50
      %s54 = sphi 0, %s53
      %s70 = sphi 0, %s54
      %s76 = sphi 0, %s78
      %s79 = sphi 0, %s76
      %s80 = sphi 0, %s79
      %s96 = sphi 0, %s80
      %s102 = sphi 0, %s104
      %s105 = sphi 0, %s102
      %s106 = sphi 0, %s105
      %s122 = sphi 0, %s106
      %s128 = sphi 0, %s130
      %s131 = sphi 0, %s128
      %s132 = sphi 0, %s131
      %s148 = sphi 0, %s132
      %s152 = sphi 0, %s152
      %s154 = sphi 0, %s152
      %s155 = sphi 0, %s154
      %s169 = sphi 0, %s155
      %s173 = sphi 0, %s173
      %s175 = sphi 0, %s173
      %s176 = sphi 0, %s175
      %s190 = sphi 0, %s176
      %s194 = sphi 0, %s194
      %s196 = sphi 0, %s194
      %s197 = sphi 0, %s196
      %s211 = sphi 0, %s197
      %s215 = sphi 0, %s215
      %s217 = sphi 0, %s215
      %s218 = sphi 0, %s217
      %s232 = sphi 0, %s218
      %s236 = sphi 0, %s236
      %s238 = sphi 0, %s236
      %s239 = sphi 0, %s238
      %s253 = sphi 0, %s239
      %s257 = sphi 0, %s257
      %s259 = sphi 0, %s257
      %s260 = sphi 0, %s259
      %s274 = sphi 0, %s260
      %s278 = sphi 0, %s278
      %s280 = sphi 0, %s278
      %s281 = sphi 0, %s280
      %s295 = sphi 0, %s281
      %s299 = sphi 0, %s299
      %s301 = sphi 0, %s299
      %s302 = sphi 0, %s301
      %s316 = sphi 0, %s302
      %s320 = sphi 0, %s320
      %s322 = sphi 0, %s320
      %s323 = sphi 0, %s322
      %s337 = sphi 0, %s323
      %s341 = sphi 0, %s341
      %s343 = sphi 0, %s341
      %s344 = sphi 0, %s343
      %s358 = sphi 0, %s344
      %s362 = sphi 0, %s362
      %s364 = sphi 0, %s362
      %s365 = sphi 0, %s364
      %s379 = sphi 0, %s365
      %s383 = sphi 0, %s383
      %s385 = sphi 0, %s383
      %s386 = sphi 0, %s385
      %s400 = sphi 0, %s386
      %s404 = sphi 0, %s404
      %s406 = sphi 0, %s404
      %s407 = sphi 0, %s406
      %s421 = sphi 0, %s407
      %s425 = sphi 0, %s425
      %s427 = sphi 0, %s425
      %s428 = sphi 0, %s427
      %s442 = sphi 0, %s428
      %s446 = sphi 0, %s446
      %s448 = sphi 0, %s446
      %s449 = sphi 0, %s448
      %s463 = sphi 0, %s449
      %s467 = sphi 0, %s467
      %s469 = sphi 0, %s467
      %s470 = sphi 0, %s469
      %s484 = sphi 0, %s470
      %s488 = sphi 0, %s488
      %s490 = sphi 0, %s488
      %s491 = sphi 0, %s490
      %s505 = sphi 0, %s491
      %s509 = sphi 0, %s509
      %s511 = sphi 0, %s509
      %s512 = sphi 0, %s511
      %s526 = sphi 0, %s512
      %s530 = sphi 0, %s530
      %s532 = sphi 0, %s530
      %s533 = sphi 0, %s532
      %s547 = sphi 0, %s533
      %s551 = sphi 0, %s551
      %s553 = sphi 0, %s551
      %s554 = sphi 0, %s553
      %s568 = sphi 0, %s554
      %s574 = sphi 0, %s576
      %s577 = sphi 0, %s574
      %s578 = sphi 0, %s577
      %s594 = sphi 0, %s578
    $region4: #{tpu_custom_call.1} parent=1 // loop_header_branch
      %43 = sbr.rel (%p41) target = $region8
    $region5: #{tpu_custom_call.1} parent=1 // loop_body
      %s45 = ssub.s32 %s40, 1
      %s46 = ssub.s32 %s40, 2
      %s47 = sadd.s32 %s40, 1
      %s48 = ssub.s32 %s40, %s47
      %p49 = scmp.eq.s32.totalorder %s48, 0
      %s51 = sadd.s32 %s50, 1
      %s52 = scalar_select %p49, %s50, %s51
      %p55 = pneg %p49
      %p56 = scmp.eq.s32.totalorder %s40, 1
      %p57 = por %p55, %p56
      %p58 = scmp.ne.s32.totalorder %s50, %s53
      %p59 = scmp.eq.s32.totalorder %s40, 0
      %p60 = por %p58, %p59
      %p61 = scmp.ne.s32.totalorder %s50, %s53
      %p62 = scmp.eq.s32.totalorder %s45, 1
      %p63 = por %p61, %p62
      %p64 = scmp.ne.s32.totalorder %s53, %s54
      %p65 = scmp.eq.s32.totalorder %s45, 0
      %p66 = por %p64, %p65
      %p67 = scmp.ne.s32.totalorder %s53, %s54
      %p68 = scmp.eq.s32.totalorder %s46, 1
      %p69 = por %p67, %p68
      %p71 = scmp.ne.s32.totalorder %s54, %s70
      %p72 = scmp.eq.s32.totalorder %s46, 0
      %p73 = por %p71, %p72
      %s74 = ssub.s32 %s40, %s47
      %p75 = scmp.eq.s32.totalorder %s74, 0
      %s77 = sadd.s32 %s76, 1
      %s78 = scalar_select %p75, %s76, %s77
      %p81 = pneg %p75
      %p82 = scmp.eq.s32.totalorder %s40, 1
      %p83 = por %p81, %p82
      %p84 = scmp.ne.s32.totalorder %s76, %s79
      %p85 = scmp.eq.s32.totalorder %s40, 0
      %p86 = por %p84, %p85
      %p87 = scmp.ne.s32.totalorder %s76, %s79
      %p88 = scmp.eq.s32.totalorder %s45, 1
      %p89 = por %p87, %p88
      %p90 = scmp.ne.s32.totalorder %s79, %s80
      %p91 = scmp.eq.s32.totalorder %s45, 0
      %p92 = por %p90, %p91
      %p93 = scmp.ne.s32.totalorder %s79, %s80
      %p94 = scmp.eq.s32.totalorder %s46, 1
      %p95 = por %p93, %p94
      %p97 = scmp.ne.s32.totalorder %s80, %s96
      %p98 = scmp.eq.s32.totalorder %s46, 0
      %p99 = por %p97, %p98
      %s100 = ssub.s32 %s40, %s47
      %p101 = scmp.eq.s32.totalorder %s100, 0
      %s103 = sadd.s32 %s102, 1
      %s104 = scalar_select %p101, %s102, %s103
      %p107 = pneg %p101
      %p108 = scmp.eq.s32.totalorder %s40, 1
      %p109 = por %p107, %p108
      %p110 = scmp.ne.s32.totalorder %s102, %s105
      %p111 = scmp.eq.s32.totalorder %s40, 0
      %p112 = por %p110, %p111
      %p113 = scmp.ne.s32.totalorder %s102, %s105
      %p114 = scmp.eq.s32.totalorder %s45, 1
      %p115 = por %p113, %p114
      %p116 = scmp.ne.s32.totalorder %s105, %s106
      %p117 = scmp.eq.s32.totalorder %s45, 0
      %p118 = por %p116, %p117
      %p119 = scmp.ne.s32.totalorder %s105, %s106
      %p120 = scmp.eq.s32.totalorder %s46, 1
      %p121 = por %p119, %p120
      %p123 = scmp.ne.s32.totalorder %s106, %s122
      %p124 = scmp.eq.s32.totalorder %s46, 0
      %p125 = por %p123, %p124
      %s126 = ssub.s32 %s40, %s47
      %p127 = scmp.eq.s32.totalorder %s126, 0
      %s129 = sadd.s32 %s128, 1
      %s130 = scalar_select %p127, %s128, %s129
      %p133 = pneg %p127
      %p134 = scmp.eq.s32.totalorder %s40, 1
      %p135 = por %p133, %p134
      %p136 = scmp.ne.s32.totalorder %s128, %s131
      %p137 = scmp.eq.s32.totalorder %s40, 0
      %p138 = por %p136, %p137
      %p139 = scmp.ne.s32.totalorder %s128, %s131
      %p140 = scmp.eq.s32.totalorder %s45, 1
      %p141 = por %p139, %p140
      %p142 = scmp.ne.s32.totalorder %s131, %s132
      %p143 = scmp.eq.s32.totalorder %s45, 0
      %p144 = por %p142, %p143
      %p145 = scmp.ne.s32.totalorder %s131, %s132
      %p146 = scmp.eq.s32.totalorder %s46, 1
      %p147 = por %p145, %p146
      %p149 = scmp.ne.s32.totalorder %s132, %s148
      %p150 = scmp.eq.s32.totalorder %s46, 0
      %p151 = por %p149, %p150
      %s153 = sadd.s32 %s152, 1
      %p156 = scmp.eq.s32.totalorder %s40, 1
      %p157 = scmp.ne.s32.totalorder %s152, %s154
      %p158 = scmp.eq.s32.totalorder %s40, 0
      %p159 = por %p157, %p158
      %p160 = scmp.ne.s32.totalorder %s152, %s154
      %p161 = scmp.eq.s32.totalorder %s45, 1
      %p162 = por %p160, %p161
      %p163 = scmp.ne.s32.totalorder %s154, %s155
      %p164 = scmp.eq.s32.totalorder %s45, 0
      %p165 = por %p163, %p164
      %p166 = scmp.ne.s32.totalorder %s154, %s155
      %p167 = scmp.eq.s32.totalorder %s46, 1
      %p168 = por %p166, %p167
      %p170 = scmp.ne.s32.totalorder %s155, %s169
      %p171 = scmp.eq.s32.totalorder %s46, 0
      %p172 = por %p170, %p171
      %s174 = sadd.s32 %s173, 1
      %p177 = scmp.eq.s32.totalorder %s40, 1
      %p178 = scmp.ne.s32.totalorder %s173, %s175
      %p179 = scmp.eq.s32.totalorder %s40, 0
      %p180 = por %p178, %p179
      %p181 = scmp.ne.s32.totalorder %s173, %s175
      %p182 = scmp.eq.s32.totalorder %s45, 1
      %p183 = por %p181, %p182
      %p184 = scmp.ne.s32.totalorder %s175, %s176
      %p185 = scmp.eq.s32.totalorder %s45, 0
      %p186 = por %p184, %p185
      %p187 = scmp.ne.s32.totalorder %s175, %s176
      %p188 = scmp.eq.s32.totalorder %s46, 1
      %p189 = por %p187, %p188
      %p191 = scmp.ne.s32.totalorder %s176, %s190
      %p192 = scmp.eq.s32.totalorder %s46, 0
      %p193 = por %p191, %p192
      %s195 = sadd.s32 %s194, 1
      %p198 = scmp.eq.s32.totalorder %s40, 1
      %p199 = scmp.ne.s32.totalorder %s194, %s196
      %p200 = scmp.eq.s32.totalorder %s40, 0
      %p201 = por %p199, %p200
      %p202 = scmp.ne.s32.totalorder %s194, %s196
      %p203 = scmp.eq.s32.totalorder %s45, 1
      %p204 = por %p202, %p203
      %p205 = scmp.ne.s32.totalorder %s196, %s197
      %p206 = scmp.eq.s32.totalorder %s45, 0
      %p207 = por %p205, %p206
      %p208 = scmp.ne.s32.totalorder %s196, %s197
      %p209 = scmp.eq.s32.totalorder %s46, 1
      %p210 = por %p208, %p209
      %p212 = scmp.ne.s32.totalorder %s197, %s211
      %p213 = scmp.eq.s32.totalorder %s46, 0
      %p214 = por %p212, %p213
      %s216 = sadd.s32 %s215, 1
      %p219 = scmp.eq.s32.totalorder %s40, 1
      %p220 = scmp.ne.s32.totalorder %s215, %s217
      %p221 = scmp.eq.s32.totalorder %s40, 0
      %p222 = por %p220, %p221
      %p223 = scmp.ne.s32.totalorder %s215, %s217
      %p224 = scmp.eq.s32.totalorder %s45, 1
      %p225 = por %p223, %p224
      %p226 = scmp.ne.s32.totalorder %s217, %s218
      %p227 = scmp.eq.s32.totalorder %s45, 0
      %p228 = por %p226, %p227
      %p229 = scmp.ne.s32.totalorder %s217, %s218
      %p230 = scmp.eq.s32.totalorder %s46, 1
      %p231 = por %p229, %p230
      %p233 = scmp.ne.s32.totalorder %s218, %s232
      %p234 = scmp.eq.s32.totalorder %s46, 0
      %p235 = por %p233, %p234
      %s237 = sadd.s32 %s236, 1
      %p240 = scmp.eq.s32.totalorder %s40, 1
      %p241 = scmp.ne.s32.totalorder %s236, %s238
      %p242 = scmp.eq.s32.totalorder %s40, 0
      %p243 = por %p241, %p242
      %p244 = scmp.ne.s32.totalorder %s236, %s238
      %p245 = scmp.eq.s32.totalorder %s45, 1
      %p246 = por %p244, %p245
      %p247 = scmp.ne.s32.totalorder %s238, %s239
      %p248 = scmp.eq.s32.totalorder %s45, 0
      %p249 = por %p247, %p248
      %p250 = scmp.ne.s32.totalorder %s238, %s239
      %p251 = scmp.eq.s32.totalorder %s46, 1
      %p252 = por %p250, %p251
      %p254 = scmp.ne.s32.totalorder %s239, %s253
      %p255 = scmp.eq.s32.totalorder %s46, 0
      %p256 = por %p254, %p255
      %s258 = sadd.s32 %s257, 1
      %p261 = scmp.eq.s32.totalorder %s40, 1
      %p262 = scmp.ne.s32.totalorder %s257, %s259
      %p263 = scmp.eq.s32.totalorder %s40, 0
      %p264 = por %p262, %p263
      %p265 = scmp.ne.s32.totalorder %s257, %s259
      %p266 = scmp.eq.s32.totalorder %s45, 1
      %p267 = por %p265, %p266
      %p268 = scmp.ne.s32.totalorder %s259, %s260
      %p269 = scmp.eq.s32.totalorder %s45, 0
      %p270 = por %p268, %p269
      %p271 = scmp.ne.s32.totalorder %s259, %s260
      %p272 = scmp.eq.s32.totalorder %s46, 1
      %p273 = por %p271, %p272
      %p275 = scmp.ne.s32.totalorder %s260, %s274
      %p276 = scmp.eq.s32.totalorder %s46, 0
      %p277 = por %p275, %p276
      %s279 = sadd.s32 %s278, 1
      %p282 = scmp.eq.s32.totalorder %s40, 1
      %p283 = scmp.ne.s32.totalorder %s278, %s280
      %p284 = scmp.eq.s32.totalorder %s40, 0
      %p285 = por %p283, %p284
      %p286 = scmp.ne.s32.totalorder %s278, %s280
      %p287 = scmp.eq.s32.totalorder %s45, 1
      %p288 = por %p286, %p287
      %p289 = scmp.ne.s32.totalorder %s280, %s281
      %p290 = scmp.eq.s32.totalorder %s45, 0
      %p291 = por %p289, %p290
      %p292 = scmp.ne.s32.totalorder %s280, %s281
      %p293 = scmp.eq.s32.totalorder %s46, 1
      %p294 = por %p292, %p293
      %p296 = scmp.ne.s32.totalorder %s281, %s295
      %p297 = scmp.eq.s32.totalorder %s46, 0
      %p298 = por %p296, %p297
      %s300 = sadd.s32 %s299, 1
      %p303 = scmp.eq.s32.totalorder %s40, 1
      %p304 = scmp.ne.s32.totalorder %s299, %s301
      %p305 = scmp.eq.s32.totalorder %s40, 0
      %p306 = por %p304, %p305
      %p307 = scmp.ne.s32.totalorder %s299, %s301
      %p308 = scmp.eq.s32.totalorder %s45, 1
      %p309 = por %p307, %p308
      %p310 = scmp.ne.s32.totalorder %s301, %s302
      %p311 = scmp.eq.s32.totalorder %s45, 0
      %p312 = por %p310, %p311
      %p313 = scmp.ne.s32.totalorder %s301, %s302
      %p314 = scmp.eq.s32.totalorder %s46, 1
      %p315 = por %p313, %p314
      %p317 = scmp.ne.s32.totalorder %s302, %s316
      %p318 = scmp.eq.s32.totalorder %s46, 0
      %p319 = por %p317, %p318
      %s321 = sadd.s32 %s320, 1
      %p324 = scmp.eq.s32.totalorder %s40, 1
      %p325 = scmp.ne.s32.totalorder %s320, %s322
      %p326 = scmp.eq.s32.totalorder %s40, 0
      %p327 = por %p325, %p326
      %p328 = scmp.ne.s32.totalorder %s320, %s322
      %p329 = scmp.eq.s32.totalorder %s45, 1
      %p330 = por %p328, %p329
      %p331 = scmp.ne.s32.totalorder %s322, %s323
      %p332 = scmp.eq.s32.totalorder %s45, 0
      %p333 = por %p331, %p332
      %p334 = scmp.ne.s32.totalorder %s322, %s323
      %p335 = scmp.eq.s32.totalorder %s46, 1
      %p336 = por %p334, %p335
      %p338 = scmp.ne.s32.totalorder %s323, %s337
      %p339 = scmp.eq.s32.totalorder %s46, 0
      %p340 = por %p338, %p339
      %s342 = sadd.s32 %s341, 1
      %p345 = scmp.eq.s32.totalorder %s40, 1
      %p346 = scmp.ne.s32.totalorder %s341, %s343
      %p347 = scmp.eq.s32.totalorder %s40, 0
      %p348 = por %p346, %p347
      %p349 = scmp.ne.s32.totalorder %s341, %s343
      %p350 = scmp.eq.s32.totalorder %s45, 1
      %p351 = por %p349, %p350
      %p352 = scmp.ne.s32.totalorder %s343, %s344
      %p353 = scmp.eq.s32.totalorder %s45, 0
      %p354 = por %p352, %p353
      %p355 = scmp.ne.s32.totalorder %s343, %s344
      %p356 = scmp.eq.s32.totalorder %s46, 1
      %p357 = por %p355, %p356
      %p359 = scmp.ne.s32.totalorder %s344, %s358
      %p360 = scmp.eq.s32.totalorder %s46, 0
      %p361 = por %p359, %p360
      %s363 = sadd.s32 %s362, 1
      %p366 = scmp.eq.s32.totalorder %s40, 1
      %p367 = scmp.ne.s32.totalorder %s362, %s364
      %p368 = scmp.eq.s32.totalorder %s40, 0
      %p369 = por %p367, %p368
      %p370 = scmp.ne.s32.totalorder %s362, %s364
      %p371 = scmp.eq.s32.totalorder %s45, 1
      %p372 = por %p370, %p371
      %p373 = scmp.ne.s32.totalorder %s364, %s365
      %p374 = scmp.eq.s32.totalorder %s45, 0
      %p375 = por %p373, %p374
      %p376 = scmp.ne.s32.totalorder %s364, %s365
      %p377 = scmp.eq.s32.totalorder %s46, 1
      %p378 = por %p376, %p377
      %p380 = scmp.ne.s32.totalorder %s365, %s379
      %p381 = scmp.eq.s32.totalorder %s46, 0
      %p382 = por %p380, %p381
      %s384 = sadd.s32 %s383, 1
      %p387 = scmp.eq.s32.totalorder %s40, 1
      %p388 = scmp.ne.s32.totalorder %s383, %s385
      %p389 = scmp.eq.s32.totalorder %s40, 0
      %p390 = por %p388, %p389
      %p391 = scmp.ne.s32.totalorder %s383, %s385
      %p392 = scmp.eq.s32.totalorder %s45, 1
      %p393 = por %p391, %p392
      %p394 = scmp.ne.s32.totalorder %s385, %s386
      %p395 = scmp.eq.s32.totalorder %s45, 0
      %p396 = por %p394, %p395
      %p397 = scmp.ne.s32.totalorder %s385, %s386
      %p398 = scmp.eq.s32.totalorder %s46, 1
      %p399 = por %p397, %p398
      %p401 = scmp.ne.s32.totalorder %s386, %s400
      %p402 = scmp.eq.s32.totalorder %s46, 0
      %p403 = por %p401, %p402
      %s405 = sadd.s32 %s404, 1
      %p408 = scmp.eq.s32.totalorder %s40, 1
      %p409 = scmp.ne.s32.totalorder %s404, %s406
      %p410 = scmp.eq.s32.totalorder %s40, 0
      %p411 = por %p409, %p410
      %p412 = scmp.ne.s32.totalorder %s404, %s406
      %p413 = scmp.eq.s32.totalorder %s45, 1
      %p414 = por %p412, %p413
      %p415 = scmp.ne.s32.totalorder %s406, %s407
      %p416 = scmp.eq.s32.totalorder %s45, 0
      %p417 = por %p415, %p416
      %p418 = scmp.ne.s32.totalorder %s406, %s407
      %p419 = scmp.eq.s32.totalorder %s46, 1
      %p420 = por %p418, %p419
      %p422 = scmp.ne.s32.totalorder %s407, %s421
      %p423 = scmp.eq.s32.totalorder %s46, 0
      %p424 = por %p422, %p423
      %s426 = sadd.s32 %s425, 1
      %p429 = scmp.eq.s32.totalorder %s40, 1
      %p430 = scmp.ne.s32.totalorder %s425, %s427
      %p431 = scmp.eq.s32.totalorder %s40, 0
      %p432 = por %p430, %p431
      %p433 = scmp.ne.s32.totalorder %s425, %s427
      %p434 = scmp.eq.s32.totalorder %s45, 1
      %p435 = por %p433, %p434
      %p436 = scmp.ne.s32.totalorder %s427, %s428
      %p437 = scmp.eq.s32.totalorder %s45, 0
      %p438 = por %p436, %p437
      %p439 = scmp.ne.s32.totalorder %s427, %s428
      %p440 = scmp.eq.s32.totalorder %s46, 1
      %p441 = por %p439, %p440
      %p443 = scmp.ne.s32.totalorder %s428, %s442
      %p444 = scmp.eq.s32.totalorder %s46, 0
      %p445 = por %p443, %p444
      %s447 = sadd.s32 %s446, 1
      %p450 = scmp.eq.s32.totalorder %s40, 1
      %p451 = scmp.ne.s32.totalorder %s446, %s448
      %p452 = scmp.eq.s32.totalorder %s40, 0
      %p453 = por %p451, %p452
      %p454 = scmp.ne.s32.totalorder %s446, %s448
      %p455 = scmp.eq.s32.totalorder %s45, 1
      %p456 = por %p454, %p455
      %p457 = scmp.ne.s32.totalorder %s448, %s449
      %p458 = scmp.eq.s32.totalorder %s45, 0
      %p459 = por %p457, %p458
      %p460 = scmp.ne.s32.totalorder %s448, %s449
      %p461 = scmp.eq.s32.totalorder %s46, 1
      %p462 = por %p460, %p461
      %p464 = scmp.ne.s32.totalorder %s449, %s463
      %p465 = scmp.eq.s32.totalorder %s46, 0
      %p466 = por %p464, %p465
      %s468 = sadd.s32 %s467, 1
      %p471 = scmp.eq.s32.totalorder %s40, 1
      %p472 = scmp.ne.s32.totalorder %s467, %s469
      %p473 = scmp.eq.s32.totalorder %s40, 0
      %p474 = por %p472, %p473
      %p475 = scmp.ne.s32.totalorder %s467, %s469
      %p476 = scmp.eq.s32.totalorder %s45, 1
      %p477 = por %p475, %p476
      %p478 = scmp.ne.s32.totalorder %s469, %s470
      %p479 = scmp.eq.s32.totalorder %s45, 0
      %p480 = por %p478, %p479
      %p481 = scmp.ne.s32.totalorder %s469, %s470
      %p482 = scmp.eq.s32.totalorder %s46, 1
      %p483 = por %p481, %p482
      %p485 = scmp.ne.s32.totalorder %s470, %s484
      %p486 = scmp.eq.s32.totalorder %s46, 0
      %p487 = por %p485, %p486
      %s489 = sadd.s32 %s488, 1
      %p492 = scmp.eq.s32.totalorder %s40, 1
      %p493 = scmp.ne.s32.totalorder %s488, %s490
      %p494 = scmp.eq.s32.totalorder %s40, 0
      %p495 = por %p493, %p494
      %p496 = scmp.ne.s32.totalorder %s488, %s490
      %p497 = scmp.eq.s32.totalorder %s45, 1
      %p498 = por %p496, %p497
      %p499 = scmp.ne.s32.totalorder %s490, %s491
      %p500 = scmp.eq.s32.totalorder %s45, 0
      %p501 = por %p499, %p500
      %p502 = scmp.ne.s32.totalorder %s490, %s491
      %p503 = scmp.eq.s32.totalorder %s46, 1
      %p504 = por %p502, %p503
      %p506 = scmp.ne.s32.totalorder %s491, %s505
      %p507 = scmp.eq.s32.totalorder %s46, 0
      %p508 = por %p506, %p507
      %s510 = sadd.s32 %s509, 1
      %p513 = scmp.eq.s32.totalorder %s40, 1
      %p514 = scmp.ne.s32.totalorder %s509, %s511
      %p515 = scmp.eq.s32.totalorder %s40, 0
      %p516 = por %p514, %p515
      %p517 = scmp.ne.s32.totalorder %s509, %s511
      %p518 = scmp.eq.s32.totalorder %s45, 1
      %p519 = por %p517, %p518
      %p520 = scmp.ne.s32.totalorder %s511, %s512
      %p521 = scmp.eq.s32.totalorder %s45, 0
      %p522 = por %p520, %p521
      %p523 = scmp.ne.s32.totalorder %s511, %s512
      %p524 = scmp.eq.s32.totalorder %s46, 1
      %p525 = por %p523, %p524
      %p527 = scmp.ne.s32.totalorder %s512, %s526
      %p528 = scmp.eq.s32.totalorder %s46, 0
      %p529 = por %p527, %p528
      %s531 = sadd.s32 %s530, 1
      %p534 = scmp.eq.s32.totalorder %s40, 1
      %p535 = scmp.ne.s32.totalorder %s530, %s532
      %p536 = scmp.eq.s32.totalorder %s40, 0
      %p537 = por %p535, %p536
      %p538 = scmp.ne.s32.totalorder %s530, %s532
      %p539 = scmp.eq.s32.totalorder %s45, 1
      %p540 = por %p538, %p539
      %p541 = scmp.ne.s32.totalorder %s532, %s533
      %p542 = scmp.eq.s32.totalorder %s45, 0
      %p543 = por %p541, %p542
      %p544 = scmp.ne.s32.totalorder %s532, %s533
      %p545 = scmp.eq.s32.totalorder %s46, 1
      %p546 = por %p544, %p545
      %p548 = scmp.ne.s32.totalorder %s533, %s547
      %p549 = scmp.eq.s32.totalorder %s46, 0
      %p550 = por %p548, %p549
      %s552 = sadd.s32 %s551, 1
      %p555 = scmp.eq.s32.totalorder %s40, 1
      %p556 = scmp.ne.s32.totalorder %s551, %s553
      %p557 = scmp.eq.s32.totalorder %s40, 0
      %p558 = por %p556, %p557
      %p559 = scmp.ne.s32.totalorder %s551, %s553
      %p560 = scmp.eq.s32.totalorder %s45, 1
      %p561 = por %p559, %p560
      %p562 = scmp.ne.s32.totalorder %s553, %s554
      %p563 = scmp.eq.s32.totalorder %s45, 0
      %p564 = por %p562, %p563
      %p565 = scmp.ne.s32.totalorder %s553, %s554
      %p566 = scmp.eq.s32.totalorder %s46, 1
      %p567 = por %p565, %p566
      %p569 = scmp.ne.s32.totalorder %s554, %s568
      %p570 = scmp.eq.s32.totalorder %s46, 0
      %p571 = por %p569, %p570
      %s572 = ssub.s32 %s40, %s47
      %p573 = scmp.eq.s32.totalorder %s572, 0
      %s575 = sadd.s32 %s574, 1
      %s576 = scalar_select %p573, %s574, %s575
      %p579 = pneg %p573
      %p580 = scmp.eq.s32.totalorder %s40, 1
      %p581 = por %p579, %p580
      %p582 = scmp.ne.s32.totalorder %s574, %s577
      %p583 = scmp.eq.s32.totalorder %s40, 0
      %p584 = por %p582, %p583
      %p585 = scmp.ne.s32.totalorder %s574, %s577
      %p586 = scmp.eq.s32.totalorder %s45, 1
      %p587 = por %p585, %p586
      %p588 = scmp.ne.s32.totalorder %s577, %s578
      %p589 = scmp.eq.s32.totalorder %s45, 0
      %p590 = por %p588, %p589
      %p591 = scmp.ne.s32.totalorder %s577, %s578
      %p592 = scmp.eq.s32.totalorder %s46, 1
      %p593 = por %p591, %p592
      %p595 = scmp.ne.s32.totalorder %s578, %s594
      %p596 = scmp.eq.s32.totalorder %s46, 0
      %p597 = por %p595, %p596
      %p598 = scmp.le.s32.totalorder 1, %s40
      %p599 = scmp.lt.s32.totalorder %s40, 3
      %p600 = pnand %p598, %p599
      %p601 = pneg %p600
      // Predicated region
      $region9: #{tpu_custom_call.1} parent=5 // pred_check
        _
      $region10: #{tpu_custom_call.1} parent=5 // pred_check_branch
        %603 = sbr.rel (%p600) target = $region12
      $region11: #{tpu_custom_call.1} parent=5 // pred_region
        %s604 = ssub.s32 %s40, 1
        // Predicated region
        $region13: #{tpu_custom_call.1} parent=11 // pred_check
          %p605 = pneg %p165
        $region14: #{tpu_custom_call.1} parent=11 // pred_check_branch
          %607 = sbr.rel (%p605) target = $region16
        $region15: #{tpu_custom_call.1} parent=11 // pred_region
          %s609 = ssub.s32 256, 256
          %610 = vsyncadd [#allocation6], %s609
          %s611 = sshll.u32 [#allocation5], 4
          %s612 = int_to_ptr.vmem [resolvable:$true] %s611
          %617 = dma.hbm_to_vmem [thread:$0]  %s4, 256, %s612, [#allocation6], 64, 64, 4
        $region16: #{tpu_custom_call.1} parent=11 // pred_fallthru
          _
        // Predicated region
        $region17: #{tpu_custom_call.1} parent=11 // pred_check
          %p618 = pneg %p186
        $region18: #{tpu_custom_call.1} parent=11 // pred_check_branch
          %620 = sbr.rel (%p618) target = $region20
        $region19: #{tpu_custom_call.1} parent=11 // pred_region
          _
        $region20: #{tpu_custom_call.1} parent=11 // pred_fallthru
          _
        // Predicated region
        $region21: #{tpu_custom_call.1} parent=11 // pred_check
          %p621 = pneg %p207
        $region22: #{tpu_custom_call.1} parent=11 // pred_check_branch
          %623 = sbr.rel (%p621) target = $region24
        $region23: #{tpu_custom_call.1} parent=11 // pred_region
          %s625 = ssub.s32 256, 256
          %626 = vsyncadd [#allocation6], %s625
          %s627 = sshll.u32 [#allocation7], 4
          %s628 = int_to_ptr.vmem [resolvable:$true] %s627
          %633 = dma.hbm_to_vmem [thread:$0]  %s6, 256, %s628, [#allocation6], 64, 64, 4
        $region24: #{tpu_custom_call.1} parent=11 // pred_fallthru
          _
        // Predicated region
        $region25: #{tpu_custom_call.1} parent=11 // pred_check
          %p634 = pneg %p228
        $region26: #{tpu_custom_call.1} parent=11 // pred_check_branch
          %636 = sbr.rel (%p634) target = $region28
        $region27: #{tpu_custom_call.1} parent=11 // pred_region
          %s638 = ssub.s32 16, 16
          %639 = vsyncadd [#allocation9], %s638
          %s641 = sshll.u32 [#allocation8], 4
          %s642 = int_to_ptr.vmem [resolvable:$true] %s641
          %644 = dma.hbm_to_vmem [thread:$0]  %s7, 16, %s642, [#allocation9]
        $region28: #{tpu_custom_call.1} parent=11 // pred_fallthru
          _
        // Predicated region
        $region29: #{tpu_custom_call.1} parent=11 // pred_check
          %p645 = pneg %p249
        $region30: #{tpu_custom_call.1} parent=11 // pred_check_branch
          %647 = sbr.rel (%p645) target = $region32
        $region31: #{tpu_custom_call.1} parent=11 // pred_region
          %s649 = ssub.s32 256, 256
          %650 = vsyncadd [#allocation9], %s649
          %s651 = sshll.u32 [#allocation10], 4
          %s652 = int_to_ptr.vmem [resolvable:$true] %s651
          %657 = dma.hbm_to_vmem [thread:$0]  %s8, 256, %s652, [#allocation9], 64, 64, 4
        $region32: #{tpu_custom_call.1} parent=11 // pred_fallthru
          _
        // Predicated region
        $region33: #{tpu_custom_call.1} parent=11 // pred_check
          %p658 = pneg %p270
        $region34: #{tpu_custom_call.1} parent=11 // pred_check_branch
          %660 = sbr.rel (%p658) target = $region36
        $region35: #{tpu_custom_call.1} parent=11 // pred_region
          %s662 = ssub.s32 16, 16
          %663 = vsyncadd [#allocation12], %s662
          %s665 = sshll.u32 [#allocation11], 4
          %s666 = int_to_ptr.vmem [resolvable:$true] %s665
          %668 = dma.hbm_to_vmem [thread:$0]  %s9, 16, %s666, [#allocation12]
        $region36: #{tpu_custom_call.1} parent=11 // pred_fallthru
          _
        // Predicated region
        $region37: #{tpu_custom_call.1} parent=11 // pred_check
          %p669 = pneg %p291
        $region38: #{tpu_custom_call.1} parent=11 // pred_check_branch
          %671 = sbr.rel (%p669) target = $region40
        $region39: #{tpu_custom_call.1} parent=11 // pred_region
          _
        $region40: #{tpu_custom_call.1} parent=11 // pred_fallthru
          _
        // Predicated region
        $region41: #{tpu_custom_call.1} parent=11 // pred_check
          %p672 = pneg %p312
        $region42: #{tpu_custom_call.1} parent=11 // pred_check_branch
          %674 = sbr.rel (%p672) target = $region44
        $region43: #{tpu_custom_call.1} parent=11 // pred_region
          %s676 = ssub.s32 16, 16
          %677 = vsyncadd [#allocation12], %s676
          %s679 = sshll.u32 [#allocation13], 4
          %s680 = int_to_ptr.vmem [resolvable:$true] %s679
          %682 = dma.hbm_to_vmem [thread:$0]  %s11, 16, %s680, [#allocation12]
        $region44: #{tpu_custom_call.1} parent=11 // pred_fallthru
          _
        // Predicated region
        $region45: #{tpu_custom_call.1} parent=11 // pred_check
          %p683 = pneg %p333
        $region46: #{tpu_custom_call.1} parent=11 // pred_check_branch
          %685 = sbr.rel (%p683) target = $region48
        $region47: #{tpu_custom_call.1} parent=11 // pred_region
          %s687 = ssub.s32 256, 256
          %688 = vsyncadd [#allocation15], %s687
          %s689 = sshll.u32 [#allocation14], 4
          %s690 = int_to_ptr.vmem [resolvable:$true] %s689
          %695 = dma.hbm_to_vmem [thread:$0]  %s12, 256, %s690, [#allocation15], 64, 64, 4
        $region48: #{tpu_custom_call.1} parent=11 // pred_fallthru
          _
        // Predicated region
        $region49: #{tpu_custom_call.1} parent=11 // pred_check
          %p696 = pneg %p354
        $region50: #{tpu_custom_call.1} parent=11 // pred_check_branch
          %698 = sbr.rel (%p696) target = $region52
        $region51: #{tpu_custom_call.1} parent=11 // pred_region
          %s700 = ssub.s32 16, 16
          %701 = vsyncadd [#allocation15], %s700
          %s703 = sshll.u32 [#allocation16], 4
          %s704 = int_to_ptr.vmem [resolvable:$true] %s703
          %706 = dma.hbm_to_vmem [thread:$0]  %s13, 16, %s704, [#allocation15]
        $region52: #{tpu_custom_call.1} parent=11 // pred_fallthru
          _
        // Predicated region
        $region53: #{tpu_custom_call.1} parent=11 // pred_check
          %p707 = pneg %p375
        $region54: #{tpu_custom_call.1} parent=11 // pred_check_branch
          %709 = sbr.rel (%p707) target = $region56
        $region55: #{tpu_custom_call.1} parent=11 // pred_region
          _
        $region56: #{tpu_custom_call.1} parent=11 // pred_fallthru
          _
        // Predicated region
        $region57: #{tpu_custom_call.1} parent=11 // pred_check
          %p710 = pneg %p396
        $region58: #{tpu_custom_call.1} parent=11 // pred_check_branch
          %712 = sbr.rel (%p710) target = $region60
        $region59: #{tpu_custom_call.1} parent=11 // pred_region
          _
        $region60: #{tpu_custom_call.1} parent=11 // pred_fallthru
          _
        // Predicated region
        $region61: #{tpu_custom_call.1} parent=11 // pred_check
          %p713 = pneg %p417
        $region62: #{tpu_custom_call.1} parent=11 // pred_check_branch
          %715 = sbr.rel (%p713) target = $region64
        $region63: #{tpu_custom_call.1} parent=11 // pred_region
          _
        $region64: #{tpu_custom_call.1} parent=11 // pred_fallthru
          _
        // Predicated region
        $region65: #{tpu_custom_call.1} parent=11 // pred_check
          %p716 = pneg %p438
        $region66: #{tpu_custom_call.1} parent=11 // pred_check_branch
          %718 = sbr.rel (%p716) target = $region68
        $region67: #{tpu_custom_call.1} parent=11 // pred_region
          _
        $region68: #{tpu_custom_call.1} parent=11 // pred_fallthru
          _
        // Predicated region
        $region69: #{tpu_custom_call.1} parent=11 // pred_check
          %p719 = pneg %p459
        $region70: #{tpu_custom_call.1} parent=11 // pred_check_branch
          %721 = sbr.rel (%p719) target = $region72
        $region71: #{tpu_custom_call.1} parent=11 // pred_region
          _
        $region72: #{tpu_custom_call.1} parent=11 // pred_fallthru
          _
        // Predicated region
        $region73: #{tpu_custom_call.1} parent=11 // pred_check
          %p722 = pneg %p480
        $region74: #{tpu_custom_call.1} parent=11 // pred_check_branch
          %724 = sbr.rel (%p722) target = $region76
        $region75: #{tpu_custom_call.1} parent=11 // pred_region
          _
        $region76: #{tpu_custom_call.1} parent=11 // pred_fallthru
          _
        // Predicated region
        $region77: #{tpu_custom_call.1} parent=11 // pred_check
          %p725 = pneg %p501
        $region78: #{tpu_custom_call.1} parent=11 // pred_check_branch
          %727 = sbr.rel (%p725) target = $region80
        $region79: #{tpu_custom_call.1} parent=11 // pred_region
          _
        $region80: #{tpu_custom_call.1} parent=11 // pred_fallthru
          _
        // Predicated region
        $region81: #{tpu_custom_call.1} parent=11 // pred_check
          %p728 = pneg %p522
        $region82: #{tpu_custom_call.1} parent=11 // pred_check_branch
          %730 = sbr.rel (%p728) target = $region84
        $region83: #{tpu_custom_call.1} parent=11 // pred_region
          _
        $region84: #{tpu_custom_call.1} parent=11 // pred_fallthru
          _
        // Predicated region
        $region85: #{tpu_custom_call.1} parent=11 // pred_check
          %p731 = pneg %p543
        $region86: #{tpu_custom_call.1} parent=11 // pred_check_branch
          %733 = sbr.rel (%p731) target = $region88
        $region87: #{tpu_custom_call.1} parent=11 // pred_region
          _
        $region88: #{tpu_custom_call.1} parent=11 // pred_fallthru
          _
        // Predicated region
        $region89: #{tpu_custom_call.1} parent=11 // pred_check
          %p734 = pneg %p564
        $region90: #{tpu_custom_call.1} parent=11 // pred_check_branch
          %736 = sbr.rel (%p734) target = $region92
        $region91: #{tpu_custom_call.1} parent=11 // pred_region
          _
        $region92: #{tpu_custom_call.1} parent=11 // pred_fallthru
          _
      $region12: #{tpu_custom_call.1} parent=5 // pred_fallthru
        _
      %p737 = scmp.lt.s32.totalorder %s40, 2
      // Predicated region
      $region93: #{tpu_custom_call.1} parent=5 // pred_check
        %p738 = pneg %p737
      $region94: #{tpu_custom_call.1} parent=5 // pred_check_branch
        %740 = sbr.rel (%p738) target = $region96
      $region95: #{tpu_custom_call.1} parent=5 // pred_region
        // Predicated region
        $region97: #{tpu_custom_call.1} parent=95 // pred_check
          %p741 = pneg %p60
        $region98: #{tpu_custom_call.1} parent=95 // pred_check_branch
          %743 = sbr.rel (%p741) target = $region100
        $region99: #{tpu_custom_call.1} parent=95 // pred_region
          %p744 = scmp.lt.s32.totalorder %s40, 1
          %s745 = scalar_select %p744, %s40, 1
          %s746 = smul.addr %s745, 8
          %s747 = scalar_lea.vmem %s0, %s746
        $region100: #{tpu_custom_call.1} parent=95 // pred_fallthru
          _
        // Predicated region
        $region101: #{tpu_custom_call.1} parent=95 // pred_check
          %p748 = pneg %p86
        $region102: #{tpu_custom_call.1} parent=95 // pred_check_branch
          %750 = sbr.rel (%p748) target = $region104
        $region103: #{tpu_custom_call.1} parent=95 // pred_region
          %p751 = scmp.lt.s32.totalorder %s40, 1
          %s752 = scalar_select %p751, %s40, 1
          %s753 = smul.addr %s752, 8
          %s754 = scalar_lea.vmem %s1, %s753
        $region104: #{tpu_custom_call.1} parent=95 // pred_fallthru
          _
        // Predicated region
        $region105: #{tpu_custom_call.1} parent=95 // pred_check
          %p755 = pneg %p112
        $region106: #{tpu_custom_call.1} parent=95 // pred_check_branch
          %757 = sbr.rel (%p755) target = $region108
        $region107: #{tpu_custom_call.1} parent=95 // pred_region
          %p758 = scmp.lt.s32.totalorder %s40, 1
          %s759 = scalar_select %p758, %s40, 1
          %s760 = smul.addr %s759, 8
          %s761 = scalar_lea.vmem %s2, %s760
        $region108: #{tpu_custom_call.1} parent=95 // pred_fallthru
          _
        // Predicated region
        $region109: #{tpu_custom_call.1} parent=95 // pred_check
          %p762 = pneg %p138
        $region110: #{tpu_custom_call.1} parent=95 // pred_check_branch
          %764 = sbr.rel (%p762) target = $region112
        $region111: #{tpu_custom_call.1} parent=95 // pred_region
          %s765 = sand.u32 %s128, 1
          %s766 = scalar_lea.sflag [#allocation3], %s765
          %s767 = sand.u32 %s128, 1
          %s768 = smul.addr %s767, 8
          %s769 = scalar_lea.vmem [#allocation2], %s768
          %s771 = ssub.s32 128, 128
          %772 = vsyncadd %s766, %s771
          %s773 = smul.addr %s40, 128
          %s774 = scalar_lea.hbm %s3, %s773
          %s776 = sshll.u32 %s769, 4
          %s777 = int_to_ptr.vmem [resolvable:$true] %s776
          %779 = dma.hbm_to_vmem [thread:$0]  %s774, 128, %s777, %s766
        $region112: #{tpu_custom_call.1} parent=95 // pred_fallthru
          _
      $region96: #{tpu_custom_call.1} parent=5 // pred_fallthru
        _
      %p780 = scmp.le.s32.totalorder 1, %s40
      %p781 = scmp.lt.s32.totalorder %s40, 3
      %p782 = pnand %p780, %p781
      %p783 = pneg %p782
      // Predicated region
      $region113: #{tpu_custom_call.1} parent=5 // pred_check
        _
      $region114: #{tpu_custom_call.1} parent=5 // pred_check_branch
        %785 = sbr.rel (%p782) target = $region116
      $region115: #{tpu_custom_call.1} parent=5 // pred_region
        %s786 = ssub.s32 %s40, 1
        %s787 = sand.u32 %s131, 1
        %s788 = scalar_lea.sflag [#allocation3], %s787
        %s789 = sand.u32 %s131, 1
        %s790 = smul.addr %s789, 8
        %s791 = scalar_lea.vmem [#allocation2], %s790
        // Predicated region
        $region117: #{tpu_custom_call.1} parent=115 // pred_check
          %p792 = pneg %p144
        $region118: #{tpu_custom_call.1} parent=115 // pred_check_branch
          %794 = sbr.rel (%p792) target = $region120
        $region119: #{tpu_custom_call.1} parent=115 // pred_region
          %795 = dma.done %s788, 128
        $region120: #{tpu_custom_call.1} parent=115 // pred_fallthru
          _
        // Predicated region
        $region121: #{tpu_custom_call.1} parent=115 // pred_check
          %p796 = pneg %p165
        $region122: #{tpu_custom_call.1} parent=115 // pred_check_branch
          %798 = sbr.rel (%p796) target = $region124
        $region123: #{tpu_custom_call.1} parent=115 // pred_region
          %799 = dma.done [#allocation6], 256
        $region124: #{tpu_custom_call.1} parent=115 // pred_fallthru
          _
        // Predicated region
        $region125: #{tpu_custom_call.1} parent=115 // pred_check
          %p800 = pneg %p207
        $region126: #{tpu_custom_call.1} parent=115 // pred_check_branch
          %802 = sbr.rel (%p800) target = $region128
        $region127: #{tpu_custom_call.1} parent=115 // pred_region
          %803 = dma.done [#allocation6], 256
        $region128: #{tpu_custom_call.1} parent=115 // pred_fallthru
          _
        // Predicated region
        $region129: #{tpu_custom_call.1} parent=115 // pred_check
          %p804 = pneg %p228
        $region130: #{tpu_custom_call.1} parent=115 // pred_check_branch
          %806 = sbr.rel (%p804) target = $region132
        $region131: #{tpu_custom_call.1} parent=115 // pred_region
          %807 = dma.done [#allocation9], 16
        $region132: #{tpu_custom_call.1} parent=115 // pred_fallthru
          _
        // Predicated region
        $region133: #{tpu_custom_call.1} parent=115 // pred_check
          %p808 = pneg %p249
        $region134: #{tpu_custom_call.1} parent=115 // pred_check_branch
          %810 = sbr.rel (%p808) target = $region136
        $region135: #{tpu_custom_call.1} parent=115 // pred_region
          %811 = dma.done [#allocation9], 256
        $region136: #{tpu_custom_call.1} parent=115 // pred_fallthru
          _
        // Predicated region
        $region137: #{tpu_custom_call.1} parent=115 // pred_check
          %p812 = pneg %p270
        $region138: #{tpu_custom_call.1} parent=115 // pred_check_branch
          %814 = sbr.rel (%p812) target = $region140
        $region139: #{tpu_custom_call.1} parent=115 // pred_region
          %815 = dma.done [#allocation12], 16
        $region140: #{tpu_custom_call.1} parent=115 // pred_fallthru
          _
        // Predicated region
        $region141: #{tpu_custom_call.1} parent=115 // pred_check
          %p816 = pneg %p312
        $region142: #{tpu_custom_call.1} parent=115 // pred_check_branch
          %818 = sbr.rel (%p816) target = $region144
        $region143: #{tpu_custom_call.1} parent=115 // pred_region
          %819 = dma.done [#allocation12], 16
        $region144: #{tpu_custom_call.1} parent=115 // pred_fallthru
          _
        // Predicated region
        $region145: #{tpu_custom_call.1} parent=115 // pred_check
          %p820 = pneg %p333
        $region146: #{tpu_custom_call.1} parent=115 // pred_check_branch
          %822 = sbr.rel (%p820) target = $region148
        $region147: #{tpu_custom_call.1} parent=115 // pred_region
          %823 = dma.done [#allocation15], 256
        $region148: #{tpu_custom_call.1} parent=115 // pred_fallthru
          _
        // Predicated region
        $region149: #{tpu_custom_call.1} parent=115 // pred_check
          %p824 = pneg %p354
        $region150: #{tpu_custom_call.1} parent=115 // pred_check_branch
          %826 = sbr.rel (%p824) target = $region152
        $region151: #{tpu_custom_call.1} parent=115 // pred_region
          %827 = dma.done [#allocation15], 16
        $region152: #{tpu_custom_call.1} parent=115 // pred_fallthru
          _
        %p828 = scmp.lt.s32.totalorder %s45, 1
        %s829 = scalar_select %p828, %s45, 1
        %s830 = smul.addr %s829, 8
        %s831 = scalar_lea.vmem %s0, %s830
        %p832 = pneg %p66
        %p833 = pneg %p63
        %p834 = scmp.lt.s32.totalorder %s45, 1
        %s835 = scalar_select %p834, %s45, 1
        %s836 = smul.addr %s835, 8
        %s837 = scalar_lea.vmem %s1, %s836
        %p838 = pneg %p92
        %p839 = pneg %p89
        %p840 = scmp.lt.s32.totalorder %s45, 1
        %s841 = scalar_select %p840, %s45, 1
        %s842 = smul.addr %s841, 8
        %s843 = scalar_lea.vmem %s2, %s842
        %p844 = pneg %p118
        %p845 = pneg %p115
        %s846 = sand.u32 %s131, 1
        %s847 = scalar_lea.sflag [#allocation3], %s846
        %s848 = sand.u32 %s131, 1
        %s849 = smul.addr %s848, 8
        %s850 = scalar_lea.vmem [#allocation2], %s849
        %p851 = pneg %p144
        %p852 = pneg %p141
        %p853 = pneg %p165
        %p854 = pneg %p162
        %p855 = pneg %p186
        %p856 = pneg %p183
        %p857 = pneg %p207
        %p858 = pneg %p204
        %p859 = pneg %p228
        %p860 = pneg %p225
        %p861 = pneg %p249
        %p862 = pneg %p246
        %p863 = pneg %p270
        %p864 = pneg %p267
        %p865 = pneg %p291
        %p866 = pneg %p288
        %p867 = pneg %p312
        %p868 = pneg %p309
        %p869 = pneg %p333
        %p870 = pneg %p330
        %p871 = pneg %p354
        %p872 = pneg %p351
        %p873 = pneg %p375
        %p874 = pneg %p372
        %p875 = pneg %p396
        %p876 = pneg %p393
        %p877 = pneg %p417
        %p878 = pneg %p414
        %p879 = pneg %p438
        %p880 = pneg %p435
        %p881 = pneg %p459
        %p882 = pneg %p456
        %p883 = pneg %p480
        %p884 = pneg %p477
        %p885 = pneg %p501
        %p886 = pneg %p498
        %p887 = pneg %p522
        %p888 = pneg %p519
        %p889 = pneg %p543
        %p890 = pneg %p540
        %p891 = pneg %p564
        %p892 = pneg %p561
        %p893 = pneg %p590
        %p894 = pneg %p587
        %s895 = sand.u32 %s577, 1
        %s896 = scalar_lea.sflag [#allocation4], %s895
        %s897 = sand.u32 %s577, 1
        %s898 = smul.addr %s897, 8
        %s899 = scalar_lea.vmem [#allocation17], %s898
        %p900 = scmp.lt.s32.totalorder %s45, 1
        %s901 = scalar_select %p900, %s45, 1
        %s902 = smul.addr %s901, 8
        %s903 = scalar_lea.vmem %s0, %s902
        %p904 = scmp.lt.s32.totalorder %s45, 1
        %s905 = scalar_select %p904, %s45, 1
        %s906 = smul.addr %s905, 8
        %s907 = scalar_lea.vmem %s1, %s906
        %p908 = scmp.lt.s32.totalorder %s45, 1
        %s909 = scalar_select %p908, %s45, 1
        %s910 = smul.addr %s909, 8
        %s911 = scalar_lea.vmem %s2, %s910
        %v913 = vld [vmem:[%s903] sm:$0xff]
        %v914 = vld [vmem:[%s907] sm:$0xff]
        %v915 = vld [vmem:[%s911] sm:$0xff]
        %v916 = vld [vmem:[%s791] sm:$0xff]
        %v917 = vld [vmem:[#allocation5] sm:$0xf]
        %v918 = vld [vmem:[#allocation5 + $0x4] sm:$0xf]
        %v919 = vld [vmem:[#allocation5 + $0x8] sm:$0xf]
        %v920 = vld [vmem:[#allocation5 + $0xc] sm:$0xf]
        %v921 = vld [vmem:[%s5] sm:$0x1]
        %v922 = vpack.c.bf16 %v913, %v913
        %v924 = vlaneseq
        %v925 = vshrl.u32 %v924, 7
        %v926 = vsub.s32 0, %v925
        %v927 = vrot.slane %v921, %v926
        %v933 = vunpack.c.l.b16 %v917
        %v934 = vunpack.c.l.b16 %v918
        %v935 = vunpack.c.l.b16 %v919
        %v936 = vunpack.c.l.b16 %v920
        %v937 = vpack.c.b16 %v934, %v933
        %v938 = vpack.c.b16 %v936, %v935
        %vm941 = vcmask 261120
        %v943 = vsel %vm941, %v922, 0
        %945 = vmatprep.subr.bf16.mxu0 0
        %946 = vmatpush1.bf16.msra.mxu0 %v937
        %947 = vmatprep.subr.bf16.mxu0 0
        %948 = vmatpush1.bf16.msra.mxu0 %v938
        %949 = vmatprep.subr.bf16.mxu0 0
        %950 = vmatpush1.bf16.msra.mxu0 0
        %951 = vmatprep.subr.bf16.mxu0 0
        %952 = vmatpush1.bf16.msra.mxu0 0
        %953 = vmatprep.subr.bf16.mxu0 0
        %954 = vmatpush1.bf16.msra.mxu0 0
        %955 = vmatprep.subr.bf16.mxu0 0
        %956 = vmatpush1.bf16.msra.mxu0 0
        %957 = vmatprep.subr.bf16.mxu0 0
        %958 = vmatpush1.bf16.msra.mxu0 0
        %959 = vmatprep.subr.bf16.mxu0 0
        %960 = vmatpush1.bf16.msra.mxu0 0
        %961 = vmatprep.subr.bf16.mxu0 0
        %962 = vmatpush1.bf16.msra.mxu0 0
        %963 = vmatprep.subr.bf16.mxu0 0
        %964 = vmatpush1.bf16.msra.mxu0 0
        %965 = vmatprep.subr.bf16.mxu0 0
        %966 = vmatpush1.bf16.msra.mxu0 0
        %967 = vmatprep.subr.bf16.mxu0 0
        %968 = vmatpush1.bf16.msra.mxu0 0
        %969 = vmatprep.subr.bf16.mxu0 0
        %970 = vmatpush1.bf16.msra.mxu0 0
        %971 = vmatprep.subr.bf16.mxu0 0
        %972 = vmatpush1.bf16.msra.mxu0 0
        %973 = vmatprep.subr.bf16.mxu0 0
        %974 = vmatpush1.bf16.msra.mxu0 0
        %975 = vmatprep.subr.bf16.mxu0 0
        %976 = vmatpush1.bf16.msra.mxu0 0
        %977 = vmatprep.mubr.bf16.mxu0 0
        %978 = vmatmul.mubr.bf16.gmra.mrb[0].mxu0 %v943
        %v979 = vpop.f32.mrb[0].mxu0
        %v980 = vadd.f32 %v927, %v979
        %v981 = vpop.f32.mrb[0].mxu0
        %v982 = vpop.f32.mrb[0].mxu0
        %v983 = vpop.f32.mrb[0].mxu0
        %984 = vdwg.mxu0
        %v985 = vpack.c.bf16 %v980, %v980
        %v986 = vld [vmem:[#allocation7] sm:$0xf]
        %v987 = vld [vmem:[#allocation7 + $0x4] sm:$0xf]
        %v988 = vld [vmem:[#allocation7 + $0x8] sm:$0xf]
        %v989 = vld [vmem:[#allocation7 + $0xc] sm:$0xf]
        %v990 = vld [vmem:[#allocation8] sm:$0x1]
        %992 = vrot.lane.b32.xlu0 %v985, 120
        %v993 = vpop.permute.xlu0 %992
        %994 = vrot.lane.b32.xlu0 %v985, 112
        %v995 = vpop.permute.xlu0 %994
        %996 = vrot.lane.b32.xlu0 %v985, 104
        %v997 = vpop.permute.xlu0 %996
        %998 = vrot.lane.b32.xlu0 %v985, 96
        %v999 = vpop.permute.xlu0 %998
        %vm1000 = vcmask 64512
        %v1002 = vsel %vm1000, %v985, 0
        %v1005 = vsel %vm1000, %v999, 0
        %1007 = vmatprep.subr.bf16.mxu0 0
        %1008 = vmatpush1.bf16.xpose.msra.mxu0 %v1005
        %1009 = vmatprep.subr.bf16.mxu0 0
        %1010 = vmatpush1.bf16.xpose.msra.mxu0 0
        %1011 = vmatprep.subr.bf16.mxu0 0
        %1012 = vmatpush1.bf16.xpose.msra.mxu0 0
        %1013 = vmatprep.subr.bf16.mxu0 0
        %1014 = vmatpush1.bf16.xpose.msra.mxu0 0
        %1015 = vmatprep.subr.bf16.mxu0 0
        %1016 = vmatpush1.bf16.xpose.msra.mxu0 0
        %1017 = vmatprep.subr.bf16.mxu0 0
        %1018 = vmatpush1.bf16.xpose.msra.mxu0 0
        %1019 = vmatprep.subr.bf16.mxu0 0
        %1020 = vmatpush1.bf16.xpose.msra.mxu0 0
        %1021 = vmatprep.subr.bf16.mxu0 0
        %1022 = vmatpush1.bf16.xpose.msra.mxu0 0
        %1023 = vmatprep.subr.bf16.mxu0 0
        %1024 = vmatpush1.bf16.xpose.msra.mxu0 0
        %1025 = vmatprep.subr.bf16.mxu0 0
        %1026 = vmatpush1.bf16.xpose.msra.mxu0 0
        %1027 = vmatprep.subr.bf16.mxu0 0
        %1028 = vmatpush1.bf16.xpose.msra.mxu0 0
        %1029 = vmatprep.subr.bf16.mxu0 0
        %1030 = vmatpush1.bf16.xpose.msra.mxu0 0
        %1031 = vmatprep.subr.bf16.mxu0 0
        %1032 = vmatpush1.bf16.xpose.msra.mxu0 0
        %1033 = vmatprep.subr.bf16.mxu0 0
        %1034 = vmatpush1.bf16.xpose.msra.mxu0 0
        %1035 = vmatprep.subr.bf16.mxu0 0
        %1036 = vmatpush1.bf16.xpose.msra.mxu0 0
        %1037 = vmatprep.subr.bf16.mxu0 0
        %1038 = vmatpush1.bf16.xpose.msra.mxu0 0
        %1039 = vmatprep.mubr.bf16.mxu0 0
        %1040 = vmatmul.mubr.bf16.gmra.mrb[0].mxu0 %v1002
        %v1041 = vpop.f32.mrb[0].mxu0
        %v1042 = vadd.f32 0.0, %v1041
        %v1043 = vpop.f32.mrb[0].mxu0
        %v1044 = vpop.f32.mrb[0].mxu0
        %v1045 = vpop.f32.mrb[0].mxu0
        %1046 = vdwg.mxu0
        %1047 = vrot.lane.b32.xlu0 %v993, 96
        %v1048 = vpop.permute.xlu0 %1047
        %v1050 = vsel %vm1000, %v993, 0
        %v1053 = vsel %vm1000, %v1048, 0
        %1055 = vmatprep.subr.bf16.mxu0 0
        %1056 = vmatpush1.bf16.xpose.msra.mxu0 %v1053
        %1057 = vmatprep.subr.bf16.mxu0 0
        %1058 = vmatpush1.bf16.xpose.msra.mxu0 0
        %1059 = vmatprep.subr.bf16.mxu0 0
        %1060 = vmatpush1.bf16.xpose.msra.mxu0 0
        %1061 = vmatprep.subr.bf16.mxu0 0
        %1062 = vmatpush1.bf16.xpose.msra.mxu0 0
        %1063 = vmatprep.subr.bf16.mxu0 0
        %1064 = vmatpush1.bf16.xpose.msra.mxu0 0
        %1065 = vmatprep.subr.bf16.mxu0 0
        %1066 = vmatpush1.bf16.xpose.msra.mxu0 0
        %1067 = vmatprep.subr.bf16.mxu0 0
        %1068 = vmatpush1.bf16.xpose.msra.mxu0 0
        %1069 = vmatprep.subr.bf16.mxu0 0
        %1070 = vmatpush1.bf16.xpose.msra.mxu0 0
        %1071 = vmatprep.subr.bf16.mxu0 0
        %1072 = vmatpush1.bf16.xpose.msra.mxu0 0
        %1073 = vmatprep.subr.bf16.mxu0 0
        %1074 = vmatpush1.bf16.xpose.msra.mxu0 0
        %1075 = vmatprep.subr.bf16.mxu0 0
        %1076 = vmatpush1.bf16.xpose.msra.mxu0 0
        %1077 = vmatprep.subr.bf16.mxu0 0
        %1078 = vmatpush1.bf16.xpose.msra.mxu0 0
        %1079 = vmatprep.subr.bf16.mxu0 0
        %1080 = vmatpush1.bf16.xpose.msra.mxu0 0
        %1081 = vmatprep.subr.bf16.mxu0 0
        %1082 = vmatpush1.bf16.xpose.msra.mxu0 0
        %1083 = vmatprep.subr.bf16.mxu0 0
        %1084 = vmatpush1.bf16.xpose.msra.mxu0 0
        %1085 = vmatprep.subr.bf16.mxu0 0
        %1086 = vmatpush1.bf16.xpose.msra.mxu0 0
        %1087 = vmatprep.mubr.bf16.mxu0 0
        %1088 = vmatmul.mubr.bf16.gmra.mrb[0].mxu0 %v1050
        %v1089 = vpop.f32.mrb[0].mxu0
        %v1090 = vadd.f32 0.0, %v1089
        %v1091 = vpop.f32.mrb[0].mxu0
        %v1092 = vpop.f32.mrb[0].mxu0
        %v1093 = vpop.f32.mrb[0].mxu0
        %1094 = vdwg.mxu0
        %1095 = vrot.lane.b32.xlu0 %v995, 96
        %v1096 = vpop.permute.xlu0 %1095
        %v1098 = vsel %vm1000, %v995, 0
        %v1101 = vsel %vm1000, %v1096, 0
        %1103 = vmatprep.subr.bf16.mxu0 0
        %1104 = vmatpush1.bf16.xpose.msra.mxu0 %v1101
        %1105 = vmatprep.subr.bf16.mxu0 0
        %1106 = vmatpush1.bf16.xpose.msra.mxu0 0
        %1107 = vmatprep.subr.bf16.mxu0 0
        %1108 = vmatpush1.bf16.xpose.msra.mxu0 0
        %1109 = vmatprep.subr.bf16.mxu0 0
        %1110 = vmatpush1.bf16.xpose.msra.mxu0 0
        %1111 = vmatprep.subr.bf16.mxu0 0
        %1112 = vmatpush1.bf16.xpose.msra.mxu0 0
        %1113 = vmatprep.subr.bf16.mxu0 0
        %1114 = vmatpush1.bf16.xpose.msra.mxu0 0
        %1115 = vmatprep.subr.bf16.mxu0 0
        %1116 = vmatpush1.bf16.xpose.msra.mxu0 0
        %1117 = vmatprep.subr.bf16.mxu0 0
        %1118 = vmatpush1.bf16.xpose.msra.mxu0 0
        %1119 = vmatprep.subr.bf16.mxu0 0
        %1120 = vmatpush1.bf16.xpose.msra.mxu0 0
        %1121 = vmatprep.subr.bf16.mxu0 0
        %1122 = vmatpush1.bf16.xpose.msra.mxu0 0
        %1123 = vmatprep.subr.bf16.mxu0 0
        %1124 = vmatpush1.bf16.xpose.msra.mxu0 0
        %1125 = vmatprep.subr.bf16.mxu0 0
        %1126 = vmatpush1.bf16.xpose.msra.mxu0 0
        %1127 = vmatprep.subr.bf16.mxu0 0
        %1128 = vmatpush1.bf16.xpose.msra.mxu0 0
        %1129 = vmatprep.subr.bf16.mxu0 0
        %1130 = vmatpush1.bf16.xpose.msra.mxu0 0
        %1131 = vmatprep.subr.bf16.mxu0 0
        %1132 = vmatpush1.bf16.xpose.msra.mxu0 0
        %1133 = vmatprep.subr.bf16.mxu0 0
        %1134 = vmatpush1.bf16.xpose.msra.mxu0 0
        %1135 = vmatprep.mubr.bf16.mxu0 0
        %1136 = vmatmul.mubr.bf16.gmra.mrb[0].mxu0 %v1098
        %v1137 = vpop.f32.mrb[0].mxu0
        %v1138 = vadd.f32 0.0, %v1137
        %v1139 = vpop.f32.mrb[0].mxu0
        %v1140 = vpop.f32.mrb[0].mxu0
        %v1141 = vpop.f32.mrb[0].mxu0
        %1142 = vdwg.mxu0
        %1143 = vrot.lane.b32.xlu0 %v997, 96
        %v1144 = vpop.permute.xlu0 %1143
        %v1146 = vsel %vm1000, %v997, 0
        %v1149 = vsel %vm1000, %v1144, 0
        %1151 = vmatprep.subr.bf16.mxu0 0
        %1152 = vmatpush1.bf16.xpose.msra.mxu0 %v1149
        %1153 = vmatprep.subr.bf16.mxu0 0
        %1154 = vmatpush1.bf16.xpose.msra.mxu0 0
        %1155 = vmatprep.subr.bf16.mxu0 0
        %1156 = vmatpush1.bf16.xpose.msra.mxu0 0
        %1157 = vmatprep.subr.bf16.mxu0 0
        %1158 = vmatpush1.bf16.xpose.msra.mxu0 0
        %1159 = vmatprep.subr.bf16.mxu0 0
        %1160 = vmatpush1.bf16.xpose.msra.mxu0 0
        %1161 = vmatprep.subr.bf16.mxu0 0
        %1162 = vmatpush1.bf16.xpose.msra.mxu0 0
        %1163 = vmatprep.subr.bf16.mxu0 0
        %1164 = vmatpush1.bf16.xpose.msra.mxu0 0
        %1165 = vmatprep.subr.bf16.mxu0 0
        %1166 = vmatpush1.bf16.xpose.msra.mxu0 0
        %1167 = vmatprep.subr.bf16.mxu0 0
        %1168 = vmatpush1.bf16.xpose.msra.mxu0 0
        %1169 = vmatprep.subr.bf16.mxu0 0
        %1170 = vmatpush1.bf16.xpose.msra.mxu0 0
        %1171 = vmatprep.subr.bf16.mxu0 0
        %1172 = vmatpush1.bf16.xpose.msra.mxu0 0
        %1173 = vmatprep.subr.bf16.mxu0 0
        %1174 = vmatpush1.bf16.xpose.msra.mxu0 0
        %1175 = vmatprep.subr.bf16.mxu0 0
        %1176 = vmatpush1.bf16.xpose.msra.mxu0 0
        %1177 = vmatprep.subr.bf16.mxu0 0
        %1178 = vmatpush1.bf16.xpose.msra.mxu0 0
        %1179 = vmatprep.subr.bf16.mxu0 0
        %1180 = vmatpush1.bf16.xpose.msra.mxu0 0
        %1181 = vmatprep.subr.bf16.mxu0 0
        %1182 = vmatpush1.bf16.xpose.msra.mxu0 0
        %1183 = vmatprep.mubr.bf16.mxu0 0
        %1184 = vmatmul.mubr.bf16.gmra.mrb[0].mxu0 %v1146
        %v1185 = vpop.f32.mrb[0].mxu0
        %v1186 = vadd.f32 0.0, %v1185
        %v1187 = vpop.f32.mrb[0].mxu0
        %v1188 = vpop.f32.mrb[0].mxu0
        %v1189 = vpop.f32.mrb[0].mxu0
        %1190 = vdwg.mxu0
        %v1191 = vadd.f32 %v1042, %v915
        %v1192 = vadd.f32 %v1090, %v915
        %v1193 = vadd.f32 %v1138, %v915
        %v1194 = vadd.f32 %v1186, %v915
        %v1195 = vsel %vm1000, %v1191, -inf
        %1196 = vmax.xlane.f32.xlu0 %v1195
        %v1197 = vpop.xlane.xlu0 %1196
        %v1198 = vsel %vm1000, %v1192, -inf
        %1199 = vmax.xlane.f32.xlu0 %v1198
        %v1200 = vpop.xlane.xlu0 %1199
        %v1201 = vsel %vm1000, %v1193, -inf
        %1202 = vmax.xlane.f32.xlu0 %v1201
        %v1203 = vpop.xlane.xlu0 %1202
        %v1204 = vsel %vm1000, %v1194, -inf
        %1205 = vmax.xlane.f32.xlu0 %v1204
        %v1206 = vpop.xlane.xlu0 %1205
        %v1207 = vsub.f32 %v1191, %v1197
        %v1208 = vsub.f32 %v1192, %v1200
        %v1209 = vsub.f32 %v1193, %v1203
        %v1210 = vsub.f32 %v1194, %v1206
        %v1211 = vmul.f32 %v1207, 1.442695
        %v1212 = vpow.pop %v1211
        %v1213 = vmul.f32 %v1208, 1.442695
        %v1214 = vpow.pop %v1213
        %v1215 = vmul.f32 %v1209, 1.442695
        %v1216 = vpow.pop %v1215
        %v1217 = vmul.f32 %v1210, 1.442695
        %v1218 = vpow.pop %v1217
        %v1219 = vsel %vm1000, %v1212, 0.0
        %1220 = vadd.xlane.f32.xlu0 %v1219
        %v1221 = vpop.xlane.xlu0 %1220
        %v1222 = vsel %vm1000, %v1214, 0.0
        %1223 = vadd.xlane.f32.xlu0 %v1222
        %v1224 = vpop.xlane.xlu0 %1223
        %v1225 = vsel %vm1000, %v1216, 0.0
        %1226 = vadd.xlane.f32.xlu0 %v1225
        %v1227 = vpop.xlane.xlu0 %1226
        %v1228 = vsel %vm1000, %v1218, 0.0
        %1229 = vadd.xlane.f32.xlu0 %v1228
        %v1230 = vpop.xlane.xlu0 %1229
        %v1231 = vrcp.pop %v1221
        %v1232 = vrcp.pop %v1224
        %v1233 = vrcp.pop %v1227
        %v1234 = vrcp.pop %v1230
        %v1235 = vmul.f32 %v1212, %v1231
        %v1236 = vmul.f32 %v1214, %v1232
        %v1237 = vmul.f32 %v1216, %v1233
        %v1238 = vmul.f32 %v1218, %v1234
        %v1239 = vpack.c.bf16 %v1235, %v1235
        %v1240 = vpack.c.bf16 %v1236, %v1236
        %v1241 = vpack.c.bf16 %v1237, %v1237
        %v1242 = vpack.c.bf16 %v1238, %v1238
        %1243 = vrot.lane.b32.xlu0 %v985, 64
        %v1244 = vpop.permute.xlu0 %1243
        %v1246 = vsel %vm1000, %v1239, 0
        %vm1248 = vcmask 1043456
        %v1250 = vsel %vm1248, %v1244, 0
        %1252 = vmatprep.subr.bf16.mxu0 0
        %1253 = vmatpush1.bf16.msra.mxu0 %v1250
        %1254 = vmatprep.subr.bf16.mxu0 0
        %1255 = vmatpush1.bf16.msra.mxu0 0
        %1256 = vmatprep.subr.bf16.mxu0 0
        %1257 = vmatpush1.bf16.msra.mxu0 0
        %1258 = vmatprep.subr.bf16.mxu0 0
        %1259 = vmatpush1.bf16.msra.mxu0 0
        %1260 = vmatprep.subr.bf16.mxu0 0
        %1261 = vmatpush1.bf16.msra.mxu0 0
        %1262 = vmatprep.subr.bf16.mxu0 0
        %1263 = vmatpush1.bf16.msra.mxu0 0
        %1264 = vmatprep.subr.bf16.mxu0 0
        %1265 = vmatpush1.bf16.msra.mxu0 0
        %1266 = vmatprep.subr.bf16.mxu0 0
        %1267 = vmatpush1.bf16.msra.mxu0 0
        %1268 = vmatprep.subr.bf16.mxu0 0
        %1269 = vmatpush1.bf16.msra.mxu0 0
        %1270 = vmatprep.subr.bf16.mxu0 0
        %1271 = vmatpush1.bf16.msra.mxu0 0
        %1272 = vmatprep.subr.bf16.mxu0 0
        %1273 = vmatpush1.bf16.msra.mxu0 0
        %1274 = vmatprep.subr.bf16.mxu0 0
        %1275 = vmatpush1.bf16.msra.mxu0 0
        %1276 = vmatprep.subr.bf16.mxu0 0
        %1277 = vmatpush1.bf16.msra.mxu0 0
        %1278 = vmatprep.subr.bf16.mxu0 0
        %1279 = vmatpush1.bf16.msra.mxu0 0
        %1280 = vmatprep.subr.bf16.mxu0 0
        %1281 = vmatpush1.bf16.msra.mxu0 0
        %1282 = vmatprep.subr.bf16.mxu0 0
        %1283 = vmatpush1.bf16.msra.mxu0 0
        %1284 = vmatprep.mubr.bf16.mxu0 0
        %1285 = vmatmul.mubr.bf16.gmra.mrb[0].mxu0 %v1246
        %v1286 = vpop.f32.mrb[0].mxu0
        %v1287 = vadd.f32 0.0, %v1286
        %v1288 = vpop.f32.mrb[0].mxu0
        %v1289 = vpop.f32.mrb[0].mxu0
        %v1290 = vpop.f32.mrb[0].mxu0
        %1291 = vdwg.mxu0
        %1292 = vrot.lane.b32.xlu0 %v993, 64
        %v1293 = vpop.permute.xlu0 %1292
        %v1295 = vsel %vm1000, %v1240, 0
        %v1298 = vsel %vm1248, %v1293, 0
        %1300 = vmatprep.subr.bf16.mxu0 0
        %1301 = vmatpush1.bf16.msra.mxu0 %v1298
        %1302 = vmatprep.subr.bf16.mxu0 0
        %1303 = vmatpush1.bf16.msra.mxu0 0
        %1304 = vmatprep.subr.bf16.mxu0 0
        %1305 = vmatpush1.bf16.msra.mxu0 0
        %1306 = vmatprep.subr.bf16.mxu0 0
        %1307 = vmatpush1.bf16.msra.mxu0 0
        %1308 = vmatprep.subr.bf16.mxu0 0
        %1309 = vmatpush1.bf16.msra.mxu0 0
        %1310 = vmatprep.subr.bf16.mxu0 0
        %1311 = vmatpush1.bf16.msra.mxu0 0
        %1312 = vmatprep.subr.bf16.mxu0 0
        %1313 = vmatpush1.bf16.msra.mxu0 0
        %1314 = vmatprep.subr.bf16.mxu0 0
        %1315 = vmatpush1.bf16.msra.mxu0 0
        %1316 = vmatprep.subr.bf16.mxu0 0
        %1317 = vmatpush1.bf16.msra.mxu0 0
        %1318 = vmatprep.subr.bf16.mxu0 0
        %1319 = vmatpush1.bf16.msra.mxu0 0
        %1320 = vmatprep.subr.bf16.mxu0 0
        %1321 = vmatpush1.bf16.msra.mxu0 0
        %1322 = vmatprep.subr.bf16.mxu0 0
        %1323 = vmatpush1.bf16.msra.mxu0 0
        %1324 = vmatprep.subr.bf16.mxu0 0
        %1325 = vmatpush1.bf16.msra.mxu0 0
        %1326 = vmatprep.subr.bf16.mxu0 0
        %1327 = vmatpush1.bf16.msra.mxu0 0
        %1328 = vmatprep.subr.bf16.mxu0 0
        %1329 = vmatpush1.bf16.msra.mxu0 0
        %1330 = vmatprep.subr.bf16.mxu0 0
        %1331 = vmatpush1.bf16.msra.mxu0 0
        %1332 = vmatprep.mubr.bf16.mxu0 0
        %1333 = vmatmul.mubr.bf16.gmra.mrb[0].mxu0 %v1295
        %v1334 = vpop.f32.mrb[0].mxu0
        %v1335 = vadd.f32 0.0, %v1334
        %v1336 = vpop.f32.mrb[0].mxu0
        %v1337 = vpop.f32.mrb[0].mxu0
        %v1338 = vpop.f32.mrb[0].mxu0
        %1339 = vdwg.mxu0
        %1340 = vrot.lane.b32.xlu0 %v995, 64
        %v1341 = vpop.permute.xlu0 %1340
        %v1343 = vsel %vm1000, %v1241, 0
        %v1346 = vsel %vm1248, %v1341, 0
        %1348 = vmatprep.subr.bf16.mxu0 0
        %1349 = vmatpush1.bf16.msra.mxu0 %v1346
        %1350 = vmatprep.subr.bf16.mxu0 0
        %1351 = vmatpush1.bf16.msra.mxu0 0
        %1352 = vmatprep.subr.bf16.mxu0 0
        %1353 = vmatpush1.bf16.msra.mxu0 0
        %1354 = vmatprep.subr.bf16.mxu0 0
        %1355 = vmatpush1.bf16.msra.mxu0 0
        %1356 = vmatprep.subr.bf16.mxu0 0
        %1357 = vmatpush1.bf16.msra.mxu0 0
        %1358 = vmatprep.subr.bf16.mxu0 0
        %1359 = vmatpush1.bf16.msra.mxu0 0
        %1360 = vmatprep.subr.bf16.mxu0 0
        %1361 = vmatpush1.bf16.msra.mxu0 0
        %1362 = vmatprep.subr.bf16.mxu0 0
        %1363 = vmatpush1.bf16.msra.mxu0 0
        %1364 = vmatprep.subr.bf16.mxu0 0
        %1365 = vmatpush1.bf16.msra.mxu0 0
        %1366 = vmatprep.subr.bf16.mxu0 0
        %1367 = vmatpush1.bf16.msra.mxu0 0
        %1368 = vmatprep.subr.bf16.mxu0 0
        %1369 = vmatpush1.bf16.msra.mxu0 0
        %1370 = vmatprep.subr.bf16.mxu0 0
        %1371 = vmatpush1.bf16.msra.mxu0 0
        %1372 = vmatprep.subr.bf16.mxu0 0
        %1373 = vmatpush1.bf16.msra.mxu0 0
        %1374 = vmatprep.subr.bf16.mxu0 0
        %1375 = vmatpush1.bf16.msra.mxu0 0
        %1376 = vmatprep.subr.bf16.mxu0 0
        %1377 = vmatpush1.bf16.msra.mxu0 0
        %1378 = vmatprep.subr.bf16.mxu0 0
        %1379 = vmatpush1.bf16.msra.mxu0 0
        %1380 = vmatprep.mubr.bf16.mxu0 0
        %1381 = vmatmul.mubr.bf16.gmra.mrb[0].mxu0 %v1343
        %v1382 = vpop.f32.mrb[0].mxu0
        %v1383 = vadd.f32 0.0, %v1382
        %v1384 = vpop.f32.mrb[0].mxu0
        %v1385 = vpop.f32.mrb[0].mxu0
        %v1386 = vpop.f32.mrb[0].mxu0
        %1387 = vdwg.mxu0
        %1388 = vrot.lane.b32.xlu0 %v997, 64
        %v1389 = vpop.permute.xlu0 %1388
        %v1391 = vsel %vm1000, %v1242, 0
        %v1394 = vsel %vm1248, %v1389, 0
        %1396 = vmatprep.subr.bf16.mxu0 0
        %1397 = vmatpush1.bf16.msra.mxu0 %v1394
        %1398 = vmatprep.subr.bf16.mxu0 0
        %1399 = vmatpush1.bf16.msra.mxu0 0
        %1400 = vmatprep.subr.bf16.mxu0 0
        %1401 = vmatpush1.bf16.msra.mxu0 0
        %1402 = vmatprep.subr.bf16.mxu0 0
        %1403 = vmatpush1.bf16.msra.mxu0 0
        %1404 = vmatprep.subr.bf16.mxu0 0
        %1405 = vmatpush1.bf16.msra.mxu0 0
        %1406 = vmatprep.subr.bf16.mxu0 0
        %1407 = vmatpush1.bf16.msra.mxu0 0
        %1408 = vmatprep.subr.bf16.mxu0 0
        %1409 = vmatpush1.bf16.msra.mxu0 0
        %1410 = vmatprep.subr.bf16.mxu0 0
        %1411 = vmatpush1.bf16.msra.mxu0 0
        %1412 = vmatprep.subr.bf16.mxu0 0
        %1413 = vmatpush1.bf16.msra.mxu0 0
        %1414 = vmatprep.subr.bf16.mxu0 0
        %1415 = vmatpush1.bf16.msra.mxu0 0
        %1416 = vmatprep.subr.bf16.mxu0 0
        %1417 = vmatpush1.bf16.msra.mxu0 0
        %1418 = vmatprep.subr.bf16.mxu0 0
        %1419 = vmatpush1.bf16.msra.mxu0 0
        %1420 = vmatprep.subr.bf16.mxu0 0
        %1421 = vmatpush1.bf16.msra.mxu0 0
        %1422 = vmatprep.subr.bf16.mxu0 0
        %1423 = vmatpush1.bf16.msra.mxu0 0
        %1424 = vmatprep.subr.bf16.mxu0 0
        %1425 = vmatpush1.bf16.msra.mxu0 0
        %1426 = vmatprep.subr.bf16.mxu0 0
        %1427 = vmatpush1.bf16.msra.mxu0 0
        %1428 = vmatprep.mubr.bf16.mxu0 0
        %1429 = vmatmul.mubr.bf16.gmra.mrb[0].mxu0 %v1391
        %v1430 = vpop.f32.mrb[0].mxu0
        %v1431 = vadd.f32 0.0, %v1430
        %v1432 = vpop.f32.mrb[0].mxu0
        %v1433 = vpop.f32.mrb[0].mxu0
        %v1434 = vpop.f32.mrb[0].mxu0
        %1435 = vdwg.mxu0
        %v1436 = vpack.c.bf16 %v1287, %v1287
        %v1437 = vpack.c.bf16 %v1335, %v1335
        %v1438 = vpack.c.bf16 %v1383, %v1383
        %v1439 = vpack.c.bf16 %v1431, %v1431
        %1441 = vrot.lane.b32.xlu0 %v1437, 8
        %v1442 = vpop.permute.xlu0 %1441
        %1444 = vrot.lane.b32.xlu0 %v1438, 16
        %v1445 = vpop.permute.xlu0 %1444
        %1447 = vrot.lane.b32.xlu0 %v1439, 24
        %v1448 = vpop.permute.xlu0 %1447
        %v1451 = vsel %vm1000, %v1436, %v1442
        %vm1452 = vcmask 130048
        %v1454 = vsel %vm1452, %v1451, %v1445
        %vm1455 = vcmask 195584
        %v1457 = vsel %vm1455, %v1454, %v1448
        %v1459 = vlaneseq
        %v1460 = vshrl.u32 %v1459, 7
        %v1461 = vsub.s32 0, %v1460
        %v1462 = vrot.slane %v990, %v1461
        %v1468 = vunpack.c.l.b16 %v986
        %v1469 = vunpack.c.l.b16 %v987
        %v1470 = vunpack.c.l.b16 %v988
        %v1471 = vunpack.c.l.b16 %v989
        %v1472 = vpack.c.b16 %v1469, %v1468
        %v1473 = vpack.c.b16 %v1471, %v1470
        %v1476 = vsel %vm941, %v1457, 0
        %1478 = vmatprep.subr.bf16.mxu0 0
        %1479 = vmatpush1.bf16.msra.mxu0 %v1472
        %1480 = vmatprep.subr.bf16.mxu0 0
        %1481 = vmatpush1.bf16.msra.mxu0 %v1473
        %1482 = vmatprep.subr.bf16.mxu0 0
        %1483 = vmatpush1.bf16.msra.mxu0 0
        %1484 = vmatprep.subr.bf16.mxu0 0
        %1485 = vmatpush1.bf16.msra.mxu0 0
        %1486 = vmatprep.subr.bf16.mxu0 0
        %1487 = vmatpush1.bf16.msra.mxu0 0
        %1488 = vmatprep.subr.bf16.mxu0 0
        %1489 = vmatpush1.bf16.msra.mxu0 0
        %1490 = vmatprep.subr.bf16.mxu0 0
        %1491 = vmatpush1.bf16.msra.mxu0 0
        %1492 = vmatprep.subr.bf16.mxu0 0
        %1493 = vmatpush1.bf16.msra.mxu0 0
        %1494 = vmatprep.subr.bf16.mxu0 0
        %1495 = vmatpush1.bf16.msra.mxu0 0
        %1496 = vmatprep.subr.bf16.mxu0 0
        %1497 = vmatpush1.bf16.msra.mxu0 0
        %1498 = vmatprep.subr.bf16.mxu0 0
        %1499 = vmatpush1.bf16.msra.mxu0 0
        %1500 = vmatprep.subr.bf16.mxu0 0
        %1501 = vmatpush1.bf16.msra.mxu0 0
        %1502 = vmatprep.subr.bf16.mxu0 0
        %1503 = vmatpush1.bf16.msra.mxu0 0
        %1504 = vmatprep.subr.bf16.mxu0 0
        %1505 = vmatpush1.bf16.msra.mxu0 0
        %1506 = vmatprep.subr.bf16.mxu0 0
        %1507 = vmatpush1.bf16.msra.mxu0 0
        %1508 = vmatprep.subr.bf16.mxu0 0
        %1509 = vmatpush1.bf16.msra.mxu0 0
        %1510 = vmatprep.mubr.bf16.mxu0 0
        %1511 = vmatmul.mubr.bf16.gmra.mrb[0].mxu0 %v1476
        %v1512 = vpop.f32.mrb[0].mxu0
        %v1513 = vadd.f32 %v1462, %v1512
        %v1514 = vpop.f32.mrb[0].mxu0
        %v1515 = vpop.f32.mrb[0].mxu0
        %v1516 = vpop.f32.mrb[0].mxu0
        %1517 = vdwg.mxu0
        %v1518 = vadd.f32 %v913, %v1513
        %v1519 = vld [vmem:[%s18] sm:$0x1]
        %v1520 = vld [vmem:[%s19] sm:$0x1]
        %v1521 = vsel %vm941, %v1518, 0.0
        %1522 = vadd.xlane.f32.xlu0 %v1521
        %v1523 = vpop.xlane.xlu0 %1522
        %v1524 = vrcp.pop 32.0
        %v1525 = vmul.f32 %v1523, %v1524
        %v1526 = vsub.f32 %v1518, %v1525
        %v1527 = vmul.f32 %v1526, %v1526
        %v1528 = vsel %vm941, %v1527, 0.0
        %1529 = vadd.xlane.f32.xlu0 %v1528
        %v1530 = vpop.xlane.xlu0 %1529
        %v1531 = vmul.f32 %v1530, %v1524
        %v1532 = vadd.f32 %v1531, 1e-05
        %v1533 = vrsqrt.pop %v1532
        %v1534 = vmul.f32 %v1526, %v1533
        %v1536 = vlaneseq
        %v1537 = vshrl.u32 %v1536, 7
        %v1538 = vsub.s32 0, %v1537
        %v1539 = vrot.slane %v1519, %v1538
        %v1541 = vmul.f32 %v1534, %v1539
        %v1543 = vlaneseq
        %v1544 = vshrl.u32 %v1543, 7
        %v1545 = vsub.s32 0, %v1544
        %v1546 = vrot.slane %v1520, %v1545
        %v1548 = vadd.f32 %v1541, %v1546
        %v1549 = vld [vmem:[#allocation10] sm:$0xf]
        %v1550 = vld [vmem:[#allocation10 + $0x4] sm:$0xf]
        %v1551 = vld [vmem:[#allocation10 + $0x8] sm:$0xf]
        %v1552 = vld [vmem:[#allocation10 + $0xc] sm:$0xf]
        %v1553 = vld [vmem:[#allocation11] sm:$0x1]
        %v1554 = vpack.c.bf16 %v1548, %v1548
        %v1556 = vlaneseq
        %v1557 = vshrl.u32 %v1556, 7
        %v1558 = vsub.s32 0, %v1557
        %v1559 = vrot.slane %v1553, %v1558
        %v1565 = vunpack.c.l.b16 %v1549
        %v1566 = vunpack.c.l.b16 %v1550
        %v1567 = vunpack.c.l.b16 %v1551
        %v1568 = vunpack.c.l.b16 %v1552
        %v1569 = vpack.c.b16 %v1566, %v1565
        %v1570 = vpack.c.b16 %v1568, %v1567
        %v1574 = vsel %vm941, %v1554, 0
        %1576 = vmatprep.subr.bf16.mxu0 0
        %1577 = vmatpush1.bf16.msra.mxu0 %v1569
        %1578 = vmatprep.subr.bf16.mxu0 0
        %1579 = vmatpush1.bf16.msra.mxu0 %v1570
        %1580 = vmatprep.subr.bf16.mxu0 0
        %1581 = vmatpush1.bf16.msra.mxu0 0
        %1582 = vmatprep.subr.bf16.mxu0 0
        %1583 = vmatpush1.bf16.msra.mxu0 0
        %1584 = vmatprep.subr.bf16.mxu0 0
        %1585 = vmatpush1.bf16.msra.mxu0 0
        %1586 = vmatprep.subr.bf16.mxu0 0
        %1587 = vmatpush1.bf16.msra.mxu0 0
        %1588 = vmatprep.subr.bf16.mxu0 0
        %1589 = vmatpush1.bf16.msra.mxu0 0
        %1590 = vmatprep.subr.bf16.mxu0 0
        %1591 = vmatpush1.bf16.msra.mxu0 0
        %1592 = vmatprep.subr.bf16.mxu0 0
        %1593 = vmatpush1.bf16.msra.mxu0 0
        %1594 = vmatprep.subr.bf16.mxu0 0
        %1595 = vmatpush1.bf16.msra.mxu0 0
        %1596 = vmatprep.subr.bf16.mxu0 0
        %1597 = vmatpush1.bf16.msra.mxu0 0
        %1598 = vmatprep.subr.bf16.mxu0 0
        %1599 = vmatpush1.bf16.msra.mxu0 0
        %1600 = vmatprep.subr.bf16.mxu0 0
        %1601 = vmatpush1.bf16.msra.mxu0 0
        %1602 = vmatprep.subr.bf16.mxu0 0
        %1603 = vmatpush1.bf16.msra.mxu0 0
        %1604 = vmatprep.subr.bf16.mxu0 0
        %1605 = vmatpush1.bf16.msra.mxu0 0
        %1606 = vmatprep.subr.bf16.mxu0 0
        %1607 = vmatpush1.bf16.msra.mxu0 0
        %1608 = vmatprep.mubr.bf16.mxu0 0
        %1609 = vmatmul.mubr.bf16.gmra.mrb[0].mxu0 %v1574
        %v1610 = vpop.f32.mrb[0].mxu0
        %v1611 = vadd.f32 %v1559, %v1610
        %v1612 = vpop.f32.mrb[0].mxu0
        %v1613 = vpop.f32.mrb[0].mxu0
        %v1614 = vpop.f32.mrb[0].mxu0
        %1615 = vdwg.mxu0
        %v1616 = vpack.c.bf16 %v1611, %v1611
        %v1617 = vld [vmem:[%s10] sm:$0xf]
        %v1618 = vld [vmem:[%s10 + $0x4] sm:$0xf]
        %v1619 = vld [vmem:[%s10 + $0x8] sm:$0xf]
        %v1620 = vld [vmem:[%s10 + $0xc] sm:$0xf]
        %v1621 = vld [vmem:[#allocation13] sm:$0x1]
        %v1622 = vpack.c.bf16 %v914, %v914
        %v1624 = vlaneseq
        %v1625 = vshrl.u32 %v1624, 7
        %v1626 = vsub.s32 0, %v1625
        %v1627 = vrot.slane %v1621, %v1626
        %v1633 = vunpack.c.l.b16 %v1617
        %v1634 = vunpack.c.l.b16 %v1618
        %v1635 = vunpack.c.l.b16 %v1619
        %v1636 = vunpack.c.l.b16 %v1620
        %v1637 = vpack.c.b16 %v1634, %v1633
        %v1638 = vpack.c.b16 %v1636, %v1635
        %v1642 = vsel %vm941, %v1622, 0
        %1644 = vmatprep.subr.bf16.mxu0 0
        %1645 = vmatpush1.bf16.msra.mxu0 %v1637
        %1646 = vmatprep.subr.bf16.mxu0 0
        %1647 = vmatpush1.bf16.msra.mxu0 %v1638
        %1648 = vmatprep.subr.bf16.mxu0 0
        %1649 = vmatpush1.bf16.msra.mxu0 0
        %1650 = vmatprep.subr.bf16.mxu0 0
        %1651 = vmatpush1.bf16.msra.mxu0 0
        %1652 = vmatprep.subr.bf16.mxu0 0
        %1653 = vmatpush1.bf16.msra.mxu0 0
        %1654 = vmatprep.subr.bf16.mxu0 0
        %1655 = vmatpush1.bf16.msra.mxu0 0
        %1656 = vmatprep.subr.bf16.mxu0 0
        %1657 = vmatpush1.bf16.msra.mxu0 0
        %1658 = vmatprep.subr.bf16.mxu0 0
        %1659 = vmatpush1.bf16.msra.mxu0 0
        %1660 = vmatprep.subr.bf16.mxu0 0
        %1661 = vmatpush1.bf16.msra.mxu0 0
        %1662 = vmatprep.subr.bf16.mxu0 0
        %1663 = vmatpush1.bf16.msra.mxu0 0
        %1664 = vmatprep.subr.bf16.mxu0 0
        %1665 = vmatpush1.bf16.msra.mxu0 0
        %1666 = vmatprep.subr.bf16.mxu0 0
        %1667 = vmatpush1.bf16.msra.mxu0 0
        %1668 = vmatprep.subr.bf16.mxu0 0
        %1669 = vmatpush1.bf16.msra.mxu0 0
        %1670 = vmatprep.subr.bf16.mxu0 0
        %1671 = vmatpush1.bf16.msra.mxu0 0
        %1672 = vmatprep.subr.bf16.mxu0 0
        %1673 = vmatpush1.bf16.msra.mxu0 0
        %1674 = vmatprep.subr.bf16.mxu0 0
        %1675 = vmatpush1.bf16.msra.mxu0 0
        %1676 = vmatprep.mubr.bf16.mxu0 0
        %1677 = vmatmul.mubr.bf16.gmra.mrb[0].mxu0 %v1642
        %v1678 = vpop.f32.mrb[0].mxu0
        %v1679 = vadd.f32 %v1627, %v1678
        %v1680 = vpop.f32.mrb[0].mxu0
        %v1681 = vpop.f32.mrb[0].mxu0
        %v1682 = vpop.f32.mrb[0].mxu0
        %1683 = vdwg.mxu0
        %v1684 = vpack.c.bf16 %v1679, %v1679
        %v1685 = vld [vmem:[#allocation14] sm:$0xf]
        %v1686 = vld [vmem:[#allocation14 + $0x4] sm:$0xf]
        %v1687 = vld [vmem:[#allocation14 + $0x8] sm:$0xf]
        %v1688 = vld [vmem:[#allocation14 + $0xc] sm:$0xf]
        %v1689 = vld [vmem:[#allocation16] sm:$0x1]
        %1691 = vrot.lane.b32.xlu0 %v1616, 120
        %v1692 = vpop.permute.xlu0 %1691
        %1693 = vrot.lane.b32.xlu0 %v1616, 112
        %v1694 = vpop.permute.xlu0 %1693
        %1695 = vrot.lane.b32.xlu0 %v1616, 104
        %v1696 = vpop.permute.xlu0 %1695
        %1698 = vrot.lane.b32.xlu0 %v1684, 120
        %v1699 = vpop.permute.xlu0 %1698
        %1700 = vrot.lane.b32.xlu0 %v1684, 112
        %v1701 = vpop.permute.xlu0 %1700
        %1702 = vrot.lane.b32.xlu0 %v1684, 104
        %v1703 = vpop.permute.xlu0 %1702
        %v1705 = vsel %vm1000, %v1616, 0
        %v1708 = vsel %vm1000, %v1684, 0
        %1710 = vmatprep.subr.bf16.mxu0 0
        %1711 = vmatpush1.bf16.xpose.msra.mxu0 %v1708
        %1712 = vmatprep.subr.bf16.mxu0 0
        %1713 = vmatpush1.bf16.xpose.msra.mxu0 0
        %1714 = vmatprep.subr.bf16.mxu0 0
        %1715 = vmatpush1.bf16.xpose.msra.mxu0 0
        %1716 = vmatprep.subr.bf16.mxu0 0
        %1717 = vmatpush1.bf16.xpose.msra.mxu0 0
        %1718 = vmatprep.subr.bf16.mxu0 0
        %1719 = vmatpush1.bf16.xpose.msra.mxu0 0
        %1720 = vmatprep.subr.bf16.mxu0 0
        %1721 = vmatpush1.bf16.xpose.msra.mxu0 0
        %1722 = vmatprep.subr.bf16.mxu0 0
        %1723 = vmatpush1.bf16.xpose.msra.mxu0 0
        %1724 = vmatprep.subr.bf16.mxu0 0
        %1725 = vmatpush1.bf16.xpose.msra.mxu0 0
        %1726 = vmatprep.subr.bf16.mxu0 0
        %1727 = vmatpush1.bf16.xpose.msra.mxu0 0
        %1728 = vmatprep.subr.bf16.mxu0 0
        %1729 = vmatpush1.bf16.xpose.msra.mxu0 0
        %1730 = vmatprep.subr.bf16.mxu0 0
        %1731 = vmatpush1.bf16.xpose.msra.mxu0 0
        %1732 = vmatprep.subr.bf16.mxu0 0
        %1733 = vmatpush1.bf16.xpose.msra.mxu0 0
        %1734 = vmatprep.subr.bf16.mxu0 0
        %1735 = vmatpush1.bf16.xpose.msra.mxu0 0
        %1736 = vmatprep.subr.bf16.mxu0 0
        %1737 = vmatpush1.bf16.xpose.msra.mxu0 0
        %1738 = vmatprep.subr.bf16.mxu0 0
        %1739 = vmatpush1.bf16.xpose.msra.mxu0 0
        %1740 = vmatprep.subr.bf16.mxu0 0
        %1741 = vmatpush1.bf16.xpose.msra.mxu0 0
        %1742 = vmatprep.mubr.bf16.mxu0 0
        %1743 = vmatmul.mubr.bf16.gmra.mrb[0].mxu0 %v1705
        %v1744 = vpop.f32.mrb[0].mxu0
        %v1745 = vadd.f32 0.0, %v1744
        %v1746 = vpop.f32.mrb[0].mxu0
        %v1747 = vpop.f32.mrb[0].mxu0
        %v1748 = vpop.f32.mrb[0].mxu0
        %1749 = vdwg.mxu0
        %v1751 = vsel %vm1000, %v1692, 0
        %v1754 = vsel %vm1000, %v1699, 0
        %1756 = vmatprep.subr.bf16.mxu0 0
        %1757 = vmatpush1.bf16.xpose.msra.mxu0 %v1754
        %1758 = vmatprep.subr.bf16.mxu0 0
        %1759 = vmatpush1.bf16.xpose.msra.mxu0 0
        %1760 = vmatprep.subr.bf16.mxu0 0
        %1761 = vmatpush1.bf16.xpose.msra.mxu0 0
        %1762 = vmatprep.subr.bf16.mxu0 0
        %1763 = vmatpush1.bf16.xpose.msra.mxu0 0
        %1764 = vmatprep.subr.bf16.mxu0 0
        %1765 = vmatpush1.bf16.xpose.msra.mxu0 0
        %1766 = vmatprep.subr.bf16.mxu0 0
        %1767 = vmatpush1.bf16.xpose.msra.mxu0 0
        %1768 = vmatprep.subr.bf16.mxu0 0
        %1769 = vmatpush1.bf16.xpose.msra.mxu0 0
        %1770 = vmatprep.subr.bf16.mxu0 0
        %1771 = vmatpush1.bf16.xpose.msra.mxu0 0
        %1772 = vmatprep.subr.bf16.mxu0 0
        %1773 = vmatpush1.bf16.xpose.msra.mxu0 0
        %1774 = vmatprep.subr.bf16.mxu0 0
        %1775 = vmatpush1.bf16.xpose.msra.mxu0 0
        %1776 = vmatprep.subr.bf16.mxu0 0
        %1777 = vmatpush1.bf16.xpose.msra.mxu0 0
        %1778 = vmatprep.subr.bf16.mxu0 0
        %1779 = vmatpush1.bf16.xpose.msra.mxu0 0
        %1780 = vmatprep.subr.bf16.mxu0 0
        %1781 = vmatpush1.bf16.xpose.msra.mxu0 0
        %1782 = vmatprep.subr.bf16.mxu0 0
        %1783 = vmatpush1.bf16.xpose.msra.mxu0 0
        %1784 = vmatprep.subr.bf16.mxu0 0
        %1785 = vmatpush1.bf16.xpose.msra.mxu0 0
        %1786 = vmatprep.subr.bf16.mxu0 0
        %1787 = vmatpush1.bf16.xpose.msra.mxu0 0
        %1788 = vmatprep.mubr.bf16.mxu0 0
        %1789 = vmatmul.mubr.bf16.gmra.mrb[0].mxu0 %v1751
        %v1790 = vpop.f32.mrb[0].mxu0
        %v1791 = vadd.f32 0.0, %v1790
        %v1792 = vpop.f32.mrb[0].mxu0
        %v1793 = vpop.f32.mrb[0].mxu0
        %v1794 = vpop.f32.mrb[0].mxu0
        %1795 = vdwg.mxu0
        %v1797 = vsel %vm1000, %v1694, 0
        %v1800 = vsel %vm1000, %v1701, 0
        %1802 = vmatprep.subr.bf16.mxu0 0
        %1803 = vmatpush1.bf16.xpose.msra.mxu0 %v1800
        %1804 = vmatprep.subr.bf16.mxu0 0
        %1805 = vmatpush1.bf16.xpose.msra.mxu0 0
        %1806 = vmatprep.subr.bf16.mxu0 0
        %1807 = vmatpush1.bf16.xpose.msra.mxu0 0
        %1808 = vmatprep.subr.bf16.mxu0 0
        %1809 = vmatpush1.bf16.xpose.msra.mxu0 0
        %1810 = vmatprep.subr.bf16.mxu0 0
        %1811 = vmatpush1.bf16.xpose.msra.mxu0 0
        %1812 = vmatprep.subr.bf16.mxu0 0
        %1813 = vmatpush1.bf16.xpose.msra.mxu0 0
        %1814 = vmatprep.subr.bf16.mxu0 0
        %1815 = vmatpush1.bf16.xpose.msra.mxu0 0
        %1816 = vmatprep.subr.bf16.mxu0 0
        %1817 = vmatpush1.bf16.xpose.msra.mxu0 0
        %1818 = vmatprep.subr.bf16.mxu0 0
        %1819 = vmatpush1.bf16.xpose.msra.mxu0 0
        %1820 = vmatprep.subr.bf16.mxu0 0
        %1821 = vmatpush1.bf16.xpose.msra.mxu0 0
        %1822 = vmatprep.subr.bf16.mxu0 0
        %1823 = vmatpush1.bf16.xpose.msra.mxu0 0
        %1824 = vmatprep.subr.bf16.mxu0 0
        %1825 = vmatpush1.bf16.xpose.msra.mxu0 0
        %1826 = vmatprep.subr.bf16.mxu0 0
        %1827 = vmatpush1.bf16.xpose.msra.mxu0 0
        %1828 = vmatprep.subr.bf16.mxu0 0
        %1829 = vmatpush1.bf16.xpose.msra.mxu0 0
        %1830 = vmatprep.subr.bf16.mxu0 0
        %1831 = vmatpush1.bf16.xpose.msra.mxu0 0
        %1832 = vmatprep.subr.bf16.mxu0 0
        %1833 = vmatpush1.bf16.xpose.msra.mxu0 0
        %1834 = vmatprep.mubr.bf16.mxu0 0
        %1835 = vmatmul.mubr.bf16.gmra.mrb[0].mxu0 %v1797
        %v1836 = vpop.f32.mrb[0].mxu0
        %v1837 = vadd.f32 0.0, %v1836
        %v1838 = vpop.f32.mrb[0].mxu0
        %v1839 = vpop.f32.mrb[0].mxu0
        %v1840 = vpop.f32.mrb[0].mxu0
        %1841 = vdwg.mxu0
        %v1843 = vsel %vm1000, %v1696, 0
        %v1846 = vsel %vm1000, %v1703, 0
        %1848 = vmatprep.subr.bf16.mxu0 0
        %1849 = vmatpush1.bf16.xpose.msra.mxu0 %v1846
        %1850 = vmatprep.subr.bf16.mxu0 0
        %1851 = vmatpush1.bf16.xpose.msra.mxu0 0
        %1852 = vmatprep.subr.bf16.mxu0 0
        %1853 = vmatpush1.bf16.xpose.msra.mxu0 0
        %1854 = vmatprep.subr.bf16.mxu0 0
        %1855 = vmatpush1.bf16.xpose.msra.mxu0 0
        %1856 = vmatprep.subr.bf16.mxu0 0
        %1857 = vmatpush1.bf16.xpose.msra.mxu0 0
        %1858 = vmatprep.subr.bf16.mxu0 0
        %1859 = vmatpush1.bf16.xpose.msra.mxu0 0
        %1860 = vmatprep.subr.bf16.mxu0 0
        %1861 = vmatpush1.bf16.xpose.msra.mxu0 0
        %1862 = vmatprep.subr.bf16.mxu0 0
        %1863 = vmatpush1.bf16.xpose.msra.mxu0 0
        %1864 = vmatprep.subr.bf16.mxu0 0
        %1865 = vmatpush1.bf16.xpose.msra.mxu0 0
        %1866 = vmatprep.subr.bf16.mxu0 0
        %1867 = vmatpush1.bf16.xpose.msra.mxu0 0
        %1868 = vmatprep.subr.bf16.mxu0 0
        %1869 = vmatpush1.bf16.xpose.msra.mxu0 0
        %1870 = vmatprep.subr.bf16.mxu0 0
        %1871 = vmatpush1.bf16.xpose.msra.mxu0 0
        %1872 = vmatprep.subr.bf16.mxu0 0
        %1873 = vmatpush1.bf16.xpose.msra.mxu0 0
        %1874 = vmatprep.subr.bf16.mxu0 0
        %1875 = vmatpush1.bf16.xpose.msra.mxu0 0
        %1876 = vmatprep.subr.bf16.mxu0 0
        %1877 = vmatpush1.bf16.xpose.msra.mxu0 0
        %1878 = vmatprep.subr.bf16.mxu0 0
        %1879 = vmatpush1.bf16.xpose.msra.mxu0 0
        %1880 = vmatprep.mubr.bf16.mxu0 0
        %1881 = vmatmul.mubr.bf16.gmra.mrb[0].mxu0 %v1843
        %v1882 = vpop.f32.mrb[0].mxu0
        %v1883 = vadd.f32 0.0, %v1882
        %v1884 = vpop.f32.mrb[0].mxu0
        %v1885 = vpop.f32.mrb[0].mxu0
        %v1886 = vpop.f32.mrb[0].mxu0
        %1887 = vdwg.mxu0
        %v1888 = vadd.f32 %v1745, %v916
        %v1889 = vadd.f32 %v1791, %v916
        %v1890 = vadd.f32 %v1837, %v916
        %v1891 = vadd.f32 %v1883, %v916
        %v1892 = vsel %vm1000, %v1888, -inf
        %1893 = vmax.xlane.f32.xlu0 %v1892
        %v1894 = vpop.xlane.xlu0 %1893
        %v1895 = vsel %vm1000, %v1889, -inf
        %1896 = vmax.xlane.f32.xlu0 %v1895
        %v1897 = vpop.xlane.xlu0 %1896
        %v1898 = vsel %vm1000, %v1890, -inf
        %1899 = vmax.xlane.f32.xlu0 %v1898
        %v1900 = vpop.xlane.xlu0 %1899
        %v1901 = vsel %vm1000, %v1891, -inf
        %1902 = vmax.xlane.f32.xlu0 %v1901
        %v1903 = vpop.xlane.xlu0 %1902
        %v1904 = vsub.f32 %v1888, %v1894
        %v1905 = vsub.f32 %v1889, %v1897
        %v1906 = vsub.f32 %v1890, %v1900
        %v1907 = vsub.f32 %v1891, %v1903
        %v1908 = vmul.f32 %v1904, 1.442695
        %v1909 = vpow.pop %v1908
        %v1910 = vmul.f32 %v1905, 1.442695
        %v1911 = vpow.pop %v1910
        %v1912 = vmul.f32 %v1906, 1.442695
        %v1913 = vpow.pop %v1912
        %v1914 = vmul.f32 %v1907, 1.442695
        %v1915 = vpow.pop %v1914
        %v1916 = vsel %vm1000, %v1909, 0.0
        %1917 = vadd.xlane.f32.xlu0 %v1916
        %v1918 = vpop.xlane.xlu0 %1917
        %v1919 = vsel %vm1000, %v1911, 0.0
        %1920 = vadd.xlane.f32.xlu0 %v1919
        %v1921 = vpop.xlane.xlu0 %1920
        %v1922 = vsel %vm1000, %v1913, 0.0
        %1923 = vadd.xlane.f32.xlu0 %v1922
        %v1924 = vpop.xlane.xlu0 %1923
        %v1925 = vsel %vm1000, %v1915, 0.0
        %1926 = vadd.xlane.f32.xlu0 %v1925
        %v1927 = vpop.xlane.xlu0 %1926
        %v1928 = vrcp.pop %v1918
        %v1929 = vrcp.pop %v1921
        %v1930 = vrcp.pop %v1924
        %v1931 = vrcp.pop %v1927
        %v1932 = vmul.f32 %v1909, %v1928
        %v1933 = vmul.f32 %v1911, %v1929
        %v1934 = vmul.f32 %v1913, %v1930
        %v1935 = vmul.f32 %v1915, %v1931
        %v1936 = vpack.c.bf16 %v1932, %v1932
        %v1937 = vpack.c.bf16 %v1933, %v1933
        %v1938 = vpack.c.bf16 %v1934, %v1934
        %v1939 = vpack.c.bf16 %v1935, %v1935
        %1940 = vrot.lane.b32.xlu0 %v1684, 96
        %v1941 = vpop.permute.xlu0 %1940
        %v1943 = vsel %vm1000, %v1936, 0
        %v1946 = vsel %vm1248, %v1941, 0
        %1948 = vmatprep.subr.bf16.mxu0 0
        %1949 = vmatpush1.bf16.msra.mxu0 %v1946
        %1950 = vmatprep.subr.bf16.mxu0 0
        %1951 = vmatpush1.bf16.msra.mxu0 0
        %1952 = vmatprep.subr.bf16.mxu0 0
        %1953 = vmatpush1.bf16.msra.mxu0 0
        %1954 = vmatprep.subr.bf16.mxu0 0
        %1955 = vmatpush1.bf16.msra.mxu0 0
        %1956 = vmatprep.subr.bf16.mxu0 0
        %1957 = vmatpush1.bf16.msra.mxu0 0
        %1958 = vmatprep.subr.bf16.mxu0 0
        %1959 = vmatpush1.bf16.msra.mxu0 0
        %1960 = vmatprep.subr.bf16.mxu0 0
        %1961 = vmatpush1.bf16.msra.mxu0 0
        %1962 = vmatprep.subr.bf16.mxu0 0
        %1963 = vmatpush1.bf16.msra.mxu0 0
        %1964 = vmatprep.subr.bf16.mxu0 0
        %1965 = vmatpush1.bf16.msra.mxu0 0
        %1966 = vmatprep.subr.bf16.mxu0 0
        %1967 = vmatpush1.bf16.msra.mxu0 0
        %1968 = vmatprep.subr.bf16.mxu0 0
        %1969 = vmatpush1.bf16.msra.mxu0 0
        %1970 = vmatprep.subr.bf16.mxu0 0
        %1971 = vmatpush1.bf16.msra.mxu0 0
        %1972 = vmatprep.subr.bf16.mxu0 0
        %1973 = vmatpush1.bf16.msra.mxu0 0
        %1974 = vmatprep.subr.bf16.mxu0 0
        %1975 = vmatpush1.bf16.msra.mxu0 0
        %1976 = vmatprep.subr.bf16.mxu0 0
        %1977 = vmatpush1.bf16.msra.mxu0 0
        %1978 = vmatprep.subr.bf16.mxu0 0
        %1979 = vmatpush1.bf16.msra.mxu0 0
        %1980 = vmatprep.mubr.bf16.mxu0 0
        %1981 = vmatmul.mubr.bf16.gmra.mrb[0].mxu0 %v1943
        %v1982 = vpop.f32.mrb[0].mxu0
        %v1983 = vadd.f32 0.0, %v1982
        %v1984 = vpop.f32.mrb[0].mxu0
        %v1985 = vpop.f32.mrb[0].mxu0
        %v1986 = vpop.f32.mrb[0].mxu0
        %1987 = vdwg.mxu0
        %1988 = vrot.lane.b32.xlu0 %v1699, 96
        %v1989 = vpop.permute.xlu0 %1988
        %v1991 = vsel %vm1000, %v1937, 0
        %v1994 = vsel %vm1248, %v1989, 0
        %1996 = vmatprep.subr.bf16.mxu0 0
        %1997 = vmatpush1.bf16.msra.mxu0 %v1994
        %1998 = vmatprep.subr.bf16.mxu0 0
        %1999 = vmatpush1.bf16.msra.mxu0 0
        %2000 = vmatprep.subr.bf16.mxu0 0
        %2001 = vmatpush1.bf16.msra.mxu0 0
        %2002 = vmatprep.subr.bf16.mxu0 0
        %2003 = vmatpush1.bf16.msra.mxu0 0
        %2004 = vmatprep.subr.bf16.mxu0 0
        %2005 = vmatpush1.bf16.msra.mxu0 0
        %2006 = vmatprep.subr.bf16.mxu0 0
        %2007 = vmatpush1.bf16.msra.mxu0 0
        %2008 = vmatprep.subr.bf16.mxu0 0
        %2009 = vmatpush1.bf16.msra.mxu0 0
        %2010 = vmatprep.subr.bf16.mxu0 0
        %2011 = vmatpush1.bf16.msra.mxu0 0
        %2012 = vmatprep.subr.bf16.mxu0 0
        %2013 = vmatpush1.bf16.msra.mxu0 0
        %2014 = vmatprep.subr.bf16.mxu0 0
        %2015 = vmatpush1.bf16.msra.mxu0 0
        %2016 = vmatprep.subr.bf16.mxu0 0
        %2017 = vmatpush1.bf16.msra.mxu0 0
        %2018 = vmatprep.subr.bf16.mxu0 0
        %2019 = vmatpush1.bf16.msra.mxu0 0
        %2020 = vmatprep.subr.bf16.mxu0 0
        %2021 = vmatpush1.bf16.msra.mxu0 0
        %2022 = vmatprep.subr.bf16.mxu0 0
        %2023 = vmatpush1.bf16.msra.mxu0 0
        %2024 = vmatprep.subr.bf16.mxu0 0
        %2025 = vmatpush1.bf16.msra.mxu0 0
        %2026 = vmatprep.subr.bf16.mxu0 0
        %2027 = vmatpush1.bf16.msra.mxu0 0
        %2028 = vmatprep.mubr.bf16.mxu0 0
        %2029 = vmatmul.mubr.bf16.gmra.mrb[0].mxu0 %v1991
        %v2030 = vpop.f32.mrb[0].mxu0
        %v2031 = vadd.f32 0.0, %v2030
        %v2032 = vpop.f32.mrb[0].mxu0
        %v2033 = vpop.f32.mrb[0].mxu0
        %v2034 = vpop.f32.mrb[0].mxu0
        %2035 = vdwg.mxu0
        %2036 = vrot.lane.b32.xlu0 %v1701, 96
        %v2037 = vpop.permute.xlu0 %2036
        %v2039 = vsel %vm1000, %v1938, 0
        %v2042 = vsel %vm1248, %v2037, 0
        %2044 = vmatprep.subr.bf16.mxu0 0
        %2045 = vmatpush1.bf16.msra.mxu0 %v2042
        %2046 = vmatprep.subr.bf16.mxu0 0
        %2047 = vmatpush1.bf16.msra.mxu0 0
        %2048 = vmatprep.subr.bf16.mxu0 0
        %2049 = vmatpush1.bf16.msra.mxu0 0
        %2050 = vmatprep.subr.bf16.mxu0 0
        %2051 = vmatpush1.bf16.msra.mxu0 0
        %2052 = vmatprep.subr.bf16.mxu0 0
        %2053 = vmatpush1.bf16.msra.mxu0 0
        %2054 = vmatprep.subr.bf16.mxu0 0
        %2055 = vmatpush1.bf16.msra.mxu0 0
        %2056 = vmatprep.subr.bf16.mxu0 0
        %2057 = vmatpush1.bf16.msra.mxu0 0
        %2058 = vmatprep.subr.bf16.mxu0 0
        %2059 = vmatpush1.bf16.msra.mxu0 0
        %2060 = vmatprep.subr.bf16.mxu0 0
        %2061 = vmatpush1.bf16.msra.mxu0 0
        %2062 = vmatprep.subr.bf16.mxu0 0
        %2063 = vmatpush1.bf16.msra.mxu0 0
        %2064 = vmatprep.subr.bf16.mxu0 0
        %2065 = vmatpush1.bf16.msra.mxu0 0
        %2066 = vmatprep.subr.bf16.mxu0 0
        %2067 = vmatpush1.bf16.msra.mxu0 0
        %2068 = vmatprep.subr.bf16.mxu0 0
        %2069 = vmatpush1.bf16.msra.mxu0 0
        %2070 = vmatprep.subr.bf16.mxu0 0
        %2071 = vmatpush1.bf16.msra.mxu0 0
        %2072 = vmatprep.subr.bf16.mxu0 0
        %2073 = vmatpush1.bf16.msra.mxu0 0
        %2074 = vmatprep.subr.bf16.mxu0 0
        %2075 = vmatpush1.bf16.msra.mxu0 0
        %2076 = vmatprep.mubr.bf16.mxu0 0
        %2077 = vmatmul.mubr.bf16.gmra.mrb[0].mxu0 %v2039
        %v2078 = vpop.f32.mrb[0].mxu0
        %v2079 = vadd.f32 0.0, %v2078
        %v2080 = vpop.f32.mrb[0].mxu0
        %v2081 = vpop.f32.mrb[0].mxu0
        %v2082 = vpop.f32.mrb[0].mxu0
        %2083 = vdwg.mxu0
        %2084 = vrot.lane.b32.xlu0 %v1703, 96
        %v2085 = vpop.permute.xlu0 %2084
        %v2087 = vsel %vm1000, %v1939, 0
        %v2090 = vsel %vm1248, %v2085, 0
        %2092 = vmatprep.subr.bf16.mxu0 0
        %2093 = vmatpush1.bf16.msra.mxu0 %v2090
        %2094 = vmatprep.subr.bf16.mxu0 0
        %2095 = vmatpush1.bf16.msra.mxu0 0
        %2096 = vmatprep.subr.bf16.mxu0 0
        %2097 = vmatpush1.bf16.msra.mxu0 0
        %2098 = vmatprep.subr.bf16.mxu0 0
        %2099 = vmatpush1.bf16.msra.mxu0 0
        %2100 = vmatprep.subr.bf16.mxu0 0
        %2101 = vmatpush1.bf16.msra.mxu0 0
        %2102 = vmatprep.subr.bf16.mxu0 0
        %2103 = vmatpush1.bf16.msra.mxu0 0
        %2104 = vmatprep.subr.bf16.mxu0 0
        %2105 = vmatpush1.bf16.msra.mxu0 0
        %2106 = vmatprep.subr.bf16.mxu0 0
        %2107 = vmatpush1.bf16.msra.mxu0 0
        %2108 = vmatprep.subr.bf16.mxu0 0
        %2109 = vmatpush1.bf16.msra.mxu0 0
        %2110 = vmatprep.subr.bf16.mxu0 0
        %2111 = vmatpush1.bf16.msra.mxu0 0
        %2112 = vmatprep.subr.bf16.mxu0 0
        %2113 = vmatpush1.bf16.msra.mxu0 0
        %2114 = vmatprep.subr.bf16.mxu0 0
        %2115 = vmatpush1.bf16.msra.mxu0 0
        %2116 = vmatprep.subr.bf16.mxu0 0
        %2117 = vmatpush1.bf16.msra.mxu0 0
        %2118 = vmatprep.subr.bf16.mxu0 0
        %2119 = vmatpush1.bf16.msra.mxu0 0
        %2120 = vmatprep.subr.bf16.mxu0 0
        %2121 = vmatpush1.bf16.msra.mxu0 0
        %2122 = vmatprep.subr.bf16.mxu0 0
        %2123 = vmatpush1.bf16.msra.mxu0 0
        %2124 = vmatprep.mubr.bf16.mxu0 0
        %2125 = vmatmul.mubr.bf16.gmra.mrb[0].mxu0 %v2087
        %v2126 = vpop.f32.mrb[0].mxu0
        %v2127 = vadd.f32 0.0, %v2126
        %v2128 = vpop.f32.mrb[0].mxu0
        %v2129 = vpop.f32.mrb[0].mxu0
        %v2130 = vpop.f32.mrb[0].mxu0
        %2131 = vdwg.mxu0
        %v2132 = vpack.c.bf16 %v1983, %v1983
        %v2133 = vpack.c.bf16 %v2031, %v2031
        %v2134 = vpack.c.bf16 %v2079, %v2079
        %v2135 = vpack.c.bf16 %v2127, %v2127
        %2137 = vrot.lane.b32.xlu0 %v2133, 8
        %v2138 = vpop.permute.xlu0 %2137
        %2140 = vrot.lane.b32.xlu0 %v2134, 16
        %v2141 = vpop.permute.xlu0 %2140
        %2143 = vrot.lane.b32.xlu0 %v2135, 24
        %v2144 = vpop.permute.xlu0 %2143
        %v2147 = vsel %vm1000, %v2132, %v2138
        %v2149 = vsel %vm1452, %v2147, %v2141
        %v2151 = vsel %vm1455, %v2149, %v2144
        %v2153 = vlaneseq
        %v2154 = vshrl.u32 %v2153, 7
        %v2155 = vsub.s32 0, %v2154
        %v2156 = vrot.slane %v1689, %v2155
        %v2162 = vunpack.c.l.b16 %v1685
        %v2163 = vunpack.c.l.b16 %v1686
        %v2164 = vunpack.c.l.b16 %v1687
        %v2165 = vunpack.c.l.b16 %v1688
        %v2166 = vpack.c.b16 %v2163, %v2162
        %v2167 = vpack.c.b16 %v2165, %v2164
        %v2170 = vsel %vm941, %v2151, 0
        %2172 = vmatprep.subr.bf16.mxu0 0
        %2173 = vmatpush1.bf16.msra.mxu0 %v2166
        %2174 = vmatprep.subr.bf16.mxu0 0
        %2175 = vmatpush1.bf16.msra.mxu0 %v2167
        %2176 = vmatprep.subr.bf16.mxu0 0
        %2177 = vmatpush1.bf16.msra.mxu0 0
        %2178 = vmatprep.subr.bf16.mxu0 0
        %2179 = vmatpush1.bf16.msra.mxu0 0
        %2180 = vmatprep.subr.bf16.mxu0 0
        %2181 = vmatpush1.bf16.msra.mxu0 0
        %2182 = vmatprep.subr.bf16.mxu0 0
        %2183 = vmatpush1.bf16.msra.mxu0 0
        %2184 = vmatprep.subr.bf16.mxu0 0
        %2185 = vmatpush1.bf16.msra.mxu0 0
        %2186 = vmatprep.subr.bf16.mxu0 0
        %2187 = vmatpush1.bf16.msra.mxu0 0
        %2188 = vmatprep.subr.bf16.mxu0 0
        %2189 = vmatpush1.bf16.msra.mxu0 0
        %2190 = vmatprep.subr.bf16.mxu0 0
        %2191 = vmatpush1.bf16.msra.mxu0 0
        %2192 = vmatprep.subr.bf16.mxu0 0
        %2193 = vmatpush1.bf16.msra.mxu0 0
        %2194 = vmatprep.subr.bf16.mxu0 0
        %2195 = vmatpush1.bf16.msra.mxu0 0
        %2196 = vmatprep.subr.bf16.mxu0 0
        %2197 = vmatpush1.bf16.msra.mxu0 0
        %2198 = vmatprep.subr.bf16.mxu0 0
        %2199 = vmatpush1.bf16.msra.mxu0 0
        %2200 = vmatprep.subr.bf16.mxu0 0
        %2201 = vmatpush1.bf16.msra.mxu0 0
        %2202 = vmatprep.subr.bf16.mxu0 0
        %2203 = vmatpush1.bf16.msra.mxu0 0
        %2204 = vmatprep.mubr.bf16.mxu0 0
        %2205 = vmatmul.mubr.bf16.gmra.mrb[0].mxu0 %v2170
        %v2206 = vpop.f32.mrb[0].mxu0
        %v2207 = vadd.f32 %v2156, %v2206
        %v2208 = vpop.f32.mrb[0].mxu0
        %v2209 = vpop.f32.mrb[0].mxu0
        %v2210 = vpop.f32.mrb[0].mxu0
        %2211 = vdwg.mxu0
        %v2212 = vadd.f32 %v1548, %v2207
        %v2213 = vld [vmem:[%s20] sm:$0x1]
        %v2214 = vld [vmem:[%s21] sm:$0x1]
        %v2215 = vsel %vm941, %v2212, 0.0
        %2216 = vadd.xlane.f32.xlu0 %v2215
        %v2217 = vpop.xlane.xlu0 %2216
        %v2218 = vmul.f32 %v2217, %v1524
        %v2219 = vsub.f32 %v2212, %v2218
        %v2220 = vmul.f32 %v2219, %v2219
        %v2221 = vsel %vm941, %v2220, 0.0
        %2222 = vadd.xlane.f32.xlu0 %v2221
        %v2223 = vpop.xlane.xlu0 %2222
        %v2224 = vmul.f32 %v2223, %v1524
        %v2225 = vadd.f32 %v2224, 1e-05
        %v2226 = vrsqrt.pop %v2225
        %v2227 = vmul.f32 %v2219, %v2226
        %v2229 = vlaneseq
        %v2230 = vshrl.u32 %v2229, 7
        %v2231 = vsub.s32 0, %v2230
        %v2232 = vrot.slane %v2213, %v2231
        %v2234 = vmul.f32 %v2227, %v2232
        %v2236 = vlaneseq
        %v2237 = vshrl.u32 %v2236, 7
        %v2238 = vsub.s32 0, %v2237
        %v2239 = vrot.slane %v2214, %v2238
        %v2241 = vadd.f32 %v2234, %v2239
        %v2242 = vld [vmem:[%s14] sm:$0xf]
        %v2243 = vld [vmem:[%s14 + $0x4] sm:$0xf]
        %v2244 = vld [vmem:[%s14 + $0x8] sm:$0xf]
        %v2245 = vld [vmem:[%s14 + $0xc] sm:$0xf]
        %v2246 = vld [vmem:[%s15] sm:$0x1]
        %v2247 = vpack.c.bf16 %v2241, %v2241
        %v2249 = vlaneseq
        %v2250 = vshrl.u32 %v2249, 7
        %v2251 = vsub.s32 0, %v2250
        %v2252 = vrot.slane %v2246, %v2251
        %v2258 = vunpack.c.l.b16 %v2242
        %v2259 = vunpack.c.l.b16 %v2243
        %v2260 = vunpack.c.l.b16 %v2244
        %v2261 = vunpack.c.l.b16 %v2245
        %v2262 = vpack.c.b16 %v2259, %v2258
        %v2263 = vpack.c.b16 %v2261, %v2260
        %v2267 = vsel %vm941, %v2247, 0
        %2269 = vmatprep.subr.bf16.mxu0 0
        %2270 = vmatpush1.bf16.msra.mxu0 %v2262
        %2271 = vmatprep.subr.bf16.mxu0 0
        %2272 = vmatpush1.bf16.msra.mxu0 %v2263
        %2273 = vmatprep.subr.bf16.mxu0 0
        %2274 = vmatpush1.bf16.msra.mxu0 0
        %2275 = vmatprep.subr.bf16.mxu0 0
        %2276 = vmatpush1.bf16.msra.mxu0 0
        %2277 = vmatprep.subr.bf16.mxu0 0
        %2278 = vmatpush1.bf16.msra.mxu0 0
        %2279 = vmatprep.subr.bf16.mxu0 0
        %2280 = vmatpush1.bf16.msra.mxu0 0
        %2281 = vmatprep.subr.bf16.mxu0 0
        %2282 = vmatpush1.bf16.msra.mxu0 0
        %2283 = vmatprep.subr.bf16.mxu0 0
        %2284 = vmatpush1.bf16.msra.mxu0 0
        %2285 = vmatprep.subr.bf16.mxu0 0
        %2286 = vmatpush1.bf16.msra.mxu0 0
        %2287 = vmatprep.subr.bf16.mxu0 0
        %2288 = vmatpush1.bf16.msra.mxu0 0
        %2289 = vmatprep.subr.bf16.mxu0 0
        %2290 = vmatpush1.bf16.msra.mxu0 0
        %2291 = vmatprep.subr.bf16.mxu0 0
        %2292 = vmatpush1.bf16.msra.mxu0 0
        %2293 = vmatprep.subr.bf16.mxu0 0
        %2294 = vmatpush1.bf16.msra.mxu0 0
        %2295 = vmatprep.subr.bf16.mxu0 0
        %2296 = vmatpush1.bf16.msra.mxu0 0
        %2297 = vmatprep.subr.bf16.mxu0 0
        %2298 = vmatpush1.bf16.msra.mxu0 0
        %2299 = vmatprep.subr.bf16.mxu0 0
        %2300 = vmatpush1.bf16.msra.mxu0 0
        %2301 = vmatprep.mubr.bf16.mxu0 0
        %2302 = vmatmul.mubr.bf16.gmra.mrb[0].mxu0 %v2267
        %v2303 = vpop.f32.mrb[0].mxu0
        %v2304 = vadd.f32 %v2252, %v2303
        %v2305 = vpop.f32.mrb[0].mxu0
        %v2306 = vpop.f32.mrb[0].mxu0
        %v2307 = vpop.f32.mrb[0].mxu0
        %2308 = vdwg.mxu0
        %v2309 = vpack.c.bf16 %v2304, %v2304
        %v2310 = vmax.bf16 %v2309, 0
        %v2311 = vld [vmem:[%s16] sm:$0xf]
        %v2312 = vld [vmem:[%s16 + $0x4] sm:$0xf]
        %v2313 = vld [vmem:[%s16 + $0x8] sm:$0xf]
        %v2314 = vld [vmem:[%s16 + $0xc] sm:$0xf]
        %v2315 = vld [vmem:[%s16 + $0x10] sm:$0xf]
        %v2316 = vld [vmem:[%s16 + $0x14] sm:$0xf]
        %v2317 = vld [vmem:[%s16 + $0x18] sm:$0xf]
        %v2318 = vld [vmem:[%s16 + $0x1c] sm:$0xf]
        %v2319 = vld [vmem:[%s17] sm:$0x1]
        %v2321 = vlaneseq
        %v2322 = vshrl.u32 %v2321, 7
        %v2323 = vsub.s32 0, %v2322
        %v2324 = vrot.slane %v2319, %v2323
        %v2334 = vunpack.c.l.b16 %v2311
        %v2335 = vunpack.c.l.b16 %v2312
        %v2336 = vunpack.c.l.b16 %v2313
        %v2337 = vunpack.c.l.b16 %v2314
        %v2338 = vunpack.c.l.b16 %v2315
        %v2339 = vunpack.c.l.b16 %v2316
        %v2340 = vunpack.c.l.b16 %v2317
        %v2341 = vunpack.c.l.b16 %v2318
        %v2342 = vpack.c.b16 %v2335, %v2334
        %v2343 = vpack.c.b16 %v2337, %v2336
        %v2344 = vpack.c.b16 %v2339, %v2338
        %v2345 = vpack.c.b16 %v2341, %v2340
        %vm2350 = vcmask 523264
        %v2352 = vsel %vm2350, %v2310, 0
        %2354 = vmatprep.subr.bf16.mxu0 0
        %2355 = vmatpush1.bf16.msra.mxu0 %v2342
        %2356 = vmatprep.subr.bf16.mxu0 0
        %2357 = vmatpush1.bf16.msra.mxu0 %v2343
        %2358 = vmatprep.subr.bf16.mxu0 0
        %2359 = vmatpush1.bf16.msra.mxu0 %v2344
        %2360 = vmatprep.subr.bf16.mxu0 0
        %2361 = vmatpush1.bf16.msra.mxu0 %v2345
        %2362 = vmatprep.subr.bf16.mxu0 0
        %2363 = vmatpush1.bf16.msra.mxu0 0
        %2364 = vmatprep.subr.bf16.mxu0 0
        %2365 = vmatpush1.bf16.msra.mxu0 0
        %2366 = vmatprep.subr.bf16.mxu0 0
        %2367 = vmatpush1.bf16.msra.mxu0 0
        %2368 = vmatprep.subr.bf16.mxu0 0
        %2369 = vmatpush1.bf16.msra.mxu0 0
        %2370 = vmatprep.subr.bf16.mxu0 0
        %2371 = vmatpush1.bf16.msra.mxu0 0
        %2372 = vmatprep.subr.bf16.mxu0 0
        %2373 = vmatpush1.bf16.msra.mxu0 0
        %2374 = vmatprep.subr.bf16.mxu0 0
        %2375 = vmatpush1.bf16.msra.mxu0 0
        %2376 = vmatprep.subr.bf16.mxu0 0
        %2377 = vmatpush1.bf16.msra.mxu0 0
        %2378 = vmatprep.subr.bf16.mxu0 0
        %2379 = vmatpush1.bf16.msra.mxu0 0
        %2380 = vmatprep.subr.bf16.mxu0 0
        %2381 = vmatpush1.bf16.msra.mxu0 0
        %2382 = vmatprep.subr.bf16.mxu0 0
        %2383 = vmatpush1.bf16.msra.mxu0 0
        %2384 = vmatprep.subr.bf16.mxu0 0
        %2385 = vmatpush1.bf16.msra.mxu0 0
        %2386 = vmatprep.mubr.bf16.mxu0 0
        %2387 = vmatmul.mubr.bf16.gmra.mrb[0].mxu0 %v2352
        %v2388 = vpop.f32.mrb[0].mxu0
        %v2389 = vadd.f32 %v2324, %v2388
        %v2390 = vpop.f32.mrb[0].mxu0
        %v2391 = vpop.f32.mrb[0].mxu0
        %v2392 = vpop.f32.mrb[0].mxu0
        %2393 = vdwg.mxu0
        %v2394 = vadd.f32 %v2241, %v2389
        %v2395 = vld [vmem:[%s22] sm:$0x1]
        %v2396 = vld [vmem:[%s23] sm:$0x1]
        %v2397 = vsel %vm941, %v2394, 0.0
        %2398 = vadd.xlane.f32.xlu0 %v2397
        %v2399 = vpop.xlane.xlu0 %2398
        %v2400 = vmul.f32 %v2399, %v1524
        %v2401 = vsub.f32 %v2394, %v2400
        %v2402 = vmul.f32 %v2401, %v2401
        %v2403 = vsel %vm941, %v2402, 0.0
        %2404 = vadd.xlane.f32.xlu0 %v2403
        %v2405 = vpop.xlane.xlu0 %2404
        %v2406 = vmul.f32 %v2405, %v1524
        %v2407 = vadd.f32 %v2406, 1e-05
        %v2408 = vrsqrt.pop %v2407
        %v2409 = vmul.f32 %v2401, %v2408
        %v2411 = vlaneseq
        %v2412 = vshrl.u32 %v2411, 7
        %v2413 = vsub.s32 0, %v2412
        %v2414 = vrot.slane %v2395, %v2413
        %v2416 = vmul.f32 %v2409, %v2414
        %v2418 = vlaneseq
        %v2419 = vshrl.u32 %v2418, 7
        %v2420 = vsub.s32 0, %v2419
        %v2421 = vrot.slane %v2396, %v2420
        %v2423 = vadd.f32 %v2416, %v2421
        %2424 = vst.msk [vmem:[%s899] sm:$0xff] %vm941, %v2423
        %s2425 = sand.u32 %s577, 1
        %s2426 = scalar_lea.sflag [#allocation4], %s2425
        %s2427 = sand.u32 %s577, 1
        %s2428 = smul.addr %s2427, 8
        %s2429 = scalar_lea.vmem [#allocation17], %s2428
        // Predicated region
        $region153: #{tpu_custom_call.1} parent=115 // pred_check
          %p2430 = pneg %p587
        $region154: #{tpu_custom_call.1} parent=115 // pred_check_branch
          %2432 = sbr.rel (%p2430) target = $region156
        $region155: #{tpu_custom_call.1} parent=115 // pred_region
          %s2434 = ssub.s32 128, 128
          %2435 = vsyncadd %s2426, %s2434
          %s2436 = smul.addr %s45, 128
          %s2437 = scalar_lea.hbm %s24, %s2436
          %s2439 = sshll.u32 %s2429, 4
          %s2440 = int_to_ptr.vmem [resolvable:$true] %s2439
          %2442 = dma.vmem_to_hbm [thread:$0]  %s2440, 128, %s2437, %s2426
        $region156: #{tpu_custom_call.1} parent=115 // pred_fallthru
          _
      $region116: #{tpu_custom_call.1} parent=5 // pred_fallthru
        _
      %p2443 = scmp.le.s32.totalorder 2, %s40
      // Predicated region
      $region157: #{tpu_custom_call.1} parent=5 // pred_check
        %p2444 = pneg %p2443
      $region158: #{tpu_custom_call.1} parent=5 // pred_check_branch
        %2446 = sbr.rel (%p2444) target = $region160
      $region159: #{tpu_custom_call.1} parent=5 // pred_region
        %s2447 = ssub.s32 %s40, 2
        // Predicated region
        $region161: #{tpu_custom_call.1} parent=159 // pred_check
          %p2448 = pneg %p593
        $region162: #{tpu_custom_call.1} parent=159 // pred_check_branch
          %2450 = sbr.rel (%p2448) target = $region164
        $region163: #{tpu_custom_call.1} parent=159 // pred_region
          %s2451 = sand.u32 %s578, 1
          %s2452 = scalar_lea.sflag [#allocation4], %s2451
          %s2453 = sand.u32 %s578, 1
          %s2454 = smul.addr %s2453, 8
          %s2455 = scalar_lea.vmem [#allocation17], %s2454
          %2456 = dma.done %s2452, 128
        $region164: #{tpu_custom_call.1} parent=159 // pred_fallthru
          _
      $region160: #{tpu_custom_call.1} parent=5 // pred_fallthru
        _
    $region6: #{tpu_custom_call.1} parent=1 // loop_footer
      %s44 = sadd.s32 1, %s40
    $region7: #{tpu_custom_call.1} parent=1 // loop_footer_branch
      %39 = sbr.rel target = $region3
    $region8: #{tpu_custom_call.1} parent=1 // loop_exit
      _
    %2457 = vsyncpa [#allocation3], 1
    %s2458 = scalar_lea.sflag [#allocation3], 1
    %2459 = vsyncpa %s2458, 1
    %2460 = vsyncpa [#allocation6], 1
    %2461 = vsyncpa [#allocation9], 1
    %2462 = vsyncpa [#allocation12], 1
    %2463 = vsyncpa [#allocation15], 1
    %2464 = vsyncpa [#allocation4], 1
    %s2465 = scalar_lea.sflag [#allocation4], 1
    %2466 = vsyncpa %s2465, 1

</llo_original>
